<compile_context>
chip_gen: v7x
topology: tpu7x:2x2x1
jax: 0.10.0
libtpu: 0.0.40
codegen_flags: <defaults>
</compile_context>

<pallas_src>
import jax
import jax.numpy as jnp
from jax.experimental import pallas as pl
from jax.experimental.pallas import tpu as pltpu

# ----- model / problem dimensions (small, consistent with the forward pass) --
B, T, V, C, H, W = 2, 3, 2, 3, 16, 16   # batch, time, views, channels, spatial
K = 3                                   # conv kernel size
F = 16                                  # conv output channels
D = 32                                  # image_repr_dim (img_only_dim)
HH = 32                                 # vmrnn hidden dim
A = 16                                  # asymmetry feature dim
O = 4                                   # risk prediction dim
N = B * T * V
BT = B * T
HW = H * W
KC = K * K * C                          # 27
KC_PAD = 32                             # lane-pad the conv contraction dim
OUT_LANES = 128                         # packed output slab (hidden | risk | 0)

# weight-slab row offsets (bf16 slab, 128 lanes wide; every offset is a
# multiple of 16 so each static slice is bf16 sublane-tile aligned)
R_CONV, R_PROJ, R_WXSAD, R_WH, R_LAT, R_AHL = 0, 32, 48, 80, 112, 144
W_ROWS = R_AHL + HH + A                 # 192
# bias-slab rows (f32, 128 lanes wide)
RB_CONV, RB_PROJ, RB_BH, RB_SAD, RB_LAT, RB_AHL = 0, 1, 2, 3, 4, 5
B_ROWS = 8


def vmramar_kernel(patches_ref, w_ref, b_ref, out_ref):
    # ---- static slices of the packed parameter slabs -------------------------
    conv_w = w_ref[R_CONV:R_CONV + KC_PAD, 0:F]           # (32, 16) bf16
    proj_w = w_ref[R_PROJ:R_PROJ + F, 0:D]                 # (16, 32) bf16
    wx_sad = w_ref[R_WXSAD:R_WXSAD + D, 0:HH + D]          # (32, 64) bf16 = wx | sad_w
    wh_w   = w_ref[R_WH:R_WH + HH, 0:HH]                   # (32, 32) bf16
    lat_w  = w_ref[R_LAT:R_LAT + D, 0:A]                   # (32, 16) bf16
    ahl_w  = w_ref[R_AHL:R_AHL + HH + A, 0:O]              # (48,  4) bf16

    conv_b = b_ref[RB_CONV:RB_CONV + 1, 0:F]               # (1, 16) f32
    proj_b = b_ref[RB_PROJ:RB_PROJ + 1, 0:D]
    bh     = b_ref[RB_BH:RB_BH + 1, 0:HH]
    sad_b  = b_ref[RB_SAD:RB_SAD + 1, 0:D]
    lat_b  = b_ref[RB_LAT:RB_LAT + 1, 0:A]
    ahl_b  = b_ref[RB_AHL:RB_AHL + 1, 0:O]

    # ---- image encoder ("custom_resnet" stand-in) ----------------------------
    # conv as a single (N*HW, KC_PAD) x (KC_PAD, F) bf16 matmul, f32 accum.
    conv = jnp.dot(patches_ref[...], conv_w, preferred_element_type=jnp.float32)
    conv = jnp.maximum(conv + conv_b, 0.0)                  # (N*HW, F) f32

    # Global average pool: in-kernel sublane reduce (no pooling matrix DMA).
    pooled = jnp.sum(conv.reshape(N, HW, F), axis=1) * (1.0 / HW)    # (N, F)

    feats = jnp.dot(pooled.astype(jnp.bfloat16), proj_w,
                    preferred_element_type=jnp.float32) + proj_b
    img_feats = jnp.maximum(feats, 0.0)        # (N, D) f32, rows (v,t,b)-ordered

    # ---- view split: contiguous row halves ((v, t, b)-major rows) ------------
    left = img_feats[0:BT]                     # view 0, (BT, D), (t,b)-ordered

    # One MXU pass computes both img_feats @ wx and img_feats @ sad_w.
    both = jnp.dot(img_feats.astype(jnp.bfloat16), wx_sad,
                   preferred_element_type=jnp.float32)               # (N, HH+D)
    # RNN input for the fused (mean-over-views) features, folded through the dot:
    # (0.5*(left+right)) @ wx == 0.5*(left@wx + right@wx)
    xw_all = 0.5 * (both[0:BT, 0:HH] + both[BT:N, 0:HH]) + bh        # (BT, HH)
    # sad: aligned right-view features
    aligned_right = both[BT:N, HH:HH + D] + sad_b                    # (BT, D)

    # ---- vmrnn stand-in: single-layer tanh RNN over T (batch_first) ----------
    h = jnp.zeros((B, HH), dtype=jnp.float32)
    h_sum = jnp.zeros((B, HH), dtype=jnp.float32)
    for t in range(T):                          # T=3, static -> unrolled
        xw_t = xw_all[t * B:(t + 1) * B]        # contiguous (B, HH) slice
        h = jnp.tanh(xw_t + jnp.dot(h.astype(jnp.bfloat16), wh_w,
                                    preferred_element_type=jnp.float32))
        h_sum = h_sum + h
    temporal_feature = h_sum * (1.0 / T)        # temporal_output.mean(dim=1)

    # ---- asymmetry branch (use_asymmetry=True, V == 2) ------------------------
    asym = jnp.abs(left - aligned_right)        # (BT, D) f32
    # TODO(synk): the real 'lat' module is unspecified; stand-in = mean over T + linear.
    asym_acc = asym[0:B]
    for t in range(1, T):
        asym_acc = asym_acc + asym[t * B:(t + 1) * B]
    asym_pooled = asym_acc * (1.0 / T)                                # (B, D)
    asym_feature = jnp.dot(asym_pooled.astype(jnp.bfloat16), lat_w,
                           preferred_element_type=jnp.float32) + lat_b  # (B, A)

    # ---- ahl risk head: single packed-RHS dot on the full (HH+A, O) weight ---
    combined = jnp.concatenate([temporal_feature, asym_feature], axis=-1)  # (B, HH+A)
    risk = jnp.dot(combined.astype(jnp.bfloat16), ahl_w,
                   preferred_element_type=jnp.float32) + ahl_b             # (B, O)

    # ---- single lane-dense packed output: hidden | risk | zero pad -----------
    out_ref[...] = jnp.concatenate(
        [h, risk, jnp.zeros((B, OUT_LANES - HH - O), jnp.float32)], axis=-1)


def im2col_3x3(x_nhwc):
    """x_nhwc: (N, H, W, C) -> (N*H*W, 9*C) 3x3 'same' patches (ki,kj,c-major)."""
    # TODO(synk): at production H/W/B the im2col should move inside the kernel
    # (9 shifted accumulating matmuls) to avoid the 9x HBM inflation; at this
    # toy size the unfolded input is ~200 KB and it does not matter.
    xp = jnp.pad(x_nhwc, ((0, 0), (1, 1), (1, 1), (0, 0)))
    shifts = [xp[:, di:di + H, dj:dj + W, :] for di in range(3) for dj in range(3)]
    return jnp.concatenate(shifts, axis=-1).reshape(N * HW, KC)


def _pad_lanes(w, lanes=128):
    return jnp.pad(w, ((0, 0), (0, lanes - w.shape[1])))


def pack_params(params):
    """Pack all small weights/biases into two lane-dense (rows, 128) slabs."""
    conv_w = jnp.pad(params["conv_w"], ((0, KC_PAD - KC), (0, 0)))      # (32, 16)
    wx_sad = jnp.concatenate([params["wx"], params["sad_w"]], axis=1)   # (32, 64)
    w_slab = jnp.concatenate(
        [_pad_lanes(conv_w), _pad_lanes(params["proj_w"]), _pad_lanes(wx_sad),
         _pad_lanes(params["wh"]), _pad_lanes(params["lat_w"]),
         _pad_lanes(params["ahl_w"])], axis=0).astype(jnp.bfloat16)     # (192, 128)

    b_slab = jnp.concatenate(
        [_pad_lanes(params["conv_b"]), _pad_lanes(params["proj_b"]),
         _pad_lanes(params["bh"]), _pad_lanes(params["sad_b"]),
         _pad_lanes(params["lat_b"]), _pad_lanes(params["ahl_b"]),
         jnp.zeros((B_ROWS - 6, 128), jnp.float32)], axis=0)            # (8, 128)
    return w_slab, b_slab


def make_params(key):
    ks = jax.random.split(key, 8)
    def init(k, shape, scale):
        return jax.random.normal(k, shape, dtype=jnp.float32) * scale
    return dict(
        conv_w=init(ks[0], (KC, F), 0.1),   conv_b=jnp.zeros((1, F), jnp.float32),
        proj_w=init(ks[1], (F, D), 0.1),    proj_b=jnp.zeros((1, D), jnp.float32),
        wx=init(ks[2], (D, HH), 0.1),       wh=init(ks[3], (HH, HH), 0.1),
        bh=jnp.zeros((1, HH), jnp.float32),
        sad_w=init(ks[4], (D, D), 0.1),     sad_b=jnp.zeros((1, D), jnp.float32),
        lat_w=init(ks[5], (D, A), 0.1),     lat_b=jnp.zeros((1, A), jnp.float32),
        ahl_w=init(ks[6], (HH + A, O), 0.1), ahl_b=jnp.zeros((1, O), jnp.float32),
    )


@jax.jit
def vmramar_forward(x, params):
    """x: (B, T, V, C, H, W) float32 (NCHW images).  Returns (risk_pred, hidden)."""
    # Rows flattened (v, t, b)-major: the two views become contiguous row
    # halves and each RNN time-step is a contiguous (B, HH) slice in-kernel.
    x_vtb = jnp.transpose(x, (2, 1, 0, 3, 4, 5)).reshape(N, C, H, W)
    x_nhwc = jnp.transpose(x_vtb, (0, 2, 3, 1))                  # (N, H, W, C)
    patches = im2col_3x3(x_nhwc)                                 # (N*HW, KC)
    patches = jnp.pad(patches, ((0, 0), (0, KC_PAD - KC))).astype(jnp.bfloat16)

    w_slab, b_slab = pack_params(params)

    flops = (2 * (N * HW) * KC_PAD * F        # conv matmul (the only real one)
             + 2 * N * F * D                  # projection
             + 2 * N * D * (HH + D)           # merged wx | sad_w pass
             + 2 * T * B * HH * HH            # tanh-RNN recurrence
             + 2 * B * D * A                  # lat
             + 2 * B * (HH + A) * O)          # risk head
    bytes_accessed = (patches.size * 2 + w_slab.size * 2
                      + b_slab.size * 4 + B * OUT_LANES * 4)

    vmem = pl.BlockSpec(memory_space=pltpu.MemorySpace.VMEM)
    # Grid-less single invocation: total live data is well under 1 MiB, which
    # fits the scoped-VMEM default on v5e/v6e/v7x.
    # TODO(synk): when N/B scales, grid over the image/batch axis with
    # dimension_semantics=("parallel",) (v7x has 2 TCs) and re-derive the
    # patches row-tile against v7x's 64 MiB VMEM (32 MiB scoped default).
    out = pl.pallas_call(
        vmramar_kernel,
        out_shape=jax.ShapeDtypeStruct((B, OUT_LANES), jnp.float32),
        in_specs=[vmem, vmem, vmem],
        out_specs=vmem,
        cost_estimate=pl.CostEstimate(flops=flops,
                                      transcendentals=T * B * HH,
                                      bytes_accessed=bytes_accessed),
    )(patches, w_slab, b_slab)

    hidden = out[:, 0:HH]
    risk = out[:, HH:HH + O]
    return risk, hidden


if __name__ == "__main__":
    key = jax.random.PRNGKey(0)
    kx, kp = jax.random.split(key)
    x = jax.random.normal(kx, (B, T, V, C, H, W), dtype=jnp.float32)
    params = make_params(kp)

    risk_pred, hidden_states = vmramar_forward(x, params)
    jax.block_until_ready((risk_pred, hidden_states))

    assert risk_pred.shape == (B, O)
    assert hidden_states.shape == (B, HH)
    print("KERNEL_OK")
</pallas_src>

<mosaic_0001>
module attributes {stable_mosaic.version = 11 : i64} {
  func.func @vmramar_kernel(%arg0: memref<3072x32xbf16, #tpu.memory_space<vmem>>, %arg1: memref<192x128xbf16, #tpu.memory_space<vmem>>, %arg2: memref<8x128xf32, #tpu.memory_space<vmem>>, %arg3: memref<2x128xf32, #tpu.memory_space<vmem>>) attributes {dimension_semantics = [], scalar_prefetch = 0 : i64, scratch_operands = 0 : i64, tpu.core_type = #tpu.core_type<tc>} {
    %c0 = arith.constant 0 : index
    %c0_0 = arith.constant 0 : index
    %0 = vector.load %arg1[%c0, %c0_0] : memref<192x128xbf16, #tpu.memory_space<vmem>>, vector<32x16xbf16>
    %c32 = arith.constant 32 : index
    %c0_1 = arith.constant 0 : index
    %1 = vector.load %arg1[%c32, %c0_1] : memref<192x128xbf16, #tpu.memory_space<vmem>>, vector<16x32xbf16>
    %c48 = arith.constant 48 : index
    %c0_2 = arith.constant 0 : index
    %2 = vector.load %arg1[%c48, %c0_2] : memref<192x128xbf16, #tpu.memory_space<vmem>>, vector<32x64xbf16>
    %c80 = arith.constant 80 : index
    %c0_3 = arith.constant 0 : index
    %3 = vector.load %arg1[%c80, %c0_3] : memref<192x128xbf16, #tpu.memory_space<vmem>>, vector<32x32xbf16>
    %c112 = arith.constant 112 : index
    %c0_4 = arith.constant 0 : index
    %4 = vector.load %arg1[%c112, %c0_4] : memref<192x128xbf16, #tpu.memory_space<vmem>>, vector<32x16xbf16>
    %c144 = arith.constant 144 : index
    %c0_5 = arith.constant 0 : index
    %5 = vector.load %arg1[%c144, %c0_5] : memref<192x128xbf16, #tpu.memory_space<vmem>>, vector<48x4xbf16>
    %c0_6 = arith.constant 0 : index
    %c0_7 = arith.constant 0 : index
    %6 = vector.load %arg2[%c0_6, %c0_7] : memref<8x128xf32, #tpu.memory_space<vmem>>, vector<1x16xf32>
    %c1 = arith.constant 1 : index
    %c0_8 = arith.constant 0 : index
    %7 = vector.load %arg2[%c1, %c0_8] : memref<8x128xf32, #tpu.memory_space<vmem>>, vector<1x32xf32>
    %c2 = arith.constant 2 : index
    %c0_9 = arith.constant 0 : index
    %8 = vector.load %arg2[%c2, %c0_9] : memref<8x128xf32, #tpu.memory_space<vmem>>, vector<1x32xf32>
    %c3 = arith.constant 3 : index
    %c0_10 = arith.constant 0 : index
    %9 = vector.load %arg2[%c3, %c0_10] : memref<8x128xf32, #tpu.memory_space<vmem>>, vector<1x32xf32>
    %c4 = arith.constant 4 : index
    %c0_11 = arith.constant 0 : index
    %10 = vector.load %arg2[%c4, %c0_11] : memref<8x128xf32, #tpu.memory_space<vmem>>, vector<1x16xf32>
    %c5 = arith.constant 5 : index
    %c0_12 = arith.constant 0 : index
    %11 = vector.load %arg2[%c5, %c0_12] : memref<8x128xf32, #tpu.memory_space<vmem>>, vector<1x4xf32>
    %c0_13 = arith.constant 0 : index
    %c0_14 = arith.constant 0 : index
    %12 = vector.load %arg0[%c0_13, %c0_14] : memref<3072x32xbf16, #tpu.memory_space<vmem>>, vector<3072x32xbf16>
    %cst = arith.constant dense<0.000000e+00> : vector<3072x16xf32>
    %13 = tpu.matmul %12, %0, %cst {dimension_numbers = #tpu.dot_dimension_numbers<[1], [0], [0], [1], [0, 0, 1, 1], [], []>} : vector<3072x32xbf16>, vector<32x16xbf16>, vector<3072x16xf32> -> vector<3072x16xf32>
    %14 = vector.broadcast %6 : vector<1x16xf32> to vector<3072x16xf32>
    %15 = arith.addf %13, %14 : vector<3072x16xf32>
    %cst_15 = arith.constant 0.000000e+00 : f32
    %16 = vector.broadcast %cst_15 : f32 to vector<3072x16xf32>
    %17 = arith.maximumf %15, %16 : vector<3072x16xf32>
    %18 = vector.shape_cast %17 : vector<3072x16xf32> to vector<12x256x16xf32>
    %cst_16 = arith.constant dense<0.000000e+00> : vector<12x16xf32>
    %19 = vector.multi_reduction <add>, %18, %cst_16 [1] : vector<12x256x16xf32> to vector<12x16xf32>
    %cst_17 = arith.constant 3.906250e-03 : f32
    %20 = vector.broadcast %cst_17 : f32 to vector<12x16xf32>
    %21 = arith.mulf %19, %20 : vector<12x16xf32>
    %22 = arith.truncf %21 : vector<12x16xf32> to vector<12x16xbf16>
    %cst_18 = arith.constant dense<0.000000e+00> : vector<12x32xf32>
    %23 = tpu.matmul %22, %1, %cst_18 {dimension_numbers = #tpu.dot_dimension_numbers<[1], [0], [0], [1], [0, 0, 1, 1], [], []>} : vector<12x16xbf16>, vector<16x32xbf16>, vector<12x32xf32> -> vector<12x32xf32>
    %24 = vector.broadcast %7 : vector<1x32xf32> to vector<12x32xf32>
    %25 = arith.addf %23, %24 : vector<12x32xf32>
    %cst_19 = arith.constant 0.000000e+00 : f32
    %26 = vector.broadcast %cst_19 : f32 to vector<12x32xf32>
    %27 = arith.maximumf %25, %26 : vector<12x32xf32>
    %28 = vector.extract_strided_slice %27 {offsets = [0, 0], sizes = [6, 32], strides = [1, 1]} : vector<12x32xf32> to vector<6x32xf32>
    %29 = arith.truncf %27 : vector<12x32xf32> to vector<12x32xbf16>
    %cst_20 = arith.constant dense<0.000000e+00> : vector<12x64xf32>
    %30 = tpu.matmul %29, %2, %cst_20 {dimension_numbers = #tpu.dot_dimension_numbers<[1], [0], [0], [1], [0, 0, 1, 1], [], []>} : vector<12x32xbf16>, vector<32x64xbf16>, vector<12x64xf32> -> vector<12x64xf32>
    %31 = vector.extract_strided_slice %30 {offsets = [0, 0], sizes = [6, 32], strides = [1, 1]} : vector<12x64xf32> to vector<6x32xf32>
    %32 = vector.extract_strided_slice %30 {offsets = [6, 0], sizes = [6, 32], strides = [1, 1]} : vector<12x64xf32> to vector<6x32xf32>
    %33 = arith.addf %31, %32 : vector<6x32xf32>
    %cst_21 = arith.constant 5.000000e-01 : f32
    %34 = vector.broadcast %cst_21 : f32 to vector<6x32xf32>
    %35 = arith.mulf %34, %33 : vector<6x32xf32>
    %36 = vector.broadcast %8 : vector<1x32xf32> to vector<6x32xf32>
    %37 = arith.addf %35, %36 : vector<6x32xf32>
    %38 = vector.extract_strided_slice %30 {offsets = [6, 32], sizes = [6, 32], strides = [1, 1]} : vector<12x64xf32> to vector<6x32xf32>
    %39 = vector.broadcast %9 : vector<1x32xf32> to vector<6x32xf32>
    %40 = arith.addf %38, %39 : vector<6x32xf32>
    %cst_22 = arith.constant 0.000000e+00 : f32
    %41 = vector.broadcast %cst_22 : f32 to vector<2x32xf32>
    %cst_23 = arith.constant 0.000000e+00 : f32
    %42 = vector.broadcast %cst_23 : f32 to vector<2x32xf32>
    %43 = vector.extract_strided_slice %37 {offsets = [0, 0], sizes = [2, 32], strides = [1, 1]} : vector<6x32xf32> to vector<2x32xf32>
    %44 = arith.truncf %41 : vector<2x32xf32> to vector<2x32xbf16>
    %cst_24 = arith.constant dense<0.000000e+00> : vector<2x32xf32>
    %45 = tpu.matmul %44, %3, %cst_24 {dimension_numbers = #tpu.dot_dimension_numbers<[1], [0], [0], [1], [0, 0, 1, 1], [], []>} : vector<2x32xbf16>, vector<32x32xbf16>, vector<2x32xf32> -> vector<2x32xf32>
    %46 = arith.addf %43, %45 : vector<2x32xf32>
    %47 = math.tanh %46 : vector<2x32xf32>
    %48 = arith.addf %42, %47 : vector<2x32xf32>
    %49 = vector.extract_strided_slice %37 {offsets = [2, 0], sizes = [2, 32], strides = [1, 1]} : vector<6x32xf32> to vector<2x32xf32>
    %50 = arith.truncf %47 : vector<2x32xf32> to vector<2x32xbf16>
    %cst_25 = arith.constant dense<0.000000e+00> : vector<2x32xf32>
    %51 = tpu.matmul %50, %3, %cst_25 {dimension_numbers = #tpu.dot_dimension_numbers<[1], [0], [0], [1], [0, 0, 1, 1], [], []>} : vector<2x32xbf16>, vector<32x32xbf16>, vector<2x32xf32> -> vector<2x32xf32>
    %52 = arith.addf %49, %51 : vector<2x32xf32>
    %53 = math.tanh %52 : vector<2x32xf32>
    %54 = arith.addf %48, %53 : vector<2x32xf32>
    %55 = vector.extract_strided_slice %37 {offsets = [4, 0], sizes = [2, 32], strides = [1, 1]} : vector<6x32xf32> to vector<2x32xf32>
    %56 = arith.truncf %53 : vector<2x32xf32> to vector<2x32xbf16>
    %cst_26 = arith.constant dense<0.000000e+00> : vector<2x32xf32>
    %57 = tpu.matmul %56, %3, %cst_26 {dimension_numbers = #tpu.dot_dimension_numbers<[1], [0], [0], [1], [0, 0, 1, 1], [], []>} : vector<2x32xbf16>, vector<32x32xbf16>, vector<2x32xf32> -> vector<2x32xf32>
    %58 = arith.addf %55, %57 : vector<2x32xf32>
    %59 = math.tanh %58 : vector<2x32xf32>
    %60 = arith.addf %54, %59 : vector<2x32xf32>
    %cst_27 = arith.constant 0.333333343 : f32
    %61 = vector.broadcast %cst_27 : f32 to vector<2x32xf32>
    %62 = arith.mulf %60, %61 : vector<2x32xf32>
    %63 = arith.subf %28, %40 : vector<6x32xf32>
    %64 = math.absf %63 : vector<6x32xf32>
    %65 = vector.extract_strided_slice %64 {offsets = [0, 0], sizes = [2, 32], strides = [1, 1]} : vector<6x32xf32> to vector<2x32xf32>
    %66 = vector.extract_strided_slice %64 {offsets = [2, 0], sizes = [2, 32], strides = [1, 1]} : vector<6x32xf32> to vector<2x32xf32>
    %67 = arith.addf %65, %66 : vector<2x32xf32>
    %68 = vector.extract_strided_slice %64 {offsets = [4, 0], sizes = [2, 32], strides = [1, 1]} : vector<6x32xf32> to vector<2x32xf32>
    %69 = arith.addf %67, %68 : vector<2x32xf32>
    %cst_28 = arith.constant 0.333333343 : f32
    %70 = vector.broadcast %cst_28 : f32 to vector<2x32xf32>
    %71 = arith.mulf %69, %70 : vector<2x32xf32>
    %72 = arith.truncf %71 : vector<2x32xf32> to vector<2x32xbf16>
    %cst_29 = arith.constant dense<0.000000e+00> : vector<2x16xf32>
    %73 = tpu.matmul %72, %4, %cst_29 {dimension_numbers = #tpu.dot_dimension_numbers<[1], [0], [0], [1], [0, 0, 1, 1], [], []>} : vector<2x32xbf16>, vector<32x16xbf16>, vector<2x16xf32> -> vector<2x16xf32>
    %74 = vector.broadcast %10 : vector<1x16xf32> to vector<2x16xf32>
    %75 = arith.addf %73, %74 : vector<2x16xf32>
    %76 = tpu.concatenate %62, %75 in 1 : vector<2x32xf32>, vector<2x16xf32> -> vector<2x48xf32>
    %77 = arith.truncf %76 : vector<2x48xf32> to vector<2x48xbf16>
    %cst_30 = arith.constant dense<0.000000e+00> : vector<2x4xf32>
    %78 = tpu.matmul %77, %5, %cst_30 {dimension_numbers = #tpu.dot_dimension_numbers<[1], [0], [0], [1], [0, 0, 1, 1], [], []>} : vector<2x48xbf16>, vector<48x4xbf16>, vector<2x4xf32> -> vector<2x4xf32>
    %79 = vector.broadcast %11 : vector<1x4xf32> to vector<2x4xf32>
    %80 = arith.addf %78, %79 : vector<2x4xf32>
    %cst_31 = arith.constant 0.000000e+00 : f32
    %81 = vector.broadcast %cst_31 : f32 to vector<2x92xf32>
    %82 = tpu.concatenate %59, %80, %81 in 1 : vector<2x32xf32>, vector<2x4xf32>, vector<2x92xf32> -> vector<2x128xf32>
    %c0_32 = arith.constant 0 : index
    %c0_33 = arith.constant 0 : index
    %83 = vector.load %arg3[%c0_32, %c0_33] : memref<2x128xf32, #tpu.memory_space<vmem>>, vector<2x128xf32>
    tpu.vector_store %arg3[%c0_32, %c0_33], %82 {strides = array<i32>} : memref<2x128xf32, #tpu.memory_space<vmem>>, vector<2x128xf32>,
    return
  }
}

</mosaic_0001>

<llo_original>
// kernel: vmramar_forward.1
$region0: #{vmramar_forward.1}
  #allocation0 [shape = 'u32[]', space=smem, size = 0x4, offset = 0x4, fixed_abs, tag = 'smem constant byte address 0x4 - core index']
  #allocation1 [shape = 'u32[144,128]{1,0:T(1,128)}', space=vmem, size = 0x12000, scoped, tag = 'internal scratch']
  %s0 = inlined_call_operand.vmem [shape: bf16[3072,32], index: 0, kind: input, shape index: {}]
  %s1 = inlined_call_operand.vmem [shape: bf16[192,128], index: 1, kind: input, shape index: {}]
  %s2 = inlined_call_operand.vmem [shape: f32[8,128], index: 2, kind: input, shape index: {}]
  %s3 = inlined_call_operand.vmem [shape: f32[2,128], index: 3, kind: output, shape index: {}]
  %s4 = sld [smem:[#allocation0]]
  $region22: #{vmramar_forward.1} parent=0
    _
  %s6 = ssub.s32 1, %s4
  %s7 = scalar_select 0, %s6, %s4
  // Predicated region
  $region2: #{vmramar_forward.1} parent=0 // pred_check
    _
  $region3: #{vmramar_forward.1} parent=0 // pred_check_branch
    %9 = sbr.rel (0) target = $region5
  $region4: #{vmramar_forward.1} parent=0 // pred_region
    _
  $region5: #{vmramar_forward.1} parent=0 // pred_fallthru
    _
  // Predicated region
  $region6: #{vmramar_forward.1} parent=0 // pred_check
    _
  $region7: #{vmramar_forward.1} parent=0 // pred_check_branch
    %11 = sbr.rel (0) target = $region9
  $region8: #{vmramar_forward.1} parent=0 // pred_region
    _
  $region9: #{vmramar_forward.1} parent=0 // pred_fallthru
    _
  // Predicated region
  $region10: #{vmramar_forward.1} parent=0 // pred_check
    _
  $region11: #{vmramar_forward.1} parent=0 // pred_check_branch
    %13 = sbr.rel (0) target = $region13
  $region12: #{vmramar_forward.1} parent=0 // pred_region
    _
  $region13: #{vmramar_forward.1} parent=0 // pred_fallthru
    _
  %v15 = vld [vmem:[%s1] sm:$0xf]
  %v16 = vld [vmem:[%s1 + $0x4] sm:$0xf]
  %v17 = vld [vmem:[%s1 + $0x8] sm:$0xf]
  %v18 = vld [vmem:[%s1 + $0xc] sm:$0xf]
  %v19 = vld [vmem:[%s1 + $0x10] sm:$0xf]
  %v20 = vld [vmem:[%s1 + $0x14] sm:$0xf]
  %v21 = vld [vmem:[%s1 + $0x18] sm:$0xf]
  %v22 = vld [vmem:[%s1 + $0x1c] sm:$0xf]
  %v23 = vld [vmem:[%s1 + $0x20] sm:$0xf]
  %v24 = vld [vmem:[%s1 + $0x24] sm:$0xf]
  %v25 = vld [vmem:[%s1 + $0x28] sm:$0xf]
  %v26 = vld [vmem:[%s1 + $0x2c] sm:$0xf]
  %v27 = vld [vmem:[%s1 + $0x30] sm:$0xf]
  %v28 = vld [vmem:[%s1 + $0x34] sm:$0xf]
  %v29 = vld [vmem:[%s1 + $0x38] sm:$0xf]
  %v30 = vld [vmem:[%s1 + $0x3c] sm:$0xf]
  %v31 = vld [vmem:[%s1 + $0x40] sm:$0xf]
  %v32 = vld [vmem:[%s1 + $0x44] sm:$0xf]
  %v33 = vld [vmem:[%s1 + $0x48] sm:$0xf]
  %v34 = vld [vmem:[%s1 + $0x4c] sm:$0xf]
  %v35 = vld [vmem:[%s1 + $0x50] sm:$0xf]
  %v36 = vld [vmem:[%s1 + $0x54] sm:$0xf]
  %v37 = vld [vmem:[%s1 + $0x58] sm:$0xf]
  %v38 = vld [vmem:[%s1 + $0x5c] sm:$0xf]
  %v39 = vld [vmem:[%s2] sm:$0x1]
  %v40 = vld [vmem:[%s2 + $0x1] sm:$0x1]
  %v41 = vld [vmem:[%s2 + $0x2] sm:$0x1]
  %v42 = vld [vmem:[%s2 + $0x3] sm:$0x1]
  %v43 = vld [vmem:[%s2 + $0x4] sm:$0x1]
  %v44 = vld [vmem:[%s2 + $0x5] sm:$0x1]
  %v45 = vld [vmem:[%s0] sm:$0xf]
  %v46 = vld [vmem:[%s0 + $0x4] sm:$0xf]
  %v47 = vld [vmem:[%s0 + $0x8] sm:$0xf]
  %v48 = vld [vmem:[%s0 + $0xc] sm:$0xf]
  %v49 = vld [vmem:[%s0 + $0x10] sm:$0xf]
  %v50 = vld [vmem:[%s0 + $0x14] sm:$0xf]
  %v51 = vld [vmem:[%s0 + $0x18] sm:$0xf]
  %v52 = vld [vmem:[%s0 + $0x1c] sm:$0xf]
  %v53 = vld [vmem:[%s0 + $0x20] sm:$0xf]
  %v54 = vld [vmem:[%s0 + $0x24] sm:$0xf]
  %v55 = vld [vmem:[%s0 + $0x28] sm:$0xf]
  %v56 = vld [vmem:[%s0 + $0x2c] sm:$0xf]
  %v57 = vld [vmem:[%s0 + $0x30] sm:$0xf]
  %v58 = vld [vmem:[%s0 + $0x34] sm:$0xf]
  %v59 = vld [vmem:[%s0 + $0x38] sm:$0xf]
  %v60 = vld [vmem:[%s0 + $0x3c] sm:$0xf]
  %v61 = vld [vmem:[%s0 + $0x40] sm:$0xf]
  %v62 = vld [vmem:[%s0 + $0x44] sm:$0xf]
  %v63 = vld [vmem:[%s0 + $0x48] sm:$0xf]
  %v64 = vld [vmem:[%s0 + $0x4c] sm:$0xf]
  %v65 = vld [vmem:[%s0 + $0x50] sm:$0xf]
  %v66 = vld [vmem:[%s0 + $0x54] sm:$0xf]
  %v67 = vld [vmem:[%s0 + $0x58] sm:$0xf]
  %v68 = vld [vmem:[%s0 + $0x5c] sm:$0xf]
  %v69 = vld [vmem:[%s0 + $0x60] sm:$0xf]
  %v70 = vld [vmem:[%s0 + $0x64] sm:$0xf]
  %v71 = vld [vmem:[%s0 + $0x68] sm:$0xf]
  %v72 = vld [vmem:[%s0 + $0x6c] sm:$0xf]
  %v73 = vld [vmem:[%s0 + $0x70] sm:$0xf]
  %v74 = vld [vmem:[%s0 + $0x74] sm:$0xf]
  %v75 = vld [vmem:[%s0 + $0x78] sm:$0xf]
  %v76 = vld [vmem:[%s0 + $0x7c] sm:$0xf]
  %v77 = vld [vmem:[%s0 + $0x80] sm:$0xf]
  %v78 = vld [vmem:[%s0 + $0x84] sm:$0xf]
  %v79 = vld [vmem:[%s0 + $0x88] sm:$0xf]
  %v80 = vld [vmem:[%s0 + $0x8c] sm:$0xf]
  %v81 = vld [vmem:[%s0 + $0x90] sm:$0xf]
  %v82 = vld [vmem:[%s0 + $0x94] sm:$0xf]
  %v83 = vld [vmem:[%s0 + $0x98] sm:$0xf]
  %v84 = vld [vmem:[%s0 + $0x9c] sm:$0xf]
  %v85 = vld [vmem:[%s0 + $0xa0] sm:$0xf]
  %v86 = vld [vmem:[%s0 + $0xa4] sm:$0xf]
  %v87 = vld [vmem:[%s0 + $0xa8] sm:$0xf]
  %v88 = vld [vmem:[%s0 + $0xac] sm:$0xf]
  %v89 = vld [vmem:[%s0 + $0xb0] sm:$0xf]
  %v90 = vld [vmem:[%s0 + $0xb4] sm:$0xf]
  %v91 = vld [vmem:[%s0 + $0xb8] sm:$0xf]
  %v92 = vld [vmem:[%s0 + $0xbc] sm:$0xf]
  %v93 = vld [vmem:[%s0 + $0xc0] sm:$0xf]
  %v94 = vld [vmem:[%s0 + $0xc4] sm:$0xf]
  %v95 = vld [vmem:[%s0 + $0xc8] sm:$0xf]
  %v96 = vld [vmem:[%s0 + $0xcc] sm:$0xf]
  %v97 = vld [vmem:[%s0 + $0xd0] sm:$0xf]
  %v98 = vld [vmem:[%s0 + $0xd4] sm:$0xf]
  %v99 = vld [vmem:[%s0 + $0xd8] sm:$0xf]
  %v100 = vld [vmem:[%s0 + $0xdc] sm:$0xf]
  %v101 = vld [vmem:[%s0 + $0xe0] sm:$0xf]
  %v102 = vld [vmem:[%s0 + $0xe4] sm:$0xf]
  %v103 = vld [vmem:[%s0 + $0xe8] sm:$0xf]
  %v104 = vld [vmem:[%s0 + $0xec] sm:$0xf]
  %v105 = vld [vmem:[%s0 + $0xf0] sm:$0xf]
  %v106 = vld [vmem:[%s0 + $0xf4] sm:$0xf]
  %v107 = vld [vmem:[%s0 + $0xf8] sm:$0xf]
  %v108 = vld [vmem:[%s0 + $0xfc] sm:$0xf]
  %v109 = vld [vmem:[%s0 + $0x100] sm:$0xf]
  %v110 = vld [vmem:[%s0 + $0x104] sm:$0xf]
  %v111 = vld [vmem:[%s0 + $0x108] sm:$0xf]
  %v112 = vld [vmem:[%s0 + $0x10c] sm:$0xf]
  %v113 = vld [vmem:[%s0 + $0x110] sm:$0xf]
  %v114 = vld [vmem:[%s0 + $0x114] sm:$0xf]
  %v115 = vld [vmem:[%s0 + $0x118] sm:$0xf]
  %v116 = vld [vmem:[%s0 + $0x11c] sm:$0xf]
  %v117 = vld [vmem:[%s0 + $0x120] sm:$0xf]
  %v118 = vld [vmem:[%s0 + $0x124] sm:$0xf]
  %v119 = vld [vmem:[%s0 + $0x128] sm:$0xf]
  %v120 = vld [vmem:[%s0 + $0x12c] sm:$0xf]
  %v121 = vld [vmem:[%s0 + $0x130] sm:$0xf]
  %v122 = vld [vmem:[%s0 + $0x134] sm:$0xf]
  %v123 = vld [vmem:[%s0 + $0x138] sm:$0xf]
  %v124 = vld [vmem:[%s0 + $0x13c] sm:$0xf]
  %v125 = vld [vmem:[%s0 + $0x140] sm:$0xf]
  %v126 = vld [vmem:[%s0 + $0x144] sm:$0xf]
  %v127 = vld [vmem:[%s0 + $0x148] sm:$0xf]
  %v128 = vld [vmem:[%s0 + $0x14c] sm:$0xf]
  %v129 = vld [vmem:[%s0 + $0x150] sm:$0xf]
  %v130 = vld [vmem:[%s0 + $0x154] sm:$0xf]
  %v131 = vld [vmem:[%s0 + $0x158] sm:$0xf]
  %v132 = vld [vmem:[%s0 + $0x15c] sm:$0xf]
  %v133 = vld [vmem:[%s0 + $0x160] sm:$0xf]
  %v134 = vld [vmem:[%s0 + $0x164] sm:$0xf]
  %v135 = vld [vmem:[%s0 + $0x168] sm:$0xf]
  %v136 = vld [vmem:[%s0 + $0x16c] sm:$0xf]
  %v137 = vld [vmem:[%s0 + $0x170] sm:$0xf]
  %v138 = vld [vmem:[%s0 + $0x174] sm:$0xf]
  %v139 = vld [vmem:[%s0 + $0x178] sm:$0xf]
  %v140 = vld [vmem:[%s0 + $0x17c] sm:$0xf]
  %v141 = vld [vmem:[%s0 + $0x180] sm:$0xf]
  %v142 = vld [vmem:[%s0 + $0x184] sm:$0xf]
  %v143 = vld [vmem:[%s0 + $0x188] sm:$0xf]
  %v144 = vld [vmem:[%s0 + $0x18c] sm:$0xf]
  %v145 = vld [vmem:[%s0 + $0x190] sm:$0xf]
  %v146 = vld [vmem:[%s0 + $0x194] sm:$0xf]
  %v147 = vld [vmem:[%s0 + $0x198] sm:$0xf]
  %v148 = vld [vmem:[%s0 + $0x19c] sm:$0xf]
  %v149 = vld [vmem:[%s0 + $0x1a0] sm:$0xf]
  %v150 = vld [vmem:[%s0 + $0x1a4] sm:$0xf]
  %v151 = vld [vmem:[%s0 + $0x1a8] sm:$0xf]
  %v152 = vld [vmem:[%s0 + $0x1ac] sm:$0xf]
  %v153 = vld [vmem:[%s0 + $0x1b0] sm:$0xf]
  %v154 = vld [vmem:[%s0 + $0x1b4] sm:$0xf]
  %v155 = vld [vmem:[%s0 + $0x1b8] sm:$0xf]
  %v156 = vld [vmem:[%s0 + $0x1bc] sm:$0xf]
  %v157 = vld [vmem:[%s0 + $0x1c0] sm:$0xf]
  %v158 = vld [vmem:[%s0 + $0x1c4] sm:$0xf]
  %v159 = vld [vmem:[%s0 + $0x1c8] sm:$0xf]
  %v160 = vld [vmem:[%s0 + $0x1cc] sm:$0xf]
  %v161 = vld [vmem:[%s0 + $0x1d0] sm:$0xf]
  %v162 = vld [vmem:[%s0 + $0x1d4] sm:$0xf]
  %v163 = vld [vmem:[%s0 + $0x1d8] sm:$0xf]
  %v164 = vld [vmem:[%s0 + $0x1dc] sm:$0xf]
  %v165 = vld [vmem:[%s0 + $0x1e0] sm:$0xf]
  %v166 = vld [vmem:[%s0 + $0x1e4] sm:$0xf]
  %v167 = vld [vmem:[%s0 + $0x1e8] sm:$0xf]
  %v168 = vld [vmem:[%s0 + $0x1ec] sm:$0xf]
  %v169 = vld [vmem:[%s0 + $0x1f0] sm:$0xf]
  %v170 = vld [vmem:[%s0 + $0x1f4] sm:$0xf]
  %v171 = vld [vmem:[%s0 + $0x1f8] sm:$0xf]
  %v172 = vld [vmem:[%s0 + $0x1fc] sm:$0xf]
  %v173 = vld [vmem:[%s0 + $0x200] sm:$0xf]
  %v174 = vld [vmem:[%s0 + $0x204] sm:$0xf]
  %v175 = vld [vmem:[%s0 + $0x208] sm:$0xf]
  %v176 = vld [vmem:[%s0 + $0x20c] sm:$0xf]
  %v177 = vld [vmem:[%s0 + $0x210] sm:$0xf]
  %v178 = vld [vmem:[%s0 + $0x214] sm:$0xf]
  %v179 = vld [vmem:[%s0 + $0x218] sm:$0xf]
  %v180 = vld [vmem:[%s0 + $0x21c] sm:$0xf]
  %v181 = vld [vmem:[%s0 + $0x220] sm:$0xf]
  %v182 = vld [vmem:[%s0 + $0x224] sm:$0xf]
  %v183 = vld [vmem:[%s0 + $0x228] sm:$0xf]
  %v184 = vld [vmem:[%s0 + $0x22c] sm:$0xf]
  %v185 = vld [vmem:[%s0 + $0x230] sm:$0xf]
  %v186 = vld [vmem:[%s0 + $0x234] sm:$0xf]
  %v187 = vld [vmem:[%s0 + $0x238] sm:$0xf]
  %v188 = vld [vmem:[%s0 + $0x23c] sm:$0xf]
  %v189 = vld [vmem:[%s0 + $0x240] sm:$0xf]
  %v190 = vld [vmem:[%s0 + $0x244] sm:$0xf]
  %v191 = vld [vmem:[%s0 + $0x248] sm:$0xf]
  %v192 = vld [vmem:[%s0 + $0x24c] sm:$0xf]
  %v193 = vld [vmem:[%s0 + $0x250] sm:$0xf]
  %v194 = vld [vmem:[%s0 + $0x254] sm:$0xf]
  %v195 = vld [vmem:[%s0 + $0x258] sm:$0xf]
  %v196 = vld [vmem:[%s0 + $0x25c] sm:$0xf]
  %v197 = vld [vmem:[%s0 + $0x260] sm:$0xf]
  %v198 = vld [vmem:[%s0 + $0x264] sm:$0xf]
  %v199 = vld [vmem:[%s0 + $0x268] sm:$0xf]
  %v200 = vld [vmem:[%s0 + $0x26c] sm:$0xf]
  %v201 = vld [vmem:[%s0 + $0x270] sm:$0xf]
  %v202 = vld [vmem:[%s0 + $0x274] sm:$0xf]
  %v203 = vld [vmem:[%s0 + $0x278] sm:$0xf]
  %v204 = vld [vmem:[%s0 + $0x27c] sm:$0xf]
  %v205 = vld [vmem:[%s0 + $0x280] sm:$0xf]
  %v206 = vld [vmem:[%s0 + $0x284] sm:$0xf]
  %v207 = vld [vmem:[%s0 + $0x288] sm:$0xf]
  %v208 = vld [vmem:[%s0 + $0x28c] sm:$0xf]
  %v209 = vld [vmem:[%s0 + $0x290] sm:$0xf]
  %v210 = vld [vmem:[%s0 + $0x294] sm:$0xf]
  %v211 = vld [vmem:[%s0 + $0x298] sm:$0xf]
  %v212 = vld [vmem:[%s0 + $0x29c] sm:$0xf]
  %v213 = vld [vmem:[%s0 + $0x2a0] sm:$0xf]
  %v214 = vld [vmem:[%s0 + $0x2a4] sm:$0xf]
  %v215 = vld [vmem:[%s0 + $0x2a8] sm:$0xf]
  %v216 = vld [vmem:[%s0 + $0x2ac] sm:$0xf]
  %v217 = vld [vmem:[%s0 + $0x2b0] sm:$0xf]
  %v218 = vld [vmem:[%s0 + $0x2b4] sm:$0xf]
  %v219 = vld [vmem:[%s0 + $0x2b8] sm:$0xf]
  %v220 = vld [vmem:[%s0 + $0x2bc] sm:$0xf]
  %v221 = vld [vmem:[%s0 + $0x2c0] sm:$0xf]
  %v222 = vld [vmem:[%s0 + $0x2c4] sm:$0xf]
  %v223 = vld [vmem:[%s0 + $0x2c8] sm:$0xf]
  %v224 = vld [vmem:[%s0 + $0x2cc] sm:$0xf]
  %v225 = vld [vmem:[%s0 + $0x2d0] sm:$0xf]
  %v226 = vld [vmem:[%s0 + $0x2d4] sm:$0xf]
  %v227 = vld [vmem:[%s0 + $0x2d8] sm:$0xf]
  %v228 = vld [vmem:[%s0 + $0x2dc] sm:$0xf]
  %v229 = vld [vmem:[%s0 + $0x2e0] sm:$0xf]
  %v230 = vld [vmem:[%s0 + $0x2e4] sm:$0xf]
  %v231 = vld [vmem:[%s0 + $0x2e8] sm:$0xf]
  %v232 = vld [vmem:[%s0 + $0x2ec] sm:$0xf]
  %v233 = vld [vmem:[%s0 + $0x2f0] sm:$0xf]
  %v234 = vld [vmem:[%s0 + $0x2f4] sm:$0xf]
  %v235 = vld [vmem:[%s0 + $0x2f8] sm:$0xf]
  %v236 = vld [vmem:[%s0 + $0x2fc] sm:$0xf]
  %v237 = vld [vmem:[%s0 + $0x300] sm:$0xf]
  %v238 = vld [vmem:[%s0 + $0x304] sm:$0xf]
  %v239 = vld [vmem:[%s0 + $0x308] sm:$0xf]
  %v240 = vld [vmem:[%s0 + $0x30c] sm:$0xf]
  %v241 = vld [vmem:[%s0 + $0x310] sm:$0xf]
  %v242 = vld [vmem:[%s0 + $0x314] sm:$0xf]
  %v243 = vld [vmem:[%s0 + $0x318] sm:$0xf]
  %v244 = vld [vmem:[%s0 + $0x31c] sm:$0xf]
  %v245 = vld [vmem:[%s0 + $0x320] sm:$0xf]
  %v246 = vld [vmem:[%s0 + $0x324] sm:$0xf]
  %v247 = vld [vmem:[%s0 + $0x328] sm:$0xf]
  %v248 = vld [vmem:[%s0 + $0x32c] sm:$0xf]
  %v249 = vld [vmem:[%s0 + $0x330] sm:$0xf]
  %v250 = vld [vmem:[%s0 + $0x334] sm:$0xf]
  %v251 = vld [vmem:[%s0 + $0x338] sm:$0xf]
  %v252 = vld [vmem:[%s0 + $0x33c] sm:$0xf]
  %v253 = vld [vmem:[%s0 + $0x340] sm:$0xf]
  %v254 = vld [vmem:[%s0 + $0x344] sm:$0xf]
  %v255 = vld [vmem:[%s0 + $0x348] sm:$0xf]
  %v256 = vld [vmem:[%s0 + $0x34c] sm:$0xf]
  %v257 = vld [vmem:[%s0 + $0x350] sm:$0xf]
  %v258 = vld [vmem:[%s0 + $0x354] sm:$0xf]
  %v259 = vld [vmem:[%s0 + $0x358] sm:$0xf]
  %v260 = vld [vmem:[%s0 + $0x35c] sm:$0xf]
  %v261 = vld [vmem:[%s0 + $0x360] sm:$0xf]
  %v262 = vld [vmem:[%s0 + $0x364] sm:$0xf]
  %v263 = vld [vmem:[%s0 + $0x368] sm:$0xf]
  %v264 = vld [vmem:[%s0 + $0x36c] sm:$0xf]
  %v265 = vld [vmem:[%s0 + $0x370] sm:$0xf]
  %v266 = vld [vmem:[%s0 + $0x374] sm:$0xf]
  %v267 = vld [vmem:[%s0 + $0x378] sm:$0xf]
  %v268 = vld [vmem:[%s0 + $0x37c] sm:$0xf]
  %v269 = vld [vmem:[%s0 + $0x380] sm:$0xf]
  %v270 = vld [vmem:[%s0 + $0x384] sm:$0xf]
  %v271 = vld [vmem:[%s0 + $0x388] sm:$0xf]
  %v272 = vld [vmem:[%s0 + $0x38c] sm:$0xf]
  %v273 = vld [vmem:[%s0 + $0x390] sm:$0xf]
  %v274 = vld [vmem:[%s0 + $0x394] sm:$0xf]
  %v275 = vld [vmem:[%s0 + $0x398] sm:$0xf]
  %v276 = vld [vmem:[%s0 + $0x39c] sm:$0xf]
  %v277 = vld [vmem:[%s0 + $0x3a0] sm:$0xf]
  %v278 = vld [vmem:[%s0 + $0x3a4] sm:$0xf]
  %v279 = vld [vmem:[%s0 + $0x3a8] sm:$0xf]
  %v280 = vld [vmem:[%s0 + $0x3ac] sm:$0xf]
  %v281 = vld [vmem:[%s0 + $0x3b0] sm:$0xf]
  %v282 = vld [vmem:[%s0 + $0x3b4] sm:$0xf]
  %v283 = vld [vmem:[%s0 + $0x3b8] sm:$0xf]
  %v284 = vld [vmem:[%s0 + $0x3bc] sm:$0xf]
  %v285 = vld [vmem:[%s0 + $0x3c0] sm:$0xf]
  %v286 = vld [vmem:[%s0 + $0x3c4] sm:$0xf]
  %v287 = vld [vmem:[%s0 + $0x3c8] sm:$0xf]
  %v288 = vld [vmem:[%s0 + $0x3cc] sm:$0xf]
  %v289 = vld [vmem:[%s0 + $0x3d0] sm:$0xf]
  %v290 = vld [vmem:[%s0 + $0x3d4] sm:$0xf]
  %v291 = vld [vmem:[%s0 + $0x3d8] sm:$0xf]
  %v292 = vld [vmem:[%s0 + $0x3dc] sm:$0xf]
  %v293 = vld [vmem:[%s0 + $0x3e0] sm:$0xf]
  %v294 = vld [vmem:[%s0 + $0x3e4] sm:$0xf]
  %v295 = vld [vmem:[%s0 + $0x3e8] sm:$0xf]
  %v296 = vld [vmem:[%s0 + $0x3ec] sm:$0xf]
  %v297 = vld [vmem:[%s0 + $0x3f0] sm:$0xf]
  %v298 = vld [vmem:[%s0 + $0x3f4] sm:$0xf]
  %v299 = vld [vmem:[%s0 + $0x3f8] sm:$0xf]
  %v300 = vld [vmem:[%s0 + $0x3fc] sm:$0xf]
  %v301 = vld [vmem:[%s0 + $0x400] sm:$0xf]
  %v302 = vld [vmem:[%s0 + $0x404] sm:$0xf]
  %v303 = vld [vmem:[%s0 + $0x408] sm:$0xf]
  %v304 = vld [vmem:[%s0 + $0x40c] sm:$0xf]
  %v305 = vld [vmem:[%s0 + $0x410] sm:$0xf]
  %v306 = vld [vmem:[%s0 + $0x414] sm:$0xf]
  %v307 = vld [vmem:[%s0 + $0x418] sm:$0xf]
  %v308 = vld [vmem:[%s0 + $0x41c] sm:$0xf]
  %v309 = vld [vmem:[%s0 + $0x420] sm:$0xf]
  %v310 = vld [vmem:[%s0 + $0x424] sm:$0xf]
  %v311 = vld [vmem:[%s0 + $0x428] sm:$0xf]
  %v312 = vld [vmem:[%s0 + $0x42c] sm:$0xf]
  %v313 = vld [vmem:[%s0 + $0x430] sm:$0xf]
  %v314 = vld [vmem:[%s0 + $0x434] sm:$0xf]
  %v315 = vld [vmem:[%s0 + $0x438] sm:$0xf]
  %v316 = vld [vmem:[%s0 + $0x43c] sm:$0xf]
  %v317 = vld [vmem:[%s0 + $0x440] sm:$0xf]
  %v318 = vld [vmem:[%s0 + $0x444] sm:$0xf]
  %v319 = vld [vmem:[%s0 + $0x448] sm:$0xf]
  %v320 = vld [vmem:[%s0 + $0x44c] sm:$0xf]
  %v321 = vld [vmem:[%s0 + $0x450] sm:$0xf]
  %v322 = vld [vmem:[%s0 + $0x454] sm:$0xf]
  %v323 = vld [vmem:[%s0 + $0x458] sm:$0xf]
  %v324 = vld [vmem:[%s0 + $0x45c] sm:$0xf]
  %v325 = vld [vmem:[%s0 + $0x460] sm:$0xf]
  %v326 = vld [vmem:[%s0 + $0x464] sm:$0xf]
  %v327 = vld [vmem:[%s0 + $0x468] sm:$0xf]
  %v328 = vld [vmem:[%s0 + $0x46c] sm:$0xf]
  %v329 = vld [vmem:[%s0 + $0x470] sm:$0xf]
  %v330 = vld [vmem:[%s0 + $0x474] sm:$0xf]
  %v331 = vld [vmem:[%s0 + $0x478] sm:$0xf]
  %v332 = vld [vmem:[%s0 + $0x47c] sm:$0xf]
  %v333 = vld [vmem:[%s0 + $0x480] sm:$0xf]
  %v334 = vld [vmem:[%s0 + $0x484] sm:$0xf]
  %v335 = vld [vmem:[%s0 + $0x488] sm:$0xf]
  %v336 = vld [vmem:[%s0 + $0x48c] sm:$0xf]
  %v337 = vld [vmem:[%s0 + $0x490] sm:$0xf]
  %v338 = vld [vmem:[%s0 + $0x494] sm:$0xf]
  %v339 = vld [vmem:[%s0 + $0x498] sm:$0xf]
  %v340 = vld [vmem:[%s0 + $0x49c] sm:$0xf]
  %v341 = vld [vmem:[%s0 + $0x4a0] sm:$0xf]
  %v342 = vld [vmem:[%s0 + $0x4a4] sm:$0xf]
  %v343 = vld [vmem:[%s0 + $0x4a8] sm:$0xf]
  %v344 = vld [vmem:[%s0 + $0x4ac] sm:$0xf]
  %v345 = vld [vmem:[%s0 + $0x4b0] sm:$0xf]
  %v346 = vld [vmem:[%s0 + $0x4b4] sm:$0xf]
  %v347 = vld [vmem:[%s0 + $0x4b8] sm:$0xf]
  %v348 = vld [vmem:[%s0 + $0x4bc] sm:$0xf]
  %v349 = vld [vmem:[%s0 + $0x4c0] sm:$0xf]
  %v350 = vld [vmem:[%s0 + $0x4c4] sm:$0xf]
  %v351 = vld [vmem:[%s0 + $0x4c8] sm:$0xf]
  %v352 = vld [vmem:[%s0 + $0x4cc] sm:$0xf]
  %v353 = vld [vmem:[%s0 + $0x4d0] sm:$0xf]
  %v354 = vld [vmem:[%s0 + $0x4d4] sm:$0xf]
  %v355 = vld [vmem:[%s0 + $0x4d8] sm:$0xf]
  %v356 = vld [vmem:[%s0 + $0x4dc] sm:$0xf]
  %v357 = vld [vmem:[%s0 + $0x4e0] sm:$0xf]
  %v358 = vld [vmem:[%s0 + $0x4e4] sm:$0xf]
  %v359 = vld [vmem:[%s0 + $0x4e8] sm:$0xf]
  %v360 = vld [vmem:[%s0 + $0x4ec] sm:$0xf]
  %v361 = vld [vmem:[%s0 + $0x4f0] sm:$0xf]
  %v362 = vld [vmem:[%s0 + $0x4f4] sm:$0xf]
  %v363 = vld [vmem:[%s0 + $0x4f8] sm:$0xf]
  %v364 = vld [vmem:[%s0 + $0x4fc] sm:$0xf]
  %v365 = vld [vmem:[%s0 + $0x500] sm:$0xf]
  %v366 = vld [vmem:[%s0 + $0x504] sm:$0xf]
  %v367 = vld [vmem:[%s0 + $0x508] sm:$0xf]
  %v368 = vld [vmem:[%s0 + $0x50c] sm:$0xf]
  %v369 = vld [vmem:[%s0 + $0x510] sm:$0xf]
  %v370 = vld [vmem:[%s0 + $0x514] sm:$0xf]
  %v371 = vld [vmem:[%s0 + $0x518] sm:$0xf]
  %v372 = vld [vmem:[%s0 + $0x51c] sm:$0xf]
  %v373 = vld [vmem:[%s0 + $0x520] sm:$0xf]
  %v374 = vld [vmem:[%s0 + $0x524] sm:$0xf]
  %v375 = vld [vmem:[%s0 + $0x528] sm:$0xf]
  %v376 = vld [vmem:[%s0 + $0x52c] sm:$0xf]
  %v377 = vld [vmem:[%s0 + $0x530] sm:$0xf]
  %v378 = vld [vmem:[%s0 + $0x534] sm:$0xf]
  %v379 = vld [vmem:[%s0 + $0x538] sm:$0xf]
  %v380 = vld [vmem:[%s0 + $0x53c] sm:$0xf]
  %v381 = vld [vmem:[%s0 + $0x540] sm:$0xf]
  %v382 = vld [vmem:[%s0 + $0x544] sm:$0xf]
  %v383 = vld [vmem:[%s0 + $0x548] sm:$0xf]
  %v384 = vld [vmem:[%s0 + $0x54c] sm:$0xf]
  %v385 = vld [vmem:[%s0 + $0x550] sm:$0xf]
  %v386 = vld [vmem:[%s0 + $0x554] sm:$0xf]
  %v387 = vld [vmem:[%s0 + $0x558] sm:$0xf]
  %v388 = vld [vmem:[%s0 + $0x55c] sm:$0xf]
  %v389 = vld [vmem:[%s0 + $0x560] sm:$0xf]
  %v390 = vld [vmem:[%s0 + $0x564] sm:$0xf]
  %v391 = vld [vmem:[%s0 + $0x568] sm:$0xf]
  %v392 = vld [vmem:[%s0 + $0x56c] sm:$0xf]
  %v393 = vld [vmem:[%s0 + $0x570] sm:$0xf]
  %v394 = vld [vmem:[%s0 + $0x574] sm:$0xf]
  %v395 = vld [vmem:[%s0 + $0x578] sm:$0xf]
  %v396 = vld [vmem:[%s0 + $0x57c] sm:$0xf]
  %v397 = vld [vmem:[%s0 + $0x580] sm:$0xf]
  %v398 = vld [vmem:[%s0 + $0x584] sm:$0xf]
  %v399 = vld [vmem:[%s0 + $0x588] sm:$0xf]
  %v400 = vld [vmem:[%s0 + $0x58c] sm:$0xf]
  %v401 = vld [vmem:[%s0 + $0x590] sm:$0xf]
  %v402 = vld [vmem:[%s0 + $0x594] sm:$0xf]
  %v403 = vld [vmem:[%s0 + $0x598] sm:$0xf]
  %v404 = vld [vmem:[%s0 + $0x59c] sm:$0xf]
  %v405 = vld [vmem:[%s0 + $0x5a0] sm:$0xf]
  %v406 = vld [vmem:[%s0 + $0x5a4] sm:$0xf]
  %v407 = vld [vmem:[%s0 + $0x5a8] sm:$0xf]
  %v408 = vld [vmem:[%s0 + $0x5ac] sm:$0xf]
  %v409 = vld [vmem:[%s0 + $0x5b0] sm:$0xf]
  %v410 = vld [vmem:[%s0 + $0x5b4] sm:$0xf]
  %v411 = vld [vmem:[%s0 + $0x5b8] sm:$0xf]
  %v412 = vld [vmem:[%s0 + $0x5bc] sm:$0xf]
  %v413 = vld [vmem:[%s0 + $0x5c0] sm:$0xf]
  %v414 = vld [vmem:[%s0 + $0x5c4] sm:$0xf]
  %v415 = vld [vmem:[%s0 + $0x5c8] sm:$0xf]
  %v416 = vld [vmem:[%s0 + $0x5cc] sm:$0xf]
  %v417 = vld [vmem:[%s0 + $0x5d0] sm:$0xf]
  %v418 = vld [vmem:[%s0 + $0x5d4] sm:$0xf]
  %v419 = vld [vmem:[%s0 + $0x5d8] sm:$0xf]
  %v420 = vld [vmem:[%s0 + $0x5dc] sm:$0xf]
  %v421 = vld [vmem:[%s0 + $0x5e0] sm:$0xf]
  %v422 = vld [vmem:[%s0 + $0x5e4] sm:$0xf]
  %v423 = vld [vmem:[%s0 + $0x5e8] sm:$0xf]
  %v424 = vld [vmem:[%s0 + $0x5ec] sm:$0xf]
  %v425 = vld [vmem:[%s0 + $0x5f0] sm:$0xf]
  %v426 = vld [vmem:[%s0 + $0x5f4] sm:$0xf]
  %v427 = vld [vmem:[%s0 + $0x5f8] sm:$0xf]
  %v428 = vld [vmem:[%s0 + $0x5fc] sm:$0xf]
  %v429 = vlaneseq
  %v430 = vshrl.u32 %v429, 7
  %v431 = vsub.s32 0, %v430
  %v432 = vrot.slane %v39, %v431
  %v817 = vunpack.c.l.b16 %v45
  %v818 = vunpack.c.l.b16 %v46
  %v819 = vunpack.c.l.b16 %v47
  %v820 = vunpack.c.l.b16 %v48
  %v821 = vunpack.c.l.b16 %v49
  %v822 = vunpack.c.l.b16 %v50
  %v823 = vunpack.c.l.b16 %v51
  %v824 = vunpack.c.l.b16 %v52
  %v825 = vunpack.c.l.b16 %v53
  %v826 = vunpack.c.l.b16 %v54
  %v827 = vunpack.c.l.b16 %v55
  %v828 = vunpack.c.l.b16 %v56
  %v829 = vunpack.c.l.b16 %v57
  %v830 = vunpack.c.l.b16 %v58
  %v831 = vunpack.c.l.b16 %v59
  %v832 = vunpack.c.l.b16 %v60
  %v833 = vunpack.c.l.b16 %v61
  %v834 = vunpack.c.l.b16 %v62
  %v835 = vunpack.c.l.b16 %v63
  %v836 = vunpack.c.l.b16 %v64
  %v837 = vunpack.c.l.b16 %v65
  %v838 = vunpack.c.l.b16 %v66
  %v839 = vunpack.c.l.b16 %v67
  %v840 = vunpack.c.l.b16 %v68
  %v841 = vunpack.c.l.b16 %v69
  %v842 = vunpack.c.l.b16 %v70
  %v843 = vunpack.c.l.b16 %v71
  %v844 = vunpack.c.l.b16 %v72
  %v845 = vunpack.c.l.b16 %v73
  %v846 = vunpack.c.l.b16 %v74
  %v847 = vunpack.c.l.b16 %v75
  %v848 = vunpack.c.l.b16 %v76
  %v849 = vunpack.c.l.b16 %v77
  %v850 = vunpack.c.l.b16 %v78
  %v851 = vunpack.c.l.b16 %v79
  %v852 = vunpack.c.l.b16 %v80
  %v853 = vunpack.c.l.b16 %v81
  %v854 = vunpack.c.l.b16 %v82
  %v855 = vunpack.c.l.b16 %v83
  %v856 = vunpack.c.l.b16 %v84
  %v857 = vunpack.c.l.b16 %v85
  %v858 = vunpack.c.l.b16 %v86
  %v859 = vunpack.c.l.b16 %v87
  %v860 = vunpack.c.l.b16 %v88
  %v861 = vunpack.c.l.b16 %v89
  %v862 = vunpack.c.l.b16 %v90
  %v863 = vunpack.c.l.b16 %v91
  %v864 = vunpack.c.l.b16 %v92
  %v865 = vunpack.c.l.b16 %v93
  %v866 = vunpack.c.l.b16 %v94
  %v867 = vunpack.c.l.b16 %v95
  %v868 = vunpack.c.l.b16 %v96
  %v869 = vunpack.c.l.b16 %v97
  %v870 = vunpack.c.l.b16 %v98
  %v871 = vunpack.c.l.b16 %v99
  %v872 = vunpack.c.l.b16 %v100
  %v873 = vunpack.c.l.b16 %v101
  %v874 = vunpack.c.l.b16 %v102
  %v875 = vunpack.c.l.b16 %v103
  %v876 = vunpack.c.l.b16 %v104
  %v877 = vunpack.c.l.b16 %v105
  %v878 = vunpack.c.l.b16 %v106
  %v879 = vunpack.c.l.b16 %v107
  %v880 = vunpack.c.l.b16 %v108
  %v881 = vunpack.c.l.b16 %v109
  %v882 = vunpack.c.l.b16 %v110
  %v883 = vunpack.c.l.b16 %v111
  %v884 = vunpack.c.l.b16 %v112
  %v885 = vunpack.c.l.b16 %v113
  %v886 = vunpack.c.l.b16 %v114
  %v887 = vunpack.c.l.b16 %v115
  %v888 = vunpack.c.l.b16 %v116
  %v889 = vunpack.c.l.b16 %v117
  %v890 = vunpack.c.l.b16 %v118
  %v891 = vunpack.c.l.b16 %v119
  %v892 = vunpack.c.l.b16 %v120
  %v893 = vunpack.c.l.b16 %v121
  %v894 = vunpack.c.l.b16 %v122
  %v895 = vunpack.c.l.b16 %v123
  %v896 = vunpack.c.l.b16 %v124
  %v897 = vunpack.c.l.b16 %v125
  %v898 = vunpack.c.l.b16 %v126
  %v899 = vunpack.c.l.b16 %v127
  %v900 = vunpack.c.l.b16 %v128
  %v901 = vunpack.c.l.b16 %v129
  %v902 = vunpack.c.l.b16 %v130
  %v903 = vunpack.c.l.b16 %v131
  %v904 = vunpack.c.l.b16 %v132
  %v905 = vunpack.c.l.b16 %v133
  %v906 = vunpack.c.l.b16 %v134
  %v907 = vunpack.c.l.b16 %v135
  %v908 = vunpack.c.l.b16 %v136
  %v909 = vunpack.c.l.b16 %v137
  %v910 = vunpack.c.l.b16 %v138
  %v911 = vunpack.c.l.b16 %v139
  %v912 = vunpack.c.l.b16 %v140
  %v913 = vunpack.c.l.b16 %v141
  %v914 = vunpack.c.l.b16 %v142
  %v915 = vunpack.c.l.b16 %v143
  %v916 = vunpack.c.l.b16 %v144
  %v917 = vunpack.c.l.b16 %v145
  %v918 = vunpack.c.l.b16 %v146
  %v919 = vunpack.c.l.b16 %v147
  %v920 = vunpack.c.l.b16 %v148
  %v921 = vunpack.c.l.b16 %v149
  %v922 = vunpack.c.l.b16 %v150
  %v923 = vunpack.c.l.b16 %v151
  %v924 = vunpack.c.l.b16 %v152
  %v925 = vunpack.c.l.b16 %v153
  %v926 = vunpack.c.l.b16 %v154
  %v927 = vunpack.c.l.b16 %v155
  %v928 = vunpack.c.l.b16 %v156
  %v929 = vunpack.c.l.b16 %v157
  %v930 = vunpack.c.l.b16 %v158
  %v931 = vunpack.c.l.b16 %v159
  %v932 = vunpack.c.l.b16 %v160
  %v933 = vunpack.c.l.b16 %v161
  %v934 = vunpack.c.l.b16 %v162
  %v935 = vunpack.c.l.b16 %v163
  %v936 = vunpack.c.l.b16 %v164
  %v937 = vunpack.c.l.b16 %v165
  %v938 = vunpack.c.l.b16 %v166
  %v939 = vunpack.c.l.b16 %v167
  %v940 = vunpack.c.l.b16 %v168
  %v941 = vunpack.c.l.b16 %v169
  %v942 = vunpack.c.l.b16 %v170
  %v943 = vunpack.c.l.b16 %v171
  %v944 = vunpack.c.l.b16 %v172
  %v945 = vunpack.c.l.b16 %v173
  %v946 = vunpack.c.l.b16 %v174
  %v947 = vunpack.c.l.b16 %v175
  %v948 = vunpack.c.l.b16 %v176
  %v949 = vunpack.c.l.b16 %v177
  %v950 = vunpack.c.l.b16 %v178
  %v951 = vunpack.c.l.b16 %v179
  %v952 = vunpack.c.l.b16 %v180
  %v953 = vunpack.c.l.b16 %v181
  %v954 = vunpack.c.l.b16 %v182
  %v955 = vunpack.c.l.b16 %v183
  %v956 = vunpack.c.l.b16 %v184
  %v957 = vunpack.c.l.b16 %v185
  %v958 = vunpack.c.l.b16 %v186
  %v959 = vunpack.c.l.b16 %v187
  %v960 = vunpack.c.l.b16 %v188
  %v961 = vunpack.c.l.b16 %v189
  %v962 = vunpack.c.l.b16 %v190
  %v963 = vunpack.c.l.b16 %v191
  %v964 = vunpack.c.l.b16 %v192
  %v965 = vunpack.c.l.b16 %v193
  %v966 = vunpack.c.l.b16 %v194
  %v967 = vunpack.c.l.b16 %v195
  %v968 = vunpack.c.l.b16 %v196
  %v969 = vunpack.c.l.b16 %v197
  %v970 = vunpack.c.l.b16 %v198
  %v971 = vunpack.c.l.b16 %v199
  %v972 = vunpack.c.l.b16 %v200
  %v973 = vunpack.c.l.b16 %v201
  %v974 = vunpack.c.l.b16 %v202
  %v975 = vunpack.c.l.b16 %v203
  %v976 = vunpack.c.l.b16 %v204
  %v977 = vunpack.c.l.b16 %v205
  %v978 = vunpack.c.l.b16 %v206
  %v979 = vunpack.c.l.b16 %v207
  %v980 = vunpack.c.l.b16 %v208
  %v981 = vunpack.c.l.b16 %v209
  %v982 = vunpack.c.l.b16 %v210
  %v983 = vunpack.c.l.b16 %v211
  %v984 = vunpack.c.l.b16 %v212
  %v985 = vunpack.c.l.b16 %v213
  %v986 = vunpack.c.l.b16 %v214
  %v987 = vunpack.c.l.b16 %v215
  %v988 = vunpack.c.l.b16 %v216
  %v989 = vunpack.c.l.b16 %v217
  %v990 = vunpack.c.l.b16 %v218
  %v991 = vunpack.c.l.b16 %v219
  %v992 = vunpack.c.l.b16 %v220
  %v993 = vunpack.c.l.b16 %v221
  %v994 = vunpack.c.l.b16 %v222
  %v995 = vunpack.c.l.b16 %v223
  %v996 = vunpack.c.l.b16 %v224
  %v997 = vunpack.c.l.b16 %v225
  %v998 = vunpack.c.l.b16 %v226
  %v999 = vunpack.c.l.b16 %v227
  %v1000 = vunpack.c.l.b16 %v228
  %v1001 = vunpack.c.l.b16 %v229
  %v1002 = vunpack.c.l.b16 %v230
  %v1003 = vunpack.c.l.b16 %v231
  %v1004 = vunpack.c.l.b16 %v232
  %v1005 = vunpack.c.l.b16 %v233
  %v1006 = vunpack.c.l.b16 %v234
  %v1007 = vunpack.c.l.b16 %v235
  %v1008 = vunpack.c.l.b16 %v236
  %v1009 = vunpack.c.l.b16 %v237
  %v1010 = vunpack.c.l.b16 %v238
  %v1011 = vunpack.c.l.b16 %v239
  %v1012 = vunpack.c.l.b16 %v240
  %v1013 = vunpack.c.l.b16 %v241
  %v1014 = vunpack.c.l.b16 %v242
  %v1015 = vunpack.c.l.b16 %v243
  %v1016 = vunpack.c.l.b16 %v244
  %v1017 = vunpack.c.l.b16 %v245
  %v1018 = vunpack.c.l.b16 %v246
  %v1019 = vunpack.c.l.b16 %v247
  %v1020 = vunpack.c.l.b16 %v248
  %v1021 = vunpack.c.l.b16 %v249
  %v1022 = vunpack.c.l.b16 %v250
  %v1023 = vunpack.c.l.b16 %v251
  %v1024 = vunpack.c.l.b16 %v252
  %v1025 = vunpack.c.l.b16 %v253
  %v1026 = vunpack.c.l.b16 %v254
  %v1027 = vunpack.c.l.b16 %v255
  %v1028 = vunpack.c.l.b16 %v256
  %v1029 = vunpack.c.l.b16 %v257
  %v1030 = vunpack.c.l.b16 %v258
  %v1031 = vunpack.c.l.b16 %v259
  %v1032 = vunpack.c.l.b16 %v260
  %v1033 = vunpack.c.l.b16 %v261
  %v1034 = vunpack.c.l.b16 %v262
  %v1035 = vunpack.c.l.b16 %v263
  %v1036 = vunpack.c.l.b16 %v264
  %v1037 = vunpack.c.l.b16 %v265
  %v1038 = vunpack.c.l.b16 %v266
  %v1039 = vunpack.c.l.b16 %v267
  %v1040 = vunpack.c.l.b16 %v268
  %v1041 = vunpack.c.l.b16 %v269
  %v1042 = vunpack.c.l.b16 %v270
  %v1043 = vunpack.c.l.b16 %v271
  %v1044 = vunpack.c.l.b16 %v272
  %v1045 = vunpack.c.l.b16 %v273
  %v1046 = vunpack.c.l.b16 %v274
  %v1047 = vunpack.c.l.b16 %v275
  %v1048 = vunpack.c.l.b16 %v276
  %v1049 = vunpack.c.l.b16 %v277
  %v1050 = vunpack.c.l.b16 %v278
  %v1051 = vunpack.c.l.b16 %v279
  %v1052 = vunpack.c.l.b16 %v280
  %v1053 = vunpack.c.l.b16 %v281
  %v1054 = vunpack.c.l.b16 %v282
  %v1055 = vunpack.c.l.b16 %v283
  %v1056 = vunpack.c.l.b16 %v284
  %v1057 = vunpack.c.l.b16 %v285
  %v1058 = vunpack.c.l.b16 %v286
  %v1059 = vunpack.c.l.b16 %v287
  %v1060 = vunpack.c.l.b16 %v288
  %v1061 = vunpack.c.l.b16 %v289
  %v1062 = vunpack.c.l.b16 %v290
  %v1063 = vunpack.c.l.b16 %v291
  %v1064 = vunpack.c.l.b16 %v292
  %v1065 = vunpack.c.l.b16 %v293
  %v1066 = vunpack.c.l.b16 %v294
  %v1067 = vunpack.c.l.b16 %v295
  %v1068 = vunpack.c.l.b16 %v296
  %v1069 = vunpack.c.l.b16 %v297
  %v1070 = vunpack.c.l.b16 %v298
  %v1071 = vunpack.c.l.b16 %v299
  %v1072 = vunpack.c.l.b16 %v300
  %v1073 = vunpack.c.l.b16 %v301
  %v1074 = vunpack.c.l.b16 %v302
  %v1075 = vunpack.c.l.b16 %v303
  %v1076 = vunpack.c.l.b16 %v304
  %v1077 = vunpack.c.l.b16 %v305
  %v1078 = vunpack.c.l.b16 %v306
  %v1079 = vunpack.c.l.b16 %v307
  %v1080 = vunpack.c.l.b16 %v308
  %v1081 = vunpack.c.l.b16 %v309
  %v1082 = vunpack.c.l.b16 %v310
  %v1083 = vunpack.c.l.b16 %v311
  %v1084 = vunpack.c.l.b16 %v312
  %v1085 = vunpack.c.l.b16 %v313
  %v1086 = vunpack.c.l.b16 %v314
  %v1087 = vunpack.c.l.b16 %v315
  %v1088 = vunpack.c.l.b16 %v316
  %v1089 = vunpack.c.l.b16 %v317
  %v1090 = vunpack.c.l.b16 %v318
  %v1091 = vunpack.c.l.b16 %v319
  %v1092 = vunpack.c.l.b16 %v320
  %v1093 = vunpack.c.l.b16 %v321
  %v1094 = vunpack.c.l.b16 %v322
  %v1095 = vunpack.c.l.b16 %v323
  %v1096 = vunpack.c.l.b16 %v324
  %v1097 = vunpack.c.l.b16 %v325
  %v1098 = vunpack.c.l.b16 %v326
  %v1099 = vunpack.c.l.b16 %v327
  %v1100 = vunpack.c.l.b16 %v328
  %v1101 = vunpack.c.l.b16 %v329
  %v1102 = vunpack.c.l.b16 %v330
  %v1103 = vunpack.c.l.b16 %v331
  %v1104 = vunpack.c.l.b16 %v332
  %v1105 = vunpack.c.l.b16 %v333
  %v1106 = vunpack.c.l.b16 %v334
  %v1107 = vunpack.c.l.b16 %v335
  %v1108 = vunpack.c.l.b16 %v336
  %v1109 = vunpack.c.l.b16 %v337
  %v1110 = vunpack.c.l.b16 %v338
  %v1111 = vunpack.c.l.b16 %v339
  %v1112 = vunpack.c.l.b16 %v340
  %v1113 = vunpack.c.l.b16 %v341
  %v1114 = vunpack.c.l.b16 %v342
  %v1115 = vunpack.c.l.b16 %v343
  %v1116 = vunpack.c.l.b16 %v344
  %v1117 = vunpack.c.l.b16 %v345
  %v1118 = vunpack.c.l.b16 %v346
  %v1119 = vunpack.c.l.b16 %v347
  %v1120 = vunpack.c.l.b16 %v348
  %v1121 = vunpack.c.l.b16 %v349
  %v1122 = vunpack.c.l.b16 %v350
  %v1123 = vunpack.c.l.b16 %v351
  %v1124 = vunpack.c.l.b16 %v352
  %v1125 = vunpack.c.l.b16 %v353
  %v1126 = vunpack.c.l.b16 %v354
  %v1127 = vunpack.c.l.b16 %v355
  %v1128 = vunpack.c.l.b16 %v356
  %v1129 = vunpack.c.l.b16 %v357
  %v1130 = vunpack.c.l.b16 %v358
  %v1131 = vunpack.c.l.b16 %v359
  %v1132 = vunpack.c.l.b16 %v360
  %v1133 = vunpack.c.l.b16 %v361
  %v1134 = vunpack.c.l.b16 %v362
  %v1135 = vunpack.c.l.b16 %v363
  %v1136 = vunpack.c.l.b16 %v364
  %v1137 = vunpack.c.l.b16 %v365
  %v1138 = vunpack.c.l.b16 %v366
  %v1139 = vunpack.c.l.b16 %v367
  %v1140 = vunpack.c.l.b16 %v368
  %v1141 = vunpack.c.l.b16 %v369
  %v1142 = vunpack.c.l.b16 %v370
  %v1143 = vunpack.c.l.b16 %v371
  %v1144 = vunpack.c.l.b16 %v372
  %v1145 = vunpack.c.l.b16 %v373
  %v1146 = vunpack.c.l.b16 %v374
  %v1147 = vunpack.c.l.b16 %v375
  %v1148 = vunpack.c.l.b16 %v376
  %v1149 = vunpack.c.l.b16 %v377
  %v1150 = vunpack.c.l.b16 %v378
  %v1151 = vunpack.c.l.b16 %v379
  %v1152 = vunpack.c.l.b16 %v380
  %v1153 = vunpack.c.l.b16 %v381
  %v1154 = vunpack.c.l.b16 %v382
  %v1155 = vunpack.c.l.b16 %v383
  %v1156 = vunpack.c.l.b16 %v384
  %v1157 = vunpack.c.l.b16 %v385
  %v1158 = vunpack.c.l.b16 %v386
  %v1159 = vunpack.c.l.b16 %v387
  %v1160 = vunpack.c.l.b16 %v388
  %v1161 = vunpack.c.l.b16 %v389
  %v1162 = vunpack.c.l.b16 %v390
  %v1163 = vunpack.c.l.b16 %v391
  %v1164 = vunpack.c.l.b16 %v392
  %v1165 = vunpack.c.l.b16 %v393
  %v1166 = vunpack.c.l.b16 %v394
  %v1167 = vunpack.c.l.b16 %v395
  %v1168 = vunpack.c.l.b16 %v396
  %v1169 = vunpack.c.l.b16 %v397
  %v1170 = vunpack.c.l.b16 %v398
  %v1171 = vunpack.c.l.b16 %v399
  %v1172 = vunpack.c.l.b16 %v400
  %v1173 = vunpack.c.l.b16 %v401
  %v1174 = vunpack.c.l.b16 %v402
  %v1175 = vunpack.c.l.b16 %v403
  %v1176 = vunpack.c.l.b16 %v404
  %v1177 = vunpack.c.l.b16 %v405
  %v1178 = vunpack.c.l.b16 %v406
  %v1179 = vunpack.c.l.b16 %v407
  %v1180 = vunpack.c.l.b16 %v408
  %v1181 = vunpack.c.l.b16 %v409
  %v1182 = vunpack.c.l.b16 %v410
  %v1183 = vunpack.c.l.b16 %v411
  %v1184 = vunpack.c.l.b16 %v412
  %v1185 = vunpack.c.l.b16 %v413
  %v1186 = vunpack.c.l.b16 %v414
  %v1187 = vunpack.c.l.b16 %v415
  %v1188 = vunpack.c.l.b16 %v416
  %v1189 = vunpack.c.l.b16 %v417
  %v1190 = vunpack.c.l.b16 %v418
  %v1191 = vunpack.c.l.b16 %v419
  %v1192 = vunpack.c.l.b16 %v420
  %v1193 = vunpack.c.l.b16 %v421
  %v1194 = vunpack.c.l.b16 %v422
  %v1195 = vunpack.c.l.b16 %v423
  %v1196 = vunpack.c.l.b16 %v424
  %v1197 = vunpack.c.l.b16 %v425
  %v1198 = vunpack.c.l.b16 %v426
  %v1199 = vunpack.c.l.b16 %v427
  %v1200 = vunpack.c.l.b16 %v428
  %v1201 = vpack.c.b16 %v818, %v817
  %v1202 = vpack.c.b16 %v820, %v819
  %v1203 = vpack.c.b16 %v822, %v821
  %v1204 = vpack.c.b16 %v824, %v823
  %v1205 = vpack.c.b16 %v826, %v825
  %v1206 = vpack.c.b16 %v828, %v827
  %v1207 = vpack.c.b16 %v830, %v829
  %v1208 = vpack.c.b16 %v832, %v831
  %v1209 = vpack.c.b16 %v834, %v833
  %v1210 = vpack.c.b16 %v836, %v835
  %v1211 = vpack.c.b16 %v838, %v837
  %v1212 = vpack.c.b16 %v840, %v839
  %v1213 = vpack.c.b16 %v842, %v841
  %v1214 = vpack.c.b16 %v844, %v843
  %v1215 = vpack.c.b16 %v846, %v845
  %v1216 = vpack.c.b16 %v848, %v847
  %v1217 = vpack.c.b16 %v850, %v849
  %v1218 = vpack.c.b16 %v852, %v851
  %v1219 = vpack.c.b16 %v854, %v853
  %v1220 = vpack.c.b16 %v856, %v855
  %v1221 = vpack.c.b16 %v858, %v857
  %v1222 = vpack.c.b16 %v860, %v859
  %v1223 = vpack.c.b16 %v862, %v861
  %v1224 = vpack.c.b16 %v864, %v863
  %v1225 = vpack.c.b16 %v866, %v865
  %v1226 = vpack.c.b16 %v868, %v867
  %v1227 = vpack.c.b16 %v870, %v869
  %v1228 = vpack.c.b16 %v872, %v871
  %v1229 = vpack.c.b16 %v874, %v873
  %v1230 = vpack.c.b16 %v876, %v875
  %v1231 = vpack.c.b16 %v878, %v877
  %v1232 = vpack.c.b16 %v880, %v879
  %v1233 = vpack.c.b16 %v882, %v881
  %v1234 = vpack.c.b16 %v884, %v883
  %v1235 = vpack.c.b16 %v886, %v885
  %v1236 = vpack.c.b16 %v888, %v887
  %v1237 = vpack.c.b16 %v890, %v889
  %v1238 = vpack.c.b16 %v892, %v891
  %v1239 = vpack.c.b16 %v894, %v893
  %v1240 = vpack.c.b16 %v896, %v895
  %v1241 = vpack.c.b16 %v898, %v897
  %v1242 = vpack.c.b16 %v900, %v899
  %v1243 = vpack.c.b16 %v902, %v901
  %v1244 = vpack.c.b16 %v904, %v903
  %v1245 = vpack.c.b16 %v906, %v905
  %v1246 = vpack.c.b16 %v908, %v907
  %v1247 = vpack.c.b16 %v910, %v909
  %v1248 = vpack.c.b16 %v912, %v911
  %v1249 = vpack.c.b16 %v914, %v913
  %v1250 = vpack.c.b16 %v916, %v915
  %v1251 = vpack.c.b16 %v918, %v917
  %v1252 = vpack.c.b16 %v920, %v919
  %v1253 = vpack.c.b16 %v922, %v921
  %v1254 = vpack.c.b16 %v924, %v923
  %v1255 = vpack.c.b16 %v926, %v925
  %v1256 = vpack.c.b16 %v928, %v927
  %v1257 = vpack.c.b16 %v930, %v929
  %v1258 = vpack.c.b16 %v932, %v931
  %v1259 = vpack.c.b16 %v934, %v933
  %v1260 = vpack.c.b16 %v936, %v935
  %v1261 = vpack.c.b16 %v938, %v937
  %v1262 = vpack.c.b16 %v940, %v939
  %v1263 = vpack.c.b16 %v942, %v941
  %v1264 = vpack.c.b16 %v944, %v943
  %v1265 = vpack.c.b16 %v946, %v945
  %v1266 = vpack.c.b16 %v948, %v947
  %v1267 = vpack.c.b16 %v950, %v949
  %v1268 = vpack.c.b16 %v952, %v951
  %v1269 = vpack.c.b16 %v954, %v953
  %v1270 = vpack.c.b16 %v956, %v955
  %v1271 = vpack.c.b16 %v958, %v957
  %v1272 = vpack.c.b16 %v960, %v959
  %v1273 = vpack.c.b16 %v962, %v961
  %v1274 = vpack.c.b16 %v964, %v963
  %v1275 = vpack.c.b16 %v966, %v965
  %v1276 = vpack.c.b16 %v968, %v967
  %v1277 = vpack.c.b16 %v970, %v969
  %v1278 = vpack.c.b16 %v972, %v971
  %v1279 = vpack.c.b16 %v974, %v973
  %v1280 = vpack.c.b16 %v976, %v975
  %v1281 = vpack.c.b16 %v978, %v977
  %v1282 = vpack.c.b16 %v980, %v979
  %v1283 = vpack.c.b16 %v982, %v981
  %v1284 = vpack.c.b16 %v984, %v983
  %v1285 = vpack.c.b16 %v986, %v985
  %v1286 = vpack.c.b16 %v988, %v987
  %v1287 = vpack.c.b16 %v990, %v989
  %v1288 = vpack.c.b16 %v992, %v991
  %v1289 = vpack.c.b16 %v994, %v993
  %v1290 = vpack.c.b16 %v996, %v995
  %v1291 = vpack.c.b16 %v998, %v997
  %v1292 = vpack.c.b16 %v1000, %v999
  %v1293 = vpack.c.b16 %v1002, %v1001
  %v1294 = vpack.c.b16 %v1004, %v1003
  %v1295 = vpack.c.b16 %v1006, %v1005
  %v1296 = vpack.c.b16 %v1008, %v1007
  %v1297 = vpack.c.b16 %v1010, %v1009
  %v1298 = vpack.c.b16 %v1012, %v1011
  %v1299 = vpack.c.b16 %v1014, %v1013
  %v1300 = vpack.c.b16 %v1016, %v1015
  %v1301 = vpack.c.b16 %v1018, %v1017
  %v1302 = vpack.c.b16 %v1020, %v1019
  %v1303 = vpack.c.b16 %v1022, %v1021
  %v1304 = vpack.c.b16 %v1024, %v1023
  %v1305 = vpack.c.b16 %v1026, %v1025
  %v1306 = vpack.c.b16 %v1028, %v1027
  %v1307 = vpack.c.b16 %v1030, %v1029
  %v1308 = vpack.c.b16 %v1032, %v1031
  %v1309 = vpack.c.b16 %v1034, %v1033
  %v1310 = vpack.c.b16 %v1036, %v1035
  %v1311 = vpack.c.b16 %v1038, %v1037
  %v1312 = vpack.c.b16 %v1040, %v1039
  %v1313 = vpack.c.b16 %v1042, %v1041
  %v1314 = vpack.c.b16 %v1044, %v1043
  %v1315 = vpack.c.b16 %v1046, %v1045
  %v1316 = vpack.c.b16 %v1048, %v1047
  %v1317 = vpack.c.b16 %v1050, %v1049
  %v1318 = vpack.c.b16 %v1052, %v1051
  %v1319 = vpack.c.b16 %v1054, %v1053
  %v1320 = vpack.c.b16 %v1056, %v1055
  %v1321 = vpack.c.b16 %v1058, %v1057
  %v1322 = vpack.c.b16 %v1060, %v1059
  %v1323 = vpack.c.b16 %v1062, %v1061
  %v1324 = vpack.c.b16 %v1064, %v1063
  %v1325 = vpack.c.b16 %v1066, %v1065
  %v1326 = vpack.c.b16 %v1068, %v1067
  %v1327 = vpack.c.b16 %v1070, %v1069
  %v1328 = vpack.c.b16 %v1072, %v1071
  %v1329 = vpack.c.b16 %v1074, %v1073
  %v1330 = vpack.c.b16 %v1076, %v1075
  %v1331 = vpack.c.b16 %v1078, %v1077
  %v1332 = vpack.c.b16 %v1080, %v1079
  %v1333 = vpack.c.b16 %v1082, %v1081
  %v1334 = vpack.c.b16 %v1084, %v1083
  %v1335 = vpack.c.b16 %v1086, %v1085
  %v1336 = vpack.c.b16 %v1088, %v1087
  %v1337 = vpack.c.b16 %v1090, %v1089
  %v1338 = vpack.c.b16 %v1092, %v1091
  %v1339 = vpack.c.b16 %v1094, %v1093
  %v1340 = vpack.c.b16 %v1096, %v1095
  %v1341 = vpack.c.b16 %v1098, %v1097
  %v1342 = vpack.c.b16 %v1100, %v1099
  %v1343 = vpack.c.b16 %v1102, %v1101
  %v1344 = vpack.c.b16 %v1104, %v1103
  %v1345 = vpack.c.b16 %v1106, %v1105
  %v1346 = vpack.c.b16 %v1108, %v1107
  %v1347 = vpack.c.b16 %v1110, %v1109
  %v1348 = vpack.c.b16 %v1112, %v1111
  %v1349 = vpack.c.b16 %v1114, %v1113
  %v1350 = vpack.c.b16 %v1116, %v1115
  %v1351 = vpack.c.b16 %v1118, %v1117
  %v1352 = vpack.c.b16 %v1120, %v1119
  %v1353 = vpack.c.b16 %v1122, %v1121
  %v1354 = vpack.c.b16 %v1124, %v1123
  %v1355 = vpack.c.b16 %v1126, %v1125
  %v1356 = vpack.c.b16 %v1128, %v1127
  %v1357 = vpack.c.b16 %v1130, %v1129
  %v1358 = vpack.c.b16 %v1132, %v1131
  %v1359 = vpack.c.b16 %v1134, %v1133
  %v1360 = vpack.c.b16 %v1136, %v1135
  %v1361 = vpack.c.b16 %v1138, %v1137
  %v1362 = vpack.c.b16 %v1140, %v1139
  %v1363 = vpack.c.b16 %v1142, %v1141
  %v1364 = vpack.c.b16 %v1144, %v1143
  %v1365 = vpack.c.b16 %v1146, %v1145
  %v1366 = vpack.c.b16 %v1148, %v1147
  %v1367 = vpack.c.b16 %v1150, %v1149
  %v1368 = vpack.c.b16 %v1152, %v1151
  %v1369 = vpack.c.b16 %v1154, %v1153
  %v1370 = vpack.c.b16 %v1156, %v1155
  %v1371 = vpack.c.b16 %v1158, %v1157
  %v1372 = vpack.c.b16 %v1160, %v1159
  %v1373 = vpack.c.b16 %v1162, %v1161
  %v1374 = vpack.c.b16 %v1164, %v1163
  %v1375 = vpack.c.b16 %v1166, %v1165
  %v1376 = vpack.c.b16 %v1168, %v1167
  %v1377 = vpack.c.b16 %v1170, %v1169
  %v1378 = vpack.c.b16 %v1172, %v1171
  %v1379 = vpack.c.b16 %v1174, %v1173
  %v1380 = vpack.c.b16 %v1176, %v1175
  %v1381 = vpack.c.b16 %v1178, %v1177
  %v1382 = vpack.c.b16 %v1180, %v1179
  %v1383 = vpack.c.b16 %v1182, %v1181
  %v1384 = vpack.c.b16 %v1184, %v1183
  %v1385 = vpack.c.b16 %v1186, %v1185
  %v1386 = vpack.c.b16 %v1188, %v1187
  %v1387 = vpack.c.b16 %v1190, %v1189
  %v1388 = vpack.c.b16 %v1192, %v1191
  %v1389 = vpack.c.b16 %v1194, %v1193
  %v1390 = vpack.c.b16 %v1196, %v1195
  %v1391 = vpack.c.b16 %v1198, %v1197
  %v1392 = vpack.c.b16 %v1200, %v1199
  %v1397 = vunpack.c.l.b16 %v15
  %v1398 = vunpack.c.l.b16 %v16
  %v1399 = vunpack.c.l.b16 %v17
  %v1400 = vunpack.c.l.b16 %v18
  %v1401 = vpack.c.b16 %v1398, %v1397
  %v1402 = vpack.c.b16 %v1400, %v1399
  %vm1405 = vcmask 261120
  %v1407 = vsel %vm1405, %v1201, 0
  %v1410 = vsel %vm1405, %v1202, 0
  %v1413 = vsel %vm1405, %v1203, 0
  %v1416 = vsel %vm1405, %v1204, 0
  %v1419 = vsel %vm1405, %v1205, 0
  %v1422 = vsel %vm1405, %v1206, 0
  %v1425 = vsel %vm1405, %v1207, 0
  %v1428 = vsel %vm1405, %v1208, 0
  %v1431 = vsel %vm1405, %v1209, 0
  %v1434 = vsel %vm1405, %v1210, 0
  %v1437 = vsel %vm1405, %v1211, 0
  %v1440 = vsel %vm1405, %v1212, 0
  %v1443 = vsel %vm1405, %v1213, 0
  %v1446 = vsel %vm1405, %v1214, 0
  %v1449 = vsel %vm1405, %v1215, 0
  %v1452 = vsel %vm1405, %v1216, 0
  %v1455 = vsel %vm1405, %v1217, 0
  %v1458 = vsel %vm1405, %v1218, 0
  %v1461 = vsel %vm1405, %v1219, 0
  %v1464 = vsel %vm1405, %v1220, 0
  %v1467 = vsel %vm1405, %v1221, 0
  %v1470 = vsel %vm1405, %v1222, 0
  %v1473 = vsel %vm1405, %v1223, 0
  %v1476 = vsel %vm1405, %v1224, 0
  %v1479 = vsel %vm1405, %v1225, 0
  %v1482 = vsel %vm1405, %v1226, 0
  %v1485 = vsel %vm1405, %v1227, 0
  %v1488 = vsel %vm1405, %v1228, 0
  %v1491 = vsel %vm1405, %v1229, 0
  %v1494 = vsel %vm1405, %v1230, 0
  %v1497 = vsel %vm1405, %v1231, 0
  %v1500 = vsel %vm1405, %v1232, 0
  %v1503 = vsel %vm1405, %v1233, 0
  %v1506 = vsel %vm1405, %v1234, 0
  %v1509 = vsel %vm1405, %v1235, 0
  %v1512 = vsel %vm1405, %v1236, 0
  %v1515 = vsel %vm1405, %v1237, 0
  %v1518 = vsel %vm1405, %v1238, 0
  %v1521 = vsel %vm1405, %v1239, 0
  %v1524 = vsel %vm1405, %v1240, 0
  %v1527 = vsel %vm1405, %v1241, 0
  %v1530 = vsel %vm1405, %v1242, 0
  %v1533 = vsel %vm1405, %v1243, 0
  %v1536 = vsel %vm1405, %v1244, 0
  %v1539 = vsel %vm1405, %v1245, 0
  %v1542 = vsel %vm1405, %v1246, 0
  %v1545 = vsel %vm1405, %v1247, 0
  %v1548 = vsel %vm1405, %v1248, 0
  %v1551 = vsel %vm1405, %v1249, 0
  %v1554 = vsel %vm1405, %v1250, 0
  %v1557 = vsel %vm1405, %v1251, 0
  %v1560 = vsel %vm1405, %v1252, 0
  %v1563 = vsel %vm1405, %v1253, 0
  %v1566 = vsel %vm1405, %v1254, 0
  %v1569 = vsel %vm1405, %v1255, 0
  %v1572 = vsel %vm1405, %v1256, 0
  %v1575 = vsel %vm1405, %v1257, 0
  %v1578 = vsel %vm1405, %v1258, 0
  %v1581 = vsel %vm1405, %v1259, 0
  %v1584 = vsel %vm1405, %v1260, 0
  %v1587 = vsel %vm1405, %v1261, 0
  %v1590 = vsel %vm1405, %v1262, 0
  %v1593 = vsel %vm1405, %v1263, 0
  %v1596 = vsel %vm1405, %v1264, 0
  %v1599 = vsel %vm1405, %v1265, 0
  %v1602 = vsel %vm1405, %v1266, 0
  %v1605 = vsel %vm1405, %v1267, 0
  %v1608 = vsel %vm1405, %v1268, 0
  %v1611 = vsel %vm1405, %v1269, 0
  %v1614 = vsel %vm1405, %v1270, 0
  %v1617 = vsel %vm1405, %v1271, 0
  %v1620 = vsel %vm1405, %v1272, 0
  %v1623 = vsel %vm1405, %v1273, 0
  %v1626 = vsel %vm1405, %v1274, 0
  %v1629 = vsel %vm1405, %v1275, 0
  %v1632 = vsel %vm1405, %v1276, 0
  %v1635 = vsel %vm1405, %v1277, 0
  %v1638 = vsel %vm1405, %v1278, 0
  %v1641 = vsel %vm1405, %v1279, 0
  %v1644 = vsel %vm1405, %v1280, 0
  %v1647 = vsel %vm1405, %v1281, 0
  %v1650 = vsel %vm1405, %v1282, 0
  %v1653 = vsel %vm1405, %v1283, 0
  %v1656 = vsel %vm1405, %v1284, 0
  %v1659 = vsel %vm1405, %v1285, 0
  %v1662 = vsel %vm1405, %v1286, 0
  %v1665 = vsel %vm1405, %v1287, 0
  %v1668 = vsel %vm1405, %v1288, 0
  %v1671 = vsel %vm1405, %v1289, 0
  %v1674 = vsel %vm1405, %v1290, 0
  %v1677 = vsel %vm1405, %v1291, 0
  %v1680 = vsel %vm1405, %v1292, 0
  %v1683 = vsel %vm1405, %v1293, 0
  %v1686 = vsel %vm1405, %v1294, 0
  %v1689 = vsel %vm1405, %v1295, 0
  %v1692 = vsel %vm1405, %v1296, 0
  %v1695 = vsel %vm1405, %v1297, 0
  %v1698 = vsel %vm1405, %v1298, 0
  %v1701 = vsel %vm1405, %v1299, 0
  %v1704 = vsel %vm1405, %v1300, 0
  %v1707 = vsel %vm1405, %v1301, 0
  %v1710 = vsel %vm1405, %v1302, 0
  %v1713 = vsel %vm1405, %v1303, 0
  %v1716 = vsel %vm1405, %v1304, 0
  %v1719 = vsel %vm1405, %v1305, 0
  %v1722 = vsel %vm1405, %v1306, 0
  %v1725 = vsel %vm1405, %v1307, 0
  %v1728 = vsel %vm1405, %v1308, 0
  %v1731 = vsel %vm1405, %v1309, 0
  %v1734 = vsel %vm1405, %v1310, 0
  %v1737 = vsel %vm1405, %v1311, 0
  %v1740 = vsel %vm1405, %v1312, 0
  %v1743 = vsel %vm1405, %v1313, 0
  %v1746 = vsel %vm1405, %v1314, 0
  %v1749 = vsel %vm1405, %v1315, 0
  %v1752 = vsel %vm1405, %v1316, 0
  %v1755 = vsel %vm1405, %v1317, 0
  %v1758 = vsel %vm1405, %v1318, 0
  %v1761 = vsel %vm1405, %v1319, 0
  %v1764 = vsel %vm1405, %v1320, 0
  %v1767 = vsel %vm1405, %v1321, 0
  %v1770 = vsel %vm1405, %v1322, 0
  %v1773 = vsel %vm1405, %v1323, 0
  %v1776 = vsel %vm1405, %v1324, 0
  %v1779 = vsel %vm1405, %v1325, 0
  %v1782 = vsel %vm1405, %v1326, 0
  %v1785 = vsel %vm1405, %v1327, 0
  %v1788 = vsel %vm1405, %v1328, 0
  %v1791 = vsel %vm1405, %v1329, 0
  %v1794 = vsel %vm1405, %v1330, 0
  %v1797 = vsel %vm1405, %v1331, 0
  %v1800 = vsel %vm1405, %v1332, 0
  %v1803 = vsel %vm1405, %v1333, 0
  %v1806 = vsel %vm1405, %v1334, 0
  %v1809 = vsel %vm1405, %v1335, 0
  %v1812 = vsel %vm1405, %v1336, 0
  %v1815 = vsel %vm1405, %v1337, 0
  %v1818 = vsel %vm1405, %v1338, 0
  %v1821 = vsel %vm1405, %v1339, 0
  %v1824 = vsel %vm1405, %v1340, 0
  %v1827 = vsel %vm1405, %v1341, 0
  %v1830 = vsel %vm1405, %v1342, 0
  %v1833 = vsel %vm1405, %v1343, 0
  %v1836 = vsel %vm1405, %v1344, 0
  %v1839 = vsel %vm1405, %v1345, 0
  %v1842 = vsel %vm1405, %v1346, 0
  %v1845 = vsel %vm1405, %v1347, 0
  %v1848 = vsel %vm1405, %v1348, 0
  %v1851 = vsel %vm1405, %v1349, 0
  %v1854 = vsel %vm1405, %v1350, 0
  %v1857 = vsel %vm1405, %v1351, 0
  %v1860 = vsel %vm1405, %v1352, 0
  %v1863 = vsel %vm1405, %v1353, 0
  %v1866 = vsel %vm1405, %v1354, 0
  %v1869 = vsel %vm1405, %v1355, 0
  %v1872 = vsel %vm1405, %v1356, 0
  %v1875 = vsel %vm1405, %v1357, 0
  %v1878 = vsel %vm1405, %v1358, 0
  %v1881 = vsel %vm1405, %v1359, 0
  %v1884 = vsel %vm1405, %v1360, 0
  %v1887 = vsel %vm1405, %v1361, 0
  %v1890 = vsel %vm1405, %v1362, 0
  %v1893 = vsel %vm1405, %v1363, 0
  %v1896 = vsel %vm1405, %v1364, 0
  %v1899 = vsel %vm1405, %v1365, 0
  %v1902 = vsel %vm1405, %v1366, 0
  %v1905 = vsel %vm1405, %v1367, 0
  %v1908 = vsel %vm1405, %v1368, 0
  %v1911 = vsel %vm1405, %v1369, 0
  %v1914 = vsel %vm1405, %v1370, 0
  %v1917 = vsel %vm1405, %v1371, 0
  %v1920 = vsel %vm1405, %v1372, 0
  %v1923 = vsel %vm1405, %v1373, 0
  %v1926 = vsel %vm1405, %v1374, 0
  %v1929 = vsel %vm1405, %v1375, 0
  %v1932 = vsel %vm1405, %v1376, 0
  %v1935 = vsel %vm1405, %v1377, 0
  %v1938 = vsel %vm1405, %v1378, 0
  %v1941 = vsel %vm1405, %v1379, 0
  %v1944 = vsel %vm1405, %v1380, 0
  %v1947 = vsel %vm1405, %v1381, 0
  %v1950 = vsel %vm1405, %v1382, 0
  %v1953 = vsel %vm1405, %v1383, 0
  %v1956 = vsel %vm1405, %v1384, 0
  %v1959 = vsel %vm1405, %v1385, 0
  %v1962 = vsel %vm1405, %v1386, 0
  %v1965 = vsel %vm1405, %v1387, 0
  %v1968 = vsel %vm1405, %v1388, 0
  %v1971 = vsel %vm1405, %v1389, 0
  %v1974 = vsel %vm1405, %v1390, 0
  %v1977 = vsel %vm1405, %v1391, 0
  %v1980 = vsel %vm1405, %v1392, 0
  %1982 = vmatprep.subr.bf16.mxu0 0
  %1983 = vmatpush1.bf16.msra.mxu0 %v1401
  %1984 = vmatprep.subr.bf16.mxu0 0
  %1985 = vmatpush1.bf16.msra.mxu0 %v1402
  %1986 = vmatprep.subr.bf16.mxu0 0
  %1987 = vmatpush1.bf16.msra.mxu0 0
  %1988 = vmatprep.subr.bf16.mxu0 0
  %1989 = vmatpush1.bf16.msra.mxu0 0
  %1990 = vmatprep.subr.bf16.mxu0 0
  %1991 = vmatpush1.bf16.msra.mxu0 0
  %1992 = vmatprep.subr.bf16.mxu0 0
  %1993 = vmatpush1.bf16.msra.mxu0 0
  %1994 = vmatprep.subr.bf16.mxu0 0
  %1995 = vmatpush1.bf16.msra.mxu0 0
  %1996 = vmatprep.subr.bf16.mxu0 0
  %1997 = vmatpush1.bf16.msra.mxu0 0
  %1998 = vmatprep.subr.bf16.mxu0 0
  %1999 = vmatpush1.bf16.msra.mxu0 0
  %2000 = vmatprep.subr.bf16.mxu0 0
  %2001 = vmatpush1.bf16.msra.mxu0 0
  %2002 = vmatprep.subr.bf16.mxu0 0
  %2003 = vmatpush1.bf16.msra.mxu0 0
  %2004 = vmatprep.subr.bf16.mxu0 0
  %2005 = vmatpush1.bf16.msra.mxu0 0
  %2006 = vmatprep.subr.bf16.mxu0 0
  %2007 = vmatpush1.bf16.msra.mxu0 0
  %2008 = vmatprep.subr.bf16.mxu0 0
  %2009 = vmatpush1.bf16.msra.mxu0 0
  %2010 = vmatprep.subr.bf16.mxu0 0
  %2011 = vmatpush1.bf16.msra.mxu0 0
  %2012 = vmatprep.subr.bf16.mxu0 0
  %2013 = vmatpush1.bf16.msra.mxu0 0
  %2014 = vmatprep.mubr.bf16.mxu0 0
  %2015 = vmatmul.mubr.bf16.gmra.mrb[0].mxu0 %v1407
  %v2016 = vpop.f32.mrb[0].mxu0
  %v2017 = vadd.f32 %v432, %v2016
  %v2018 = vpop.f32.mrb[0].mxu0
  %v2019 = vpop.f32.mrb[0].mxu0
  %v2020 = vadd.f32 %v432, %v2019
  %v2021 = vpop.f32.mrb[0].mxu0
  %2022 = vmatprep.mubr.bf16.mxu0 0
  %2023 = vmatmul.mubr.bf16.gmra.mrb[0].mxu0 %v1410
  %v2024 = vpop.f32.mrb[0].mxu0
  %v2025 = vadd.f32 %v432, %v2024
  %v2026 = vpop.f32.mrb[0].mxu0
  %v2027 = vpop.f32.mrb[0].mxu0
  %v2028 = vadd.f32 %v432, %v2027
  %v2029 = vpop.f32.mrb[0].mxu0
  %2030 = vmatprep.mubr.bf16.mxu0 0
  %2031 = vmatmul.mubr.bf16.gmra.mrb[0].mxu0 %v1413
  %v2032 = vpop.f32.mrb[0].mxu0
  %v2033 = vadd.f32 %v432, %v2032
  %v2034 = vpop.f32.mrb[0].mxu0
  %v2035 = vpop.f32.mrb[0].mxu0
  %v2036 = vadd.f32 %v432, %v2035
  %v2037 = vpop.f32.mrb[0].mxu0
  %2038 = vmatprep.mubr.bf16.mxu0 0
  %2039 = vmatmul.mubr.bf16.gmra.mrb[0].mxu0 %v1416
  %v2040 = vpop.f32.mrb[0].mxu0
  %v2041 = vadd.f32 %v432, %v2040
  %v2042 = vpop.f32.mrb[0].mxu0
  %v2043 = vpop.f32.mrb[0].mxu0
  %v2044 = vadd.f32 %v432, %v2043
  %v2045 = vpop.f32.mrb[0].mxu0
  %2046 = vmatprep.mubr.bf16.mxu0 0
  %2047 = vmatmul.mubr.bf16.gmra.mrb[0].mxu0 %v1419
  %v2048 = vpop.f32.mrb[0].mxu0
  %v2049 = vadd.f32 %v432, %v2048
  %v2050 = vpop.f32.mrb[0].mxu0
  %v2051 = vpop.f32.mrb[0].mxu0
  %v2052 = vadd.f32 %v432, %v2051
  %v2053 = vpop.f32.mrb[0].mxu0
  %2054 = vmatprep.mubr.bf16.mxu0 0
  %2055 = vmatmul.mubr.bf16.gmra.mrb[0].mxu0 %v1422
  %v2056 = vpop.f32.mrb[0].mxu0
  %v2057 = vadd.f32 %v432, %v2056
  %v2058 = vpop.f32.mrb[0].mxu0
  %v2059 = vpop.f32.mrb[0].mxu0
  %v2060 = vadd.f32 %v432, %v2059
  %v2061 = vpop.f32.mrb[0].mxu0
  %2062 = vmatprep.mubr.bf16.mxu0 0
  %2063 = vmatmul.mubr.bf16.gmra.mrb[0].mxu0 %v1425
  %v2064 = vpop.f32.mrb[0].mxu0
  %v2065 = vadd.f32 %v432, %v2064
  %v2066 = vpop.f32.mrb[0].mxu0
  %v2067 = vpop.f32.mrb[0].mxu0
  %v2068 = vadd.f32 %v432, %v2067
  %v2069 = vpop.f32.mrb[0].mxu0
  %2070 = vmatprep.mubr.bf16.mxu0 0
  %2071 = vmatmul.mubr.bf16.gmra.mrb[0].mxu0 %v1428
  %v2072 = vpop.f32.mrb[0].mxu0
  %v2073 = vadd.f32 %v432, %v2072
  %v2074 = vpop.f32.mrb[0].mxu0
  %v2075 = vpop.f32.mrb[0].mxu0
  %v2076 = vadd.f32 %v432, %v2075
  %v2077 = vpop.f32.mrb[0].mxu0
  %2078 = vmatprep.mubr.bf16.mxu0 0
  %2079 = vmatmul.mubr.bf16.gmra.mrb[0].mxu0 %v1431
  %v2080 = vpop.f32.mrb[0].mxu0
  %v2081 = vadd.f32 %v432, %v2080
  %v2082 = vpop.f32.mrb[0].mxu0
  %v2083 = vpop.f32.mrb[0].mxu0
  %v2084 = vadd.f32 %v432, %v2083
  %v2085 = vpop.f32.mrb[0].mxu0
  %2086 = vmatprep.mubr.bf16.mxu0 0
  %2087 = vmatmul.mubr.bf16.gmra.mrb[0].mxu0 %v1434
  %v2088 = vpop.f32.mrb[0].mxu0
  %v2089 = vadd.f32 %v432, %v2088
  %v2090 = vpop.f32.mrb[0].mxu0
  %v2091 = vpop.f32.mrb[0].mxu0
  %v2092 = vadd.f32 %v432, %v2091
  %v2093 = vpop.f32.mrb[0].mxu0
  %2094 = vmatprep.mubr.bf16.mxu0 0
  %2095 = vmatmul.mubr.bf16.gmra.mrb[0].mxu0 %v1437
  %v2096 = vpop.f32.mrb[0].mxu0
  %v2097 = vadd.f32 %v432, %v2096
  %v2098 = vpop.f32.mrb[0].mxu0
  %v2099 = vpop.f32.mrb[0].mxu0
  %v2100 = vadd.f32 %v432, %v2099
  %v2101 = vpop.f32.mrb[0].mxu0
  %2102 = vmatprep.mubr.bf16.mxu0 0
  %2103 = vmatmul.mubr.bf16.gmra.mrb[0].mxu0 %v1440
  %v2104 = vpop.f32.mrb[0].mxu0
  %v2105 = vadd.f32 %v432, %v2104
  %v2106 = vpop.f32.mrb[0].mxu0
  %v2107 = vpop.f32.mrb[0].mxu0
  %v2108 = vadd.f32 %v432, %v2107
  %v2109 = vpop.f32.mrb[0].mxu0
  %2110 = vmatprep.mubr.bf16.mxu0 0
  %2111 = vmatmul.mubr.bf16.gmra.mrb[0].mxu0 %v1443
  %v2112 = vpop.f32.mrb[0].mxu0
  %v2113 = vadd.f32 %v432, %v2112
  %v2114 = vpop.f32.mrb[0].mxu0
  %v2115 = vpop.f32.mrb[0].mxu0
  %v2116 = vadd.f32 %v432, %v2115
  %v2117 = vpop.f32.mrb[0].mxu0
  %2118 = vmatprep.mubr.bf16.mxu0 0
  %2119 = vmatmul.mubr.bf16.gmra.mrb[0].mxu0 %v1446
  %v2120 = vpop.f32.mrb[0].mxu0
  %v2121 = vadd.f32 %v432, %v2120
  %v2122 = vpop.f32.mrb[0].mxu0
  %v2123 = vpop.f32.mrb[0].mxu0
  %v2124 = vadd.f32 %v432, %v2123
  %v2125 = vpop.f32.mrb[0].mxu0
  %2126 = vmatprep.mubr.bf16.mxu0 0
  %2127 = vmatmul.mubr.bf16.gmra.mrb[0].mxu0 %v1449
  %v2128 = vpop.f32.mrb[0].mxu0
  %v2129 = vadd.f32 %v432, %v2128
  %v2130 = vpop.f32.mrb[0].mxu0
  %v2131 = vpop.f32.mrb[0].mxu0
  %v2132 = vadd.f32 %v432, %v2131
  %v2133 = vpop.f32.mrb[0].mxu0
  %2134 = vmatprep.mubr.bf16.mxu0 0
  %2135 = vmatmul.mubr.bf16.gmra.mrb[0].mxu0 %v1452
  %v2136 = vpop.f32.mrb[0].mxu0
  %v2137 = vadd.f32 %v432, %v2136
  %v2138 = vpop.f32.mrb[0].mxu0
  %v2139 = vpop.f32.mrb[0].mxu0
  %v2140 = vadd.f32 %v432, %v2139
  %v2141 = vpop.f32.mrb[0].mxu0
  %2142 = vmatprep.mubr.bf16.mxu0 0
  %2143 = vmatmul.mubr.bf16.gmra.mrb[0].mxu0 %v1455
  %v2144 = vpop.f32.mrb[0].mxu0
  %v2145 = vadd.f32 %v432, %v2144
  %v2146 = vpop.f32.mrb[0].mxu0
  %v2147 = vpop.f32.mrb[0].mxu0
  %v2148 = vadd.f32 %v432, %v2147
  %v2149 = vpop.f32.mrb[0].mxu0
  %2150 = vmatprep.mubr.bf16.mxu0 0
  %2151 = vmatmul.mubr.bf16.gmra.mrb[0].mxu0 %v1458
  %v2152 = vpop.f32.mrb[0].mxu0
  %v2153 = vadd.f32 %v432, %v2152
  %v2154 = vpop.f32.mrb[0].mxu0
  %v2155 = vpop.f32.mrb[0].mxu0
  %v2156 = vadd.f32 %v432, %v2155
  %v2157 = vpop.f32.mrb[0].mxu0
  %2158 = vmatprep.mubr.bf16.mxu0 0
  %2159 = vmatmul.mubr.bf16.gmra.mrb[0].mxu0 %v1461
  %v2160 = vpop.f32.mrb[0].mxu0
  %v2161 = vadd.f32 %v432, %v2160
  %v2162 = vpop.f32.mrb[0].mxu0
  %v2163 = vpop.f32.mrb[0].mxu0
  %v2164 = vadd.f32 %v432, %v2163
  %v2165 = vpop.f32.mrb[0].mxu0
  %2166 = vmatprep.mubr.bf16.mxu0 0
  %2167 = vmatmul.mubr.bf16.gmra.mrb[0].mxu0 %v1464
  %v2168 = vpop.f32.mrb[0].mxu0
  %v2169 = vadd.f32 %v432, %v2168
  %v2170 = vpop.f32.mrb[0].mxu0
  %v2171 = vpop.f32.mrb[0].mxu0
  %v2172 = vadd.f32 %v432, %v2171
  %v2173 = vpop.f32.mrb[0].mxu0
  %2174 = vmatprep.mubr.bf16.mxu0 0
  %2175 = vmatmul.mubr.bf16.gmra.mrb[0].mxu0 %v1467
  %v2176 = vpop.f32.mrb[0].mxu0
  %v2177 = vadd.f32 %v432, %v2176
  %v2178 = vpop.f32.mrb[0].mxu0
  %v2179 = vpop.f32.mrb[0].mxu0
  %v2180 = vadd.f32 %v432, %v2179
  %v2181 = vpop.f32.mrb[0].mxu0
  %2182 = vmatprep.mubr.bf16.mxu0 0
  %2183 = vmatmul.mubr.bf16.gmra.mrb[0].mxu0 %v1470
  %v2184 = vpop.f32.mrb[0].mxu0
  %v2185 = vadd.f32 %v432, %v2184
  %v2186 = vpop.f32.mrb[0].mxu0
  %v2187 = vpop.f32.mrb[0].mxu0
  %v2188 = vadd.f32 %v432, %v2187
  %v2189 = vpop.f32.mrb[0].mxu0
  %2190 = vmatprep.mubr.bf16.mxu0 0
  %2191 = vmatmul.mubr.bf16.gmra.mrb[0].mxu0 %v1473
  %v2192 = vpop.f32.mrb[0].mxu0
  %v2193 = vadd.f32 %v432, %v2192
  %v2194 = vpop.f32.mrb[0].mxu0
  %v2195 = vpop.f32.mrb[0].mxu0
  %v2196 = vadd.f32 %v432, %v2195
  %v2197 = vpop.f32.mrb[0].mxu0
  %2198 = vmatprep.mubr.bf16.mxu0 0
  %2199 = vmatmul.mubr.bf16.gmra.mrb[0].mxu0 %v1476
  %v2200 = vpop.f32.mrb[0].mxu0
  %v2201 = vadd.f32 %v432, %v2200
  %v2202 = vpop.f32.mrb[0].mxu0
  %v2203 = vpop.f32.mrb[0].mxu0
  %v2204 = vadd.f32 %v432, %v2203
  %v2205 = vpop.f32.mrb[0].mxu0
  %2206 = vmatprep.mubr.bf16.mxu0 0
  %2207 = vmatmul.mubr.bf16.gmra.mrb[0].mxu0 %v1479
  %v2208 = vpop.f32.mrb[0].mxu0
  %v2209 = vadd.f32 %v432, %v2208
  %v2210 = vpop.f32.mrb[0].mxu0
  %v2211 = vpop.f32.mrb[0].mxu0
  %v2212 = vadd.f32 %v432, %v2211
  %v2213 = vpop.f32.mrb[0].mxu0
  %2214 = vmatprep.mubr.bf16.mxu0 0
  %2215 = vmatmul.mubr.bf16.gmra.mrb[0].mxu0 %v1482
  %v2216 = vpop.f32.mrb[0].mxu0
  %v2217 = vadd.f32 %v432, %v2216
  %v2218 = vpop.f32.mrb[0].mxu0
  %v2219 = vpop.f32.mrb[0].mxu0
  %v2220 = vadd.f32 %v432, %v2219
  %v2221 = vpop.f32.mrb[0].mxu0
  %2222 = vmatprep.mubr.bf16.mxu0 0
  %2223 = vmatmul.mubr.bf16.gmra.mrb[0].mxu0 %v1485
  %v2224 = vpop.f32.mrb[0].mxu0
  %v2225 = vadd.f32 %v432, %v2224
  %v2226 = vpop.f32.mrb[0].mxu0
  %v2227 = vpop.f32.mrb[0].mxu0
  %v2228 = vadd.f32 %v432, %v2227
  %v2229 = vpop.f32.mrb[0].mxu0
  %2230 = vmatprep.mubr.bf16.mxu0 0
  %2231 = vmatmul.mubr.bf16.gmra.mrb[0].mxu0 %v1488
  %v2232 = vpop.f32.mrb[0].mxu0
  %v2233 = vadd.f32 %v432, %v2232
  %v2234 = vpop.f32.mrb[0].mxu0
  %v2235 = vpop.f32.mrb[0].mxu0
  %v2236 = vadd.f32 %v432, %v2235
  %v2237 = vpop.f32.mrb[0].mxu0
  %2238 = vmatprep.mubr.bf16.mxu0 0
  %2239 = vmatmul.mubr.bf16.gmra.mrb[0].mxu0 %v1491
  %v2240 = vpop.f32.mrb[0].mxu0
  %v2241 = vadd.f32 %v432, %v2240
  %v2242 = vpop.f32.mrb[0].mxu0
  %v2243 = vpop.f32.mrb[0].mxu0
  %v2244 = vadd.f32 %v432, %v2243
  %v2245 = vpop.f32.mrb[0].mxu0
  %2246 = vmatprep.mubr.bf16.mxu0 0
  %2247 = vmatmul.mubr.bf16.gmra.mrb[0].mxu0 %v1494
  %v2248 = vpop.f32.mrb[0].mxu0
  %v2249 = vadd.f32 %v432, %v2248
  %v2250 = vpop.f32.mrb[0].mxu0
  %v2251 = vpop.f32.mrb[0].mxu0
  %v2252 = vadd.f32 %v432, %v2251
  %v2253 = vpop.f32.mrb[0].mxu0
  %2254 = vmatprep.mubr.bf16.mxu0 0
  %2255 = vmatmul.mubr.bf16.gmra.mrb[0].mxu0 %v1497
  %v2256 = vpop.f32.mrb[0].mxu0
  %v2257 = vadd.f32 %v432, %v2256
  %v2258 = vpop.f32.mrb[0].mxu0
  %v2259 = vpop.f32.mrb[0].mxu0
  %v2260 = vadd.f32 %v432, %v2259
  %v2261 = vpop.f32.mrb[0].mxu0
  %2262 = vmatprep.mubr.bf16.mxu0 0
  %2263 = vmatmul.mubr.bf16.gmra.mrb[0].mxu0 %v1500
  %v2264 = vpop.f32.mrb[0].mxu0
  %v2265 = vadd.f32 %v432, %v2264
  %v2266 = vpop.f32.mrb[0].mxu0
  %v2267 = vpop.f32.mrb[0].mxu0
  %v2268 = vadd.f32 %v432, %v2267
  %v2269 = vpop.f32.mrb[0].mxu0
  %2270 = vmatprep.mubr.bf16.mxu0 0
  %2271 = vmatmul.mubr.bf16.gmra.mrb[0].mxu0 %v1503
  %v2272 = vpop.f32.mrb[0].mxu0
  %v2273 = vadd.f32 %v432, %v2272
  %v2274 = vpop.f32.mrb[0].mxu0
  %v2275 = vpop.f32.mrb[0].mxu0
  %v2276 = vadd.f32 %v432, %v2275
  %v2277 = vpop.f32.mrb[0].mxu0
  %2278 = vmatprep.mubr.bf16.mxu0 0
  %2279 = vmatmul.mubr.bf16.gmra.mrb[0].mxu0 %v1506
  %v2280 = vpop.f32.mrb[0].mxu0
  %v2281 = vadd.f32 %v432, %v2280
  %v2282 = vpop.f32.mrb[0].mxu0
  %v2283 = vpop.f32.mrb[0].mxu0
  %v2284 = vadd.f32 %v432, %v2283
  %v2285 = vpop.f32.mrb[0].mxu0
  %2286 = vmatprep.mubr.bf16.mxu0 0
  %2287 = vmatmul.mubr.bf16.gmra.mrb[0].mxu0 %v1509
  %v2288 = vpop.f32.mrb[0].mxu0
  %v2289 = vadd.f32 %v432, %v2288
  %v2290 = vpop.f32.mrb[0].mxu0
  %v2291 = vpop.f32.mrb[0].mxu0
  %v2292 = vadd.f32 %v432, %v2291
  %v2293 = vpop.f32.mrb[0].mxu0
  %2294 = vmatprep.mubr.bf16.mxu0 0
  %2295 = vmatmul.mubr.bf16.gmra.mrb[0].mxu0 %v1512
  %v2296 = vpop.f32.mrb[0].mxu0
  %v2297 = vadd.f32 %v432, %v2296
  %v2298 = vpop.f32.mrb[0].mxu0
  %v2299 = vpop.f32.mrb[0].mxu0
  %v2300 = vadd.f32 %v432, %v2299
  %v2301 = vpop.f32.mrb[0].mxu0
  %2302 = vmatprep.mubr.bf16.mxu0 0
  %2303 = vmatmul.mubr.bf16.gmra.mrb[0].mxu0 %v1515
  %v2304 = vpop.f32.mrb[0].mxu0
  %v2305 = vadd.f32 %v432, %v2304
  %v2306 = vpop.f32.mrb[0].mxu0
  %v2307 = vpop.f32.mrb[0].mxu0
  %v2308 = vadd.f32 %v432, %v2307
  %v2309 = vpop.f32.mrb[0].mxu0
  %2310 = vmatprep.mubr.bf16.mxu0 0
  %2311 = vmatmul.mubr.bf16.gmra.mrb[0].mxu0 %v1518
  %v2312 = vpop.f32.mrb[0].mxu0
  %v2313 = vadd.f32 %v432, %v2312
  %v2314 = vpop.f32.mrb[0].mxu0
  %v2315 = vpop.f32.mrb[0].mxu0
  %v2316 = vadd.f32 %v432, %v2315
  %v2317 = vpop.f32.mrb[0].mxu0
  %2318 = vmatprep.mubr.bf16.mxu0 0
  %2319 = vmatmul.mubr.bf16.gmra.mrb[0].mxu0 %v1521
  %v2320 = vpop.f32.mrb[0].mxu0
  %v2321 = vadd.f32 %v432, %v2320
  %v2322 = vpop.f32.mrb[0].mxu0
  %v2323 = vpop.f32.mrb[0].mxu0
  %v2324 = vadd.f32 %v432, %v2323
  %v2325 = vpop.f32.mrb[0].mxu0
  %2326 = vmatprep.mubr.bf16.mxu0 0
  %2327 = vmatmul.mubr.bf16.gmra.mrb[0].mxu0 %v1524
  %v2328 = vpop.f32.mrb[0].mxu0
  %v2329 = vadd.f32 %v432, %v2328
  %v2330 = vpop.f32.mrb[0].mxu0
  %v2331 = vpop.f32.mrb[0].mxu0
  %v2332 = vadd.f32 %v432, %v2331
  %v2333 = vpop.f32.mrb[0].mxu0
  %2334 = vmatprep.mubr.bf16.mxu0 0
  %2335 = vmatmul.mubr.bf16.gmra.mrb[0].mxu0 %v1527
  %v2336 = vpop.f32.mrb[0].mxu0
  %v2337 = vadd.f32 %v432, %v2336
  %v2338 = vpop.f32.mrb[0].mxu0
  %v2339 = vpop.f32.mrb[0].mxu0
  %v2340 = vadd.f32 %v432, %v2339
  %v2341 = vpop.f32.mrb[0].mxu0
  %2342 = vmatprep.mubr.bf16.mxu0 0
  %2343 = vmatmul.mubr.bf16.gmra.mrb[0].mxu0 %v1530
  %v2344 = vpop.f32.mrb[0].mxu0
  %v2345 = vadd.f32 %v432, %v2344
  %v2346 = vpop.f32.mrb[0].mxu0
  %v2347 = vpop.f32.mrb[0].mxu0
  %v2348 = vadd.f32 %v432, %v2347
  %v2349 = vpop.f32.mrb[0].mxu0
  %2350 = vmatprep.mubr.bf16.mxu0 0
  %2351 = vmatmul.mubr.bf16.gmra.mrb[0].mxu0 %v1533
  %v2352 = vpop.f32.mrb[0].mxu0
  %v2353 = vadd.f32 %v432, %v2352
  %v2354 = vpop.f32.mrb[0].mxu0
  %v2355 = vpop.f32.mrb[0].mxu0
  %v2356 = vadd.f32 %v432, %v2355
  %v2357 = vpop.f32.mrb[0].mxu0
  %2358 = vmatprep.mubr.bf16.mxu0 0
  %2359 = vmatmul.mubr.bf16.gmra.mrb[0].mxu0 %v1536
  %v2360 = vpop.f32.mrb[0].mxu0
  %v2361 = vadd.f32 %v432, %v2360
  %v2362 = vpop.f32.mrb[0].mxu0
  %v2363 = vpop.f32.mrb[0].mxu0
  %v2364 = vadd.f32 %v432, %v2363
  %v2365 = vpop.f32.mrb[0].mxu0
  %2366 = vmatprep.mubr.bf16.mxu0 0
  %2367 = vmatmul.mubr.bf16.gmra.mrb[0].mxu0 %v1539
  %v2368 = vpop.f32.mrb[0].mxu0
  %v2369 = vadd.f32 %v432, %v2368
  %v2370 = vpop.f32.mrb[0].mxu0
  %v2371 = vpop.f32.mrb[0].mxu0
  %v2372 = vadd.f32 %v432, %v2371
  %v2373 = vpop.f32.mrb[0].mxu0
  %2374 = vmatprep.mubr.bf16.mxu0 0
  %2375 = vmatmul.mubr.bf16.gmra.mrb[0].mxu0 %v1542
  %v2376 = vpop.f32.mrb[0].mxu0
  %v2377 = vadd.f32 %v432, %v2376
  %v2378 = vpop.f32.mrb[0].mxu0
  %v2379 = vpop.f32.mrb[0].mxu0
  %v2380 = vadd.f32 %v432, %v2379
  %v2381 = vpop.f32.mrb[0].mxu0
  %2382 = vmatprep.mubr.bf16.mxu0 0
  %2383 = vmatmul.mubr.bf16.gmra.mrb[0].mxu0 %v1545
  %v2384 = vpop.f32.mrb[0].mxu0
  %v2385 = vadd.f32 %v432, %v2384
  %v2386 = vpop.f32.mrb[0].mxu0
  %v2387 = vpop.f32.mrb[0].mxu0
  %v2388 = vadd.f32 %v432, %v2387
  %v2389 = vpop.f32.mrb[0].mxu0
  %2390 = vmatprep.mubr.bf16.mxu0 0
  %2391 = vmatmul.mubr.bf16.gmra.mrb[0].mxu0 %v1548
  %v2392 = vpop.f32.mrb[0].mxu0
  %v2393 = vadd.f32 %v432, %v2392
  %v2394 = vpop.f32.mrb[0].mxu0
  %v2395 = vpop.f32.mrb[0].mxu0
  %v2396 = vadd.f32 %v432, %v2395
  %v2397 = vpop.f32.mrb[0].mxu0
  %2398 = vmatprep.mubr.bf16.mxu0 0
  %2399 = vmatmul.mubr.bf16.gmra.mrb[0].mxu0 %v1551
  %v2400 = vpop.f32.mrb[0].mxu0
  %v2401 = vadd.f32 %v432, %v2400
  %v2402 = vpop.f32.mrb[0].mxu0
  %v2403 = vpop.f32.mrb[0].mxu0
  %v2404 = vadd.f32 %v432, %v2403
  %v2405 = vpop.f32.mrb[0].mxu0
  %2406 = vmatprep.mubr.bf16.mxu0 0
  %2407 = vmatmul.mubr.bf16.gmra.mrb[0].mxu0 %v1554
  %v2408 = vpop.f32.mrb[0].mxu0
  %v2409 = vadd.f32 %v432, %v2408
  %v2410 = vpop.f32.mrb[0].mxu0
  %v2411 = vpop.f32.mrb[0].mxu0
  %v2412 = vadd.f32 %v432, %v2411
  %v2413 = vpop.f32.mrb[0].mxu0
  %2414 = vmatprep.mubr.bf16.mxu0 0
  %2415 = vmatmul.mubr.bf16.gmra.mrb[0].mxu0 %v1557
  %v2416 = vpop.f32.mrb[0].mxu0
  %v2417 = vadd.f32 %v432, %v2416
  %v2418 = vpop.f32.mrb[0].mxu0
  %v2419 = vpop.f32.mrb[0].mxu0
  %v2420 = vadd.f32 %v432, %v2419
  %v2421 = vpop.f32.mrb[0].mxu0
  %2422 = vmatprep.mubr.bf16.mxu0 0
  %2423 = vmatmul.mubr.bf16.gmra.mrb[0].mxu0 %v1560
  %v2424 = vpop.f32.mrb[0].mxu0
  %v2425 = vadd.f32 %v432, %v2424
  %v2426 = vpop.f32.mrb[0].mxu0
  %v2427 = vpop.f32.mrb[0].mxu0
  %v2428 = vadd.f32 %v432, %v2427
  %v2429 = vpop.f32.mrb[0].mxu0
  %2430 = vmatprep.mubr.bf16.mxu0 0
  %2431 = vmatmul.mubr.bf16.gmra.mrb[0].mxu0 %v1563
  %v2432 = vpop.f32.mrb[0].mxu0
  %v2433 = vadd.f32 %v432, %v2432
  %v2434 = vpop.f32.mrb[0].mxu0
  %v2435 = vpop.f32.mrb[0].mxu0
  %v2436 = vadd.f32 %v432, %v2435
  %v2437 = vpop.f32.mrb[0].mxu0
  %2438 = vmatprep.mubr.bf16.mxu0 0
  %2439 = vmatmul.mubr.bf16.gmra.mrb[0].mxu0 %v1566
  %v2440 = vpop.f32.mrb[0].mxu0
  %v2441 = vadd.f32 %v432, %v2440
  %v2442 = vpop.f32.mrb[0].mxu0
  %v2443 = vpop.f32.mrb[0].mxu0
  %v2444 = vadd.f32 %v432, %v2443
  %v2445 = vpop.f32.mrb[0].mxu0
  %2446 = vmatprep.mubr.bf16.mxu0 0
  %2447 = vmatmul.mubr.bf16.gmra.mrb[0].mxu0 %v1569
  %v2448 = vpop.f32.mrb[0].mxu0
  %v2449 = vadd.f32 %v432, %v2448
  %v2450 = vpop.f32.mrb[0].mxu0
  %v2451 = vpop.f32.mrb[0].mxu0
  %v2452 = vadd.f32 %v432, %v2451
  %v2453 = vpop.f32.mrb[0].mxu0
  %2454 = vmatprep.mubr.bf16.mxu0 0
  %2455 = vmatmul.mubr.bf16.gmra.mrb[0].mxu0 %v1572
  %v2456 = vpop.f32.mrb[0].mxu0
  %v2457 = vadd.f32 %v432, %v2456
  %v2458 = vpop.f32.mrb[0].mxu0
  %v2459 = vpop.f32.mrb[0].mxu0
  %v2460 = vadd.f32 %v432, %v2459
  %v2461 = vpop.f32.mrb[0].mxu0
  %2462 = vmatprep.mubr.bf16.mxu0 0
  %2463 = vmatmul.mubr.bf16.gmra.mrb[0].mxu0 %v1575
  %v2464 = vpop.f32.mrb[0].mxu0
  %v2465 = vadd.f32 %v432, %v2464
  %v2466 = vpop.f32.mrb[0].mxu0
  %v2467 = vpop.f32.mrb[0].mxu0
  %v2468 = vadd.f32 %v432, %v2467
  %v2469 = vpop.f32.mrb[0].mxu0
  %2470 = vmatprep.mubr.bf16.mxu0 0
  %2471 = vmatmul.mubr.bf16.gmra.mrb[0].mxu0 %v1578
  %v2472 = vpop.f32.mrb[0].mxu0
  %v2473 = vadd.f32 %v432, %v2472
  %v2474 = vpop.f32.mrb[0].mxu0
  %v2475 = vpop.f32.mrb[0].mxu0
  %v2476 = vadd.f32 %v432, %v2475
  %v2477 = vpop.f32.mrb[0].mxu0
  %2478 = vmatprep.mubr.bf16.mxu0 0
  %2479 = vmatmul.mubr.bf16.gmra.mrb[0].mxu0 %v1581
  %v2480 = vpop.f32.mrb[0].mxu0
  %v2481 = vadd.f32 %v432, %v2480
  %v2482 = vpop.f32.mrb[0].mxu0
  %v2483 = vpop.f32.mrb[0].mxu0
  %v2484 = vadd.f32 %v432, %v2483
  %v2485 = vpop.f32.mrb[0].mxu0
  %2486 = vmatprep.mubr.bf16.mxu0 0
  %2487 = vmatmul.mubr.bf16.gmra.mrb[0].mxu0 %v1584
  %v2488 = vpop.f32.mrb[0].mxu0
  %v2489 = vadd.f32 %v432, %v2488
  %v2490 = vpop.f32.mrb[0].mxu0
  %v2491 = vpop.f32.mrb[0].mxu0
  %v2492 = vadd.f32 %v432, %v2491
  %v2493 = vpop.f32.mrb[0].mxu0
  %2494 = vmatprep.mubr.bf16.mxu0 0
  %2495 = vmatmul.mubr.bf16.gmra.mrb[0].mxu0 %v1587
  %v2496 = vpop.f32.mrb[0].mxu0
  %v2497 = vadd.f32 %v432, %v2496
  %v2498 = vpop.f32.mrb[0].mxu0
  %v2499 = vpop.f32.mrb[0].mxu0
  %v2500 = vadd.f32 %v432, %v2499
  %v2501 = vpop.f32.mrb[0].mxu0
  %2502 = vmatprep.mubr.bf16.mxu0 0
  %2503 = vmatmul.mubr.bf16.gmra.mrb[0].mxu0 %v1590
  %v2504 = vpop.f32.mrb[0].mxu0
  %v2505 = vadd.f32 %v432, %v2504
  %v2506 = vpop.f32.mrb[0].mxu0
  %v2507 = vpop.f32.mrb[0].mxu0
  %v2508 = vadd.f32 %v432, %v2507
  %v2509 = vpop.f32.mrb[0].mxu0
  %2510 = vmatprep.mubr.bf16.mxu0 0
  %2511 = vmatmul.mubr.bf16.gmra.mrb[0].mxu0 %v1593
  %v2512 = vpop.f32.mrb[0].mxu0
  %v2513 = vadd.f32 %v432, %v2512
  %v2514 = vpop.f32.mrb[0].mxu0
  %v2515 = vpop.f32.mrb[0].mxu0
  %v2516 = vadd.f32 %v432, %v2515
  %v2517 = vpop.f32.mrb[0].mxu0
  %2518 = vmatprep.mubr.bf16.mxu0 0
  %2519 = vmatmul.mubr.bf16.gmra.mrb[0].mxu0 %v1596
  %v2520 = vpop.f32.mrb[0].mxu0
  %v2521 = vadd.f32 %v432, %v2520
  %v2522 = vpop.f32.mrb[0].mxu0
  %v2523 = vpop.f32.mrb[0].mxu0
  %v2524 = vadd.f32 %v432, %v2523
  %v2525 = vpop.f32.mrb[0].mxu0
  %2526 = vmatprep.mubr.bf16.mxu0 0
  %2527 = vmatmul.mubr.bf16.gmra.mrb[0].mxu0 %v1599
  %v2528 = vpop.f32.mrb[0].mxu0
  %v2529 = vadd.f32 %v432, %v2528
  %v2530 = vpop.f32.mrb[0].mxu0
  %v2531 = vpop.f32.mrb[0].mxu0
  %v2532 = vadd.f32 %v432, %v2531
  %v2533 = vpop.f32.mrb[0].mxu0
  %2534 = vmatprep.mubr.bf16.mxu0 0
  %2535 = vmatmul.mubr.bf16.gmra.mrb[0].mxu0 %v1602
  %v2536 = vpop.f32.mrb[0].mxu0
  %v2537 = vadd.f32 %v432, %v2536
  %v2538 = vpop.f32.mrb[0].mxu0
  %v2539 = vpop.f32.mrb[0].mxu0
  %v2540 = vadd.f32 %v432, %v2539
  %v2541 = vpop.f32.mrb[0].mxu0
  %2542 = vmatprep.mubr.bf16.mxu0 0
  %2543 = vmatmul.mubr.bf16.gmra.mrb[0].mxu0 %v1605
  %v2544 = vpop.f32.mrb[0].mxu0
  %v2545 = vadd.f32 %v432, %v2544
  %v2546 = vpop.f32.mrb[0].mxu0
  %v2547 = vpop.f32.mrb[0].mxu0
  %v2548 = vadd.f32 %v432, %v2547
  %v2549 = vpop.f32.mrb[0].mxu0
  %2550 = vmatprep.mubr.bf16.mxu0 0
  %2551 = vmatmul.mubr.bf16.gmra.mrb[0].mxu0 %v1608
  %v2552 = vpop.f32.mrb[0].mxu0
  %v2553 = vadd.f32 %v432, %v2552
  %v2554 = vpop.f32.mrb[0].mxu0
  %v2555 = vpop.f32.mrb[0].mxu0
  %v2556 = vadd.f32 %v432, %v2555
  %v2557 = vpop.f32.mrb[0].mxu0
  %2558 = vmatprep.mubr.bf16.mxu0 0
  %2559 = vmatmul.mubr.bf16.gmra.mrb[0].mxu0 %v1611
  %v2560 = vpop.f32.mrb[0].mxu0
  %v2561 = vadd.f32 %v432, %v2560
  %v2562 = vpop.f32.mrb[0].mxu0
  %v2563 = vpop.f32.mrb[0].mxu0
  %v2564 = vadd.f32 %v432, %v2563
  %v2565 = vpop.f32.mrb[0].mxu0
  %2566 = vmatprep.mubr.bf16.mxu0 0
  %2567 = vmatmul.mubr.bf16.gmra.mrb[0].mxu0 %v1614
  %v2568 = vpop.f32.mrb[0].mxu0
  %v2569 = vadd.f32 %v432, %v2568
  %v2570 = vpop.f32.mrb[0].mxu0
  %v2571 = vpop.f32.mrb[0].mxu0
  %v2572 = vadd.f32 %v432, %v2571
  %v2573 = vpop.f32.mrb[0].mxu0
  %2574 = vmatprep.mubr.bf16.mxu0 0
  %2575 = vmatmul.mubr.bf16.gmra.mrb[0].mxu0 %v1617
  %v2576 = vpop.f32.mrb[0].mxu0
  %v2577 = vadd.f32 %v432, %v2576
  %v2578 = vpop.f32.mrb[0].mxu0
  %v2579 = vpop.f32.mrb[0].mxu0
  %v2580 = vadd.f32 %v432, %v2579
  %v2581 = vpop.f32.mrb[0].mxu0
  %2582 = vmatprep.mubr.bf16.mxu0 0
  %2583 = vmatmul.mubr.bf16.gmra.mrb[0].mxu0 %v1620
  %v2584 = vpop.f32.mrb[0].mxu0
  %v2585 = vadd.f32 %v432, %v2584
  %v2586 = vpop.f32.mrb[0].mxu0
  %v2587 = vpop.f32.mrb[0].mxu0
  %v2588 = vadd.f32 %v432, %v2587
  %v2589 = vpop.f32.mrb[0].mxu0
  %2590 = vmatprep.mubr.bf16.mxu0 0
  %2591 = vmatmul.mubr.bf16.gmra.mrb[0].mxu0 %v1623
  %v2592 = vpop.f32.mrb[0].mxu0
  %v2593 = vadd.f32 %v432, %v2592
  %v2594 = vpop.f32.mrb[0].mxu0
  %v2595 = vpop.f32.mrb[0].mxu0
  %v2596 = vadd.f32 %v432, %v2595
  %v2597 = vpop.f32.mrb[0].mxu0
  %2598 = vmatprep.mubr.bf16.mxu0 0
  %2599 = vmatmul.mubr.bf16.gmra.mrb[0].mxu0 %v1626
  %v2600 = vpop.f32.mrb[0].mxu0
  %v2601 = vadd.f32 %v432, %v2600
  %v2602 = vpop.f32.mrb[0].mxu0
  %v2603 = vpop.f32.mrb[0].mxu0
  %v2604 = vadd.f32 %v432, %v2603
  %v2605 = vpop.f32.mrb[0].mxu0
  %2606 = vmatprep.mubr.bf16.mxu0 0
  %2607 = vmatmul.mubr.bf16.gmra.mrb[0].mxu0 %v1629
  %v2608 = vpop.f32.mrb[0].mxu0
  %v2609 = vadd.f32 %v432, %v2608
  %v2610 = vpop.f32.mrb[0].mxu0
  %v2611 = vpop.f32.mrb[0].mxu0
  %v2612 = vadd.f32 %v432, %v2611
  %v2613 = vpop.f32.mrb[0].mxu0
  %2614 = vmatprep.mubr.bf16.mxu0 0
  %2615 = vmatmul.mubr.bf16.gmra.mrb[0].mxu0 %v1632
  %v2616 = vpop.f32.mrb[0].mxu0
  %v2617 = vadd.f32 %v432, %v2616
  %v2618 = vpop.f32.mrb[0].mxu0
  %v2619 = vpop.f32.mrb[0].mxu0
  %v2620 = vadd.f32 %v432, %v2619
  %v2621 = vpop.f32.mrb[0].mxu0
  %2622 = vmatprep.mubr.bf16.mxu0 0
  %2623 = vmatmul.mubr.bf16.gmra.mrb[0].mxu0 %v1635
  %v2624 = vpop.f32.mrb[0].mxu0
  %v2625 = vadd.f32 %v432, %v2624
  %v2626 = vpop.f32.mrb[0].mxu0
  %v2627 = vpop.f32.mrb[0].mxu0
  %v2628 = vadd.f32 %v432, %v2627
  %v2629 = vpop.f32.mrb[0].mxu0
  %2630 = vmatprep.mubr.bf16.mxu0 0
  %2631 = vmatmul.mubr.bf16.gmra.mrb[0].mxu0 %v1638
  %v2632 = vpop.f32.mrb[0].mxu0
  %v2633 = vadd.f32 %v432, %v2632
  %v2634 = vpop.f32.mrb[0].mxu0
  %v2635 = vpop.f32.mrb[0].mxu0
  %v2636 = vadd.f32 %v432, %v2635
  %v2637 = vpop.f32.mrb[0].mxu0
  %2638 = vmatprep.mubr.bf16.mxu0 0
  %2639 = vmatmul.mubr.bf16.gmra.mrb[0].mxu0 %v1641
  %v2640 = vpop.f32.mrb[0].mxu0
  %v2641 = vadd.f32 %v432, %v2640
  %v2642 = vpop.f32.mrb[0].mxu0
  %v2643 = vpop.f32.mrb[0].mxu0
  %v2644 = vadd.f32 %v432, %v2643
  %v2645 = vpop.f32.mrb[0].mxu0
  %2646 = vmatprep.mubr.bf16.mxu0 0
  %2647 = vmatmul.mubr.bf16.gmra.mrb[0].mxu0 %v1644
  %v2648 = vpop.f32.mrb[0].mxu0
  %v2649 = vadd.f32 %v432, %v2648
  %v2650 = vpop.f32.mrb[0].mxu0
  %v2651 = vpop.f32.mrb[0].mxu0
  %v2652 = vadd.f32 %v432, %v2651
  %v2653 = vpop.f32.mrb[0].mxu0
  %2654 = vmatprep.mubr.bf16.mxu0 0
  %2655 = vmatmul.mubr.bf16.gmra.mrb[0].mxu0 %v1647
  %v2656 = vpop.f32.mrb[0].mxu0
  %v2657 = vadd.f32 %v432, %v2656
  %v2658 = vpop.f32.mrb[0].mxu0
  %v2659 = vpop.f32.mrb[0].mxu0
  %v2660 = vadd.f32 %v432, %v2659
  %v2661 = vpop.f32.mrb[0].mxu0
  %2662 = vmatprep.mubr.bf16.mxu0 0
  %2663 = vmatmul.mubr.bf16.gmra.mrb[0].mxu0 %v1650
  %v2664 = vpop.f32.mrb[0].mxu0
  %v2665 = vadd.f32 %v432, %v2664
  %v2666 = vpop.f32.mrb[0].mxu0
  %v2667 = vpop.f32.mrb[0].mxu0
  %v2668 = vadd.f32 %v432, %v2667
  %v2669 = vpop.f32.mrb[0].mxu0
  %2670 = vmatprep.mubr.bf16.mxu0 0
  %2671 = vmatmul.mubr.bf16.gmra.mrb[0].mxu0 %v1653
  %v2672 = vpop.f32.mrb[0].mxu0
  %v2673 = vadd.f32 %v432, %v2672
  %v2674 = vpop.f32.mrb[0].mxu0
  %v2675 = vpop.f32.mrb[0].mxu0
  %v2676 = vadd.f32 %v432, %v2675
  %v2677 = vpop.f32.mrb[0].mxu0
  %2678 = vmatprep.mubr.bf16.mxu0 0
  %2679 = vmatmul.mubr.bf16.gmra.mrb[0].mxu0 %v1656
  %v2680 = vpop.f32.mrb[0].mxu0
  %v2681 = vadd.f32 %v432, %v2680
  %v2682 = vpop.f32.mrb[0].mxu0
  %v2683 = vpop.f32.mrb[0].mxu0
  %v2684 = vadd.f32 %v432, %v2683
  %v2685 = vpop.f32.mrb[0].mxu0
  %2686 = vmatprep.mubr.bf16.mxu0 0
  %2687 = vmatmul.mubr.bf16.gmra.mrb[0].mxu0 %v1659
  %v2688 = vpop.f32.mrb[0].mxu0
  %v2689 = vadd.f32 %v432, %v2688
  %v2690 = vpop.f32.mrb[0].mxu0
  %v2691 = vpop.f32.mrb[0].mxu0
  %v2692 = vadd.f32 %v432, %v2691
  %v2693 = vpop.f32.mrb[0].mxu0
  %2694 = vmatprep.mubr.bf16.mxu0 0
  %2695 = vmatmul.mubr.bf16.gmra.mrb[0].mxu0 %v1662
  %v2696 = vpop.f32.mrb[0].mxu0
  %v2697 = vadd.f32 %v432, %v2696
  %v2698 = vpop.f32.mrb[0].mxu0
  %v2699 = vpop.f32.mrb[0].mxu0
  %v2700 = vadd.f32 %v432, %v2699
  %v2701 = vpop.f32.mrb[0].mxu0
  %2702 = vmatprep.mubr.bf16.mxu0 0
  %2703 = vmatmul.mubr.bf16.gmra.mrb[0].mxu0 %v1665
  %v2704 = vpop.f32.mrb[0].mxu0
  %v2705 = vadd.f32 %v432, %v2704
  %v2706 = vpop.f32.mrb[0].mxu0
  %v2707 = vpop.f32.mrb[0].mxu0
  %v2708 = vadd.f32 %v432, %v2707
  %v2709 = vpop.f32.mrb[0].mxu0
  %2710 = vmatprep.mubr.bf16.mxu0 0
  %2711 = vmatmul.mubr.bf16.gmra.mrb[0].mxu0 %v1668
  %v2712 = vpop.f32.mrb[0].mxu0
  %v2713 = vadd.f32 %v432, %v2712
  %v2714 = vpop.f32.mrb[0].mxu0
  %v2715 = vpop.f32.mrb[0].mxu0
  %v2716 = vadd.f32 %v432, %v2715
  %v2717 = vpop.f32.mrb[0].mxu0
  %2718 = vmatprep.mubr.bf16.mxu0 0
  %2719 = vmatmul.mubr.bf16.gmra.mrb[0].mxu0 %v1671
  %v2720 = vpop.f32.mrb[0].mxu0
  %v2721 = vadd.f32 %v432, %v2720
  %v2722 = vpop.f32.mrb[0].mxu0
  %v2723 = vpop.f32.mrb[0].mxu0
  %v2724 = vadd.f32 %v432, %v2723
  %v2725 = vpop.f32.mrb[0].mxu0
  %2726 = vmatprep.mubr.bf16.mxu0 0
  %2727 = vmatmul.mubr.bf16.gmra.mrb[0].mxu0 %v1674
  %v2728 = vpop.f32.mrb[0].mxu0
  %v2729 = vadd.f32 %v432, %v2728
  %v2730 = vpop.f32.mrb[0].mxu0
  %v2731 = vpop.f32.mrb[0].mxu0
  %v2732 = vadd.f32 %v432, %v2731
  %v2733 = vpop.f32.mrb[0].mxu0
  %2734 = vmatprep.mubr.bf16.mxu0 0
  %2735 = vmatmul.mubr.bf16.gmra.mrb[0].mxu0 %v1677
  %v2736 = vpop.f32.mrb[0].mxu0
  %v2737 = vadd.f32 %v432, %v2736
  %v2738 = vpop.f32.mrb[0].mxu0
  %v2739 = vpop.f32.mrb[0].mxu0
  %v2740 = vadd.f32 %v432, %v2739
  %v2741 = vpop.f32.mrb[0].mxu0
  %2742 = vmatprep.mubr.bf16.mxu0 0
  %2743 = vmatmul.mubr.bf16.gmra.mrb[0].mxu0 %v1680
  %v2744 = vpop.f32.mrb[0].mxu0
  %v2745 = vadd.f32 %v432, %v2744
  %v2746 = vpop.f32.mrb[0].mxu0
  %v2747 = vpop.f32.mrb[0].mxu0
  %v2748 = vadd.f32 %v432, %v2747
  %v2749 = vpop.f32.mrb[0].mxu0
  %2750 = vmatprep.mubr.bf16.mxu0 0
  %2751 = vmatmul.mubr.bf16.gmra.mrb[0].mxu0 %v1683
  %v2752 = vpop.f32.mrb[0].mxu0
  %v2753 = vadd.f32 %v432, %v2752
  %v2754 = vpop.f32.mrb[0].mxu0
  %v2755 = vpop.f32.mrb[0].mxu0
  %v2756 = vadd.f32 %v432, %v2755
  %v2757 = vpop.f32.mrb[0].mxu0
  %2758 = vmatprep.mubr.bf16.mxu0 0
  %2759 = vmatmul.mubr.bf16.gmra.mrb[0].mxu0 %v1686
  %v2760 = vpop.f32.mrb[0].mxu0
  %v2761 = vadd.f32 %v432, %v2760
  %v2762 = vpop.f32.mrb[0].mxu0
  %v2763 = vpop.f32.mrb[0].mxu0
  %v2764 = vadd.f32 %v432, %v2763
  %v2765 = vpop.f32.mrb[0].mxu0
  %2766 = vmatprep.mubr.bf16.mxu0 0
  %2767 = vmatmul.mubr.bf16.gmra.mrb[0].mxu0 %v1689
  %v2768 = vpop.f32.mrb[0].mxu0
  %v2769 = vadd.f32 %v432, %v2768
  %v2770 = vpop.f32.mrb[0].mxu0
  %v2771 = vpop.f32.mrb[0].mxu0
  %v2772 = vadd.f32 %v432, %v2771
  %v2773 = vpop.f32.mrb[0].mxu0
  %2774 = vmatprep.mubr.bf16.mxu0 0
  %2775 = vmatmul.mubr.bf16.gmra.mrb[0].mxu0 %v1692
  %v2776 = vpop.f32.mrb[0].mxu0
  %v2777 = vadd.f32 %v432, %v2776
  %v2778 = vpop.f32.mrb[0].mxu0
  %v2779 = vpop.f32.mrb[0].mxu0
  %v2780 = vadd.f32 %v432, %v2779
  %v2781 = vpop.f32.mrb[0].mxu0
  %2782 = vmatprep.mubr.bf16.mxu0 0
  %2783 = vmatmul.mubr.bf16.gmra.mrb[0].mxu0 %v1695
  %v2784 = vpop.f32.mrb[0].mxu0
  %v2785 = vadd.f32 %v432, %v2784
  %v2786 = vpop.f32.mrb[0].mxu0
  %v2787 = vpop.f32.mrb[0].mxu0
  %v2788 = vadd.f32 %v432, %v2787
  %v2789 = vpop.f32.mrb[0].mxu0
  %2790 = vmatprep.mubr.bf16.mxu0 0
  %2791 = vmatmul.mubr.bf16.gmra.mrb[0].mxu0 %v1698
  %v2792 = vpop.f32.mrb[0].mxu0
  %v2793 = vadd.f32 %v432, %v2792
  %v2794 = vpop.f32.mrb[0].mxu0
  %v2795 = vpop.f32.mrb[0].mxu0
  %v2796 = vadd.f32 %v432, %v2795
  %v2797 = vpop.f32.mrb[0].mxu0
  %2798 = vmatprep.mubr.bf16.mxu0 0
  %2799 = vmatmul.mubr.bf16.gmra.mrb[0].mxu0 %v1701
  %v2800 = vpop.f32.mrb[0].mxu0
  %v2801 = vadd.f32 %v432, %v2800
  %v2802 = vpop.f32.mrb[0].mxu0
  %v2803 = vpop.f32.mrb[0].mxu0
  %v2804 = vadd.f32 %v432, %v2803
  %v2805 = vpop.f32.mrb[0].mxu0
  %2806 = vmatprep.mubr.bf16.mxu0 0
  %2807 = vmatmul.mubr.bf16.gmra.mrb[0].mxu0 %v1704
  %v2808 = vpop.f32.mrb[0].mxu0
  %v2809 = vadd.f32 %v432, %v2808
  %v2810 = vpop.f32.mrb[0].mxu0
  %v2811 = vpop.f32.mrb[0].mxu0
  %v2812 = vadd.f32 %v432, %v2811
  %v2813 = vpop.f32.mrb[0].mxu0
  %2814 = vmatprep.mubr.bf16.mxu0 0
  %2815 = vmatmul.mubr.bf16.gmra.mrb[0].mxu0 %v1707
  %v2816 = vpop.f32.mrb[0].mxu0
  %v2817 = vadd.f32 %v432, %v2816
  %v2818 = vpop.f32.mrb[0].mxu0
  %v2819 = vpop.f32.mrb[0].mxu0
  %v2820 = vadd.f32 %v432, %v2819
  %v2821 = vpop.f32.mrb[0].mxu0
  %2822 = vmatprep.mubr.bf16.mxu0 0
  %2823 = vmatmul.mubr.bf16.gmra.mrb[0].mxu0 %v1710
  %v2824 = vpop.f32.mrb[0].mxu0
  %v2825 = vadd.f32 %v432, %v2824
  %v2826 = vpop.f32.mrb[0].mxu0
  %v2827 = vpop.f32.mrb[0].mxu0
  %v2828 = vadd.f32 %v432, %v2827
  %v2829 = vpop.f32.mrb[0].mxu0
  %2830 = vmatprep.mubr.bf16.mxu0 0
  %2831 = vmatmul.mubr.bf16.gmra.mrb[0].mxu0 %v1713
  %v2832 = vpop.f32.mrb[0].mxu0
  %v2833 = vadd.f32 %v432, %v2832
  %v2834 = vpop.f32.mrb[0].mxu0
  %v2835 = vpop.f32.mrb[0].mxu0
  %v2836 = vadd.f32 %v432, %v2835
  %v2837 = vpop.f32.mrb[0].mxu0
  %2838 = vmatprep.mubr.bf16.mxu0 0
  %2839 = vmatmul.mubr.bf16.gmra.mrb[0].mxu0 %v1716
  %v2840 = vpop.f32.mrb[0].mxu0
  %v2841 = vadd.f32 %v432, %v2840
  %v2842 = vpop.f32.mrb[0].mxu0
  %v2843 = vpop.f32.mrb[0].mxu0
  %v2844 = vadd.f32 %v432, %v2843
  %v2845 = vpop.f32.mrb[0].mxu0
  %2846 = vmatprep.mubr.bf16.mxu0 0
  %2847 = vmatmul.mubr.bf16.gmra.mrb[0].mxu0 %v1719
  %v2848 = vpop.f32.mrb[0].mxu0
  %v2849 = vadd.f32 %v432, %v2848
  %v2850 = vpop.f32.mrb[0].mxu0
  %v2851 = vpop.f32.mrb[0].mxu0
  %v2852 = vadd.f32 %v432, %v2851
  %v2853 = vpop.f32.mrb[0].mxu0
  %2854 = vmatprep.mubr.bf16.mxu0 0
  %2855 = vmatmul.mubr.bf16.gmra.mrb[0].mxu0 %v1722
  %v2856 = vpop.f32.mrb[0].mxu0
  %v2857 = vadd.f32 %v432, %v2856
  %v2858 = vpop.f32.mrb[0].mxu0
  %v2859 = vpop.f32.mrb[0].mxu0
  %v2860 = vadd.f32 %v432, %v2859
  %v2861 = vpop.f32.mrb[0].mxu0
  %2862 = vmatprep.mubr.bf16.mxu0 0
  %2863 = vmatmul.mubr.bf16.gmra.mrb[0].mxu0 %v1725
  %v2864 = vpop.f32.mrb[0].mxu0
  %v2865 = vadd.f32 %v432, %v2864
  %v2866 = vpop.f32.mrb[0].mxu0
  %v2867 = vpop.f32.mrb[0].mxu0
  %v2868 = vadd.f32 %v432, %v2867
  %v2869 = vpop.f32.mrb[0].mxu0
  %2870 = vmatprep.mubr.bf16.mxu0 0
  %2871 = vmatmul.mubr.bf16.gmra.mrb[0].mxu0 %v1728
  %v2872 = vpop.f32.mrb[0].mxu0
  %v2873 = vadd.f32 %v432, %v2872
  %v2874 = vpop.f32.mrb[0].mxu0
  %v2875 = vpop.f32.mrb[0].mxu0
  %v2876 = vadd.f32 %v432, %v2875
  %v2877 = vpop.f32.mrb[0].mxu0
  %2878 = vmatprep.mubr.bf16.mxu0 0
  %2879 = vmatmul.mubr.bf16.gmra.mrb[0].mxu0 %v1731
  %v2880 = vpop.f32.mrb[0].mxu0
  %v2881 = vadd.f32 %v432, %v2880
  %v2882 = vpop.f32.mrb[0].mxu0
  %v2883 = vpop.f32.mrb[0].mxu0
  %v2884 = vadd.f32 %v432, %v2883
  %v2885 = vpop.f32.mrb[0].mxu0
  %2886 = vmatprep.mubr.bf16.mxu0 0
  %2887 = vmatmul.mubr.bf16.gmra.mrb[0].mxu0 %v1734
  %v2888 = vpop.f32.mrb[0].mxu0
  %v2889 = vadd.f32 %v432, %v2888
  %v2890 = vpop.f32.mrb[0].mxu0
  %v2891 = vpop.f32.mrb[0].mxu0
  %v2892 = vadd.f32 %v432, %v2891
  %v2893 = vpop.f32.mrb[0].mxu0
  %2894 = vmatprep.mubr.bf16.mxu0 0
  %2895 = vmatmul.mubr.bf16.gmra.mrb[0].mxu0 %v1737
  %v2896 = vpop.f32.mrb[0].mxu0
  %v2897 = vadd.f32 %v432, %v2896
  %v2898 = vpop.f32.mrb[0].mxu0
  %v2899 = vpop.f32.mrb[0].mxu0
  %v2900 = vadd.f32 %v432, %v2899
  %v2901 = vpop.f32.mrb[0].mxu0
  %2902 = vmatprep.mubr.bf16.mxu0 0
  %2903 = vmatmul.mubr.bf16.gmra.mrb[0].mxu0 %v1740
  %v2904 = vpop.f32.mrb[0].mxu0
  %v2905 = vadd.f32 %v432, %v2904
  %v2906 = vpop.f32.mrb[0].mxu0
  %v2907 = vpop.f32.mrb[0].mxu0
  %v2908 = vadd.f32 %v432, %v2907
  %v2909 = vpop.f32.mrb[0].mxu0
  %2910 = vmatprep.mubr.bf16.mxu0 0
  %2911 = vmatmul.mubr.bf16.gmra.mrb[0].mxu0 %v1743
  %v2912 = vpop.f32.mrb[0].mxu0
  %v2913 = vadd.f32 %v432, %v2912
  %v2914 = vpop.f32.mrb[0].mxu0
  %v2915 = vpop.f32.mrb[0].mxu0
  %v2916 = vadd.f32 %v432, %v2915
  %v2917 = vpop.f32.mrb[0].mxu0
  %2918 = vmatprep.mubr.bf16.mxu0 0
  %2919 = vmatmul.mubr.bf16.gmra.mrb[0].mxu0 %v1746
  %v2920 = vpop.f32.mrb[0].mxu0
  %v2921 = vadd.f32 %v432, %v2920
  %v2922 = vpop.f32.mrb[0].mxu0
  %v2923 = vpop.f32.mrb[0].mxu0
  %v2924 = vadd.f32 %v432, %v2923
  %v2925 = vpop.f32.mrb[0].mxu0
  %2926 = vmatprep.mubr.bf16.mxu0 0
  %2927 = vmatmul.mubr.bf16.gmra.mrb[0].mxu0 %v1749
  %v2928 = vpop.f32.mrb[0].mxu0
  %v2929 = vadd.f32 %v432, %v2928
  %v2930 = vpop.f32.mrb[0].mxu0
  %v2931 = vpop.f32.mrb[0].mxu0
  %v2932 = vadd.f32 %v432, %v2931
  %v2933 = vpop.f32.mrb[0].mxu0
  %2934 = vmatprep.mubr.bf16.mxu0 0
  %2935 = vmatmul.mubr.bf16.gmra.mrb[0].mxu0 %v1752
  %v2936 = vpop.f32.mrb[0].mxu0
  %v2937 = vadd.f32 %v432, %v2936
  %v2938 = vpop.f32.mrb[0].mxu0
  %v2939 = vpop.f32.mrb[0].mxu0
  %v2940 = vadd.f32 %v432, %v2939
  %v2941 = vpop.f32.mrb[0].mxu0
  %2942 = vmatprep.mubr.bf16.mxu0 0
  %2943 = vmatmul.mubr.bf16.gmra.mrb[0].mxu0 %v1755
  %v2944 = vpop.f32.mrb[0].mxu0
  %v2945 = vadd.f32 %v432, %v2944
  %v2946 = vpop.f32.mrb[0].mxu0
  %v2947 = vpop.f32.mrb[0].mxu0
  %v2948 = vadd.f32 %v432, %v2947
  %v2949 = vpop.f32.mrb[0].mxu0
  %2950 = vmatprep.mubr.bf16.mxu0 0
  %2951 = vmatmul.mubr.bf16.gmra.mrb[0].mxu0 %v1758
  %v2952 = vpop.f32.mrb[0].mxu0
  %v2953 = vadd.f32 %v432, %v2952
  %v2954 = vpop.f32.mrb[0].mxu0
  %v2955 = vpop.f32.mrb[0].mxu0
  %v2956 = vadd.f32 %v432, %v2955
  %v2957 = vpop.f32.mrb[0].mxu0
  %2958 = vmatprep.mubr.bf16.mxu0 0
  %2959 = vmatmul.mubr.bf16.gmra.mrb[0].mxu0 %v1761
  %v2960 = vpop.f32.mrb[0].mxu0
  %v2961 = vadd.f32 %v432, %v2960
  %v2962 = vpop.f32.mrb[0].mxu0
  %v2963 = vpop.f32.mrb[0].mxu0
  %v2964 = vadd.f32 %v432, %v2963
  %v2965 = vpop.f32.mrb[0].mxu0
  %2966 = vmatprep.mubr.bf16.mxu0 0
  %2967 = vmatmul.mubr.bf16.gmra.mrb[0].mxu0 %v1764
  %v2968 = vpop.f32.mrb[0].mxu0
  %v2969 = vadd.f32 %v432, %v2968
  %v2970 = vpop.f32.mrb[0].mxu0
  %v2971 = vpop.f32.mrb[0].mxu0
  %v2972 = vadd.f32 %v432, %v2971
  %v2973 = vpop.f32.mrb[0].mxu0
  %2974 = vmatprep.mubr.bf16.mxu0 0
  %2975 = vmatmul.mubr.bf16.gmra.mrb[0].mxu0 %v1767
  %v2976 = vpop.f32.mrb[0].mxu0
  %v2977 = vadd.f32 %v432, %v2976
  %v2978 = vpop.f32.mrb[0].mxu0
  %v2979 = vpop.f32.mrb[0].mxu0
  %v2980 = vadd.f32 %v432, %v2979
  %v2981 = vpop.f32.mrb[0].mxu0
  %2982 = vmatprep.mubr.bf16.mxu0 0
  %2983 = vmatmul.mubr.bf16.gmra.mrb[0].mxu0 %v1770
  %v2984 = vpop.f32.mrb[0].mxu0
  %v2985 = vadd.f32 %v432, %v2984
  %v2986 = vpop.f32.mrb[0].mxu0
  %v2987 = vpop.f32.mrb[0].mxu0
  %v2988 = vadd.f32 %v432, %v2987
  %v2989 = vpop.f32.mrb[0].mxu0
  %2990 = vmatprep.mubr.bf16.mxu0 0
  %2991 = vmatmul.mubr.bf16.gmra.mrb[0].mxu0 %v1773
  %v2992 = vpop.f32.mrb[0].mxu0
  %v2993 = vadd.f32 %v432, %v2992
  %v2994 = vpop.f32.mrb[0].mxu0
  %v2995 = vpop.f32.mrb[0].mxu0
  %v2996 = vadd.f32 %v432, %v2995
  %v2997 = vpop.f32.mrb[0].mxu0
  %2998 = vmatprep.mubr.bf16.mxu0 0
  %2999 = vmatmul.mubr.bf16.gmra.mrb[0].mxu0 %v1776
  %v3000 = vpop.f32.mrb[0].mxu0
  %v3001 = vadd.f32 %v432, %v3000
  %v3002 = vpop.f32.mrb[0].mxu0
  %v3003 = vpop.f32.mrb[0].mxu0
  %v3004 = vadd.f32 %v432, %v3003
  %v3005 = vpop.f32.mrb[0].mxu0
  %3006 = vmatprep.mubr.bf16.mxu0 0
  %3007 = vmatmul.mubr.bf16.gmra.mrb[0].mxu0 %v1779
  %v3008 = vpop.f32.mrb[0].mxu0
  %v3009 = vadd.f32 %v432, %v3008
  %v3010 = vpop.f32.mrb[0].mxu0
  %v3011 = vpop.f32.mrb[0].mxu0
  %v3012 = vadd.f32 %v432, %v3011
  %v3013 = vpop.f32.mrb[0].mxu0
  %3014 = vmatprep.mubr.bf16.mxu0 0
  %3015 = vmatmul.mubr.bf16.gmra.mrb[0].mxu0 %v1782
  %v3016 = vpop.f32.mrb[0].mxu0
  %v3017 = vadd.f32 %v432, %v3016
  %v3018 = vpop.f32.mrb[0].mxu0
  %v3019 = vpop.f32.mrb[0].mxu0
  %v3020 = vadd.f32 %v432, %v3019
  %v3021 = vpop.f32.mrb[0].mxu0
  %3022 = vmatprep.mubr.bf16.mxu0 0
  %3023 = vmatmul.mubr.bf16.gmra.mrb[0].mxu0 %v1785
  %v3024 = vpop.f32.mrb[0].mxu0
  %v3025 = vadd.f32 %v432, %v3024
  %v3026 = vpop.f32.mrb[0].mxu0
  %v3027 = vpop.f32.mrb[0].mxu0
  %v3028 = vadd.f32 %v432, %v3027
  %v3029 = vpop.f32.mrb[0].mxu0
  %3030 = vmatprep.mubr.bf16.mxu0 0
  %3031 = vmatmul.mubr.bf16.gmra.mrb[0].mxu0 %v1788
  %v3032 = vpop.f32.mrb[0].mxu0
  %v3033 = vadd.f32 %v432, %v3032
  %v3034 = vpop.f32.mrb[0].mxu0
  %v3035 = vpop.f32.mrb[0].mxu0
  %v3036 = vadd.f32 %v432, %v3035
  %v3037 = vpop.f32.mrb[0].mxu0
  %3038 = vmatprep.mubr.bf16.mxu0 0
  %3039 = vmatmul.mubr.bf16.gmra.mrb[0].mxu0 %v1791
  %v3040 = vpop.f32.mrb[0].mxu0
  %v3041 = vadd.f32 %v432, %v3040
  %v3042 = vpop.f32.mrb[0].mxu0
  %v3043 = vpop.f32.mrb[0].mxu0
  %v3044 = vadd.f32 %v432, %v3043
  %v3045 = vpop.f32.mrb[0].mxu0
  %3046 = vmatprep.mubr.bf16.mxu0 0
  %3047 = vmatmul.mubr.bf16.gmra.mrb[0].mxu0 %v1794
  %v3048 = vpop.f32.mrb[0].mxu0
  %v3049 = vadd.f32 %v432, %v3048
  %v3050 = vpop.f32.mrb[0].mxu0
  %v3051 = vpop.f32.mrb[0].mxu0
  %v3052 = vadd.f32 %v432, %v3051
  %v3053 = vpop.f32.mrb[0].mxu0
  %3054 = vmatprep.mubr.bf16.mxu0 0
  %3055 = vmatmul.mubr.bf16.gmra.mrb[0].mxu0 %v1797
  %v3056 = vpop.f32.mrb[0].mxu0
  %v3057 = vadd.f32 %v432, %v3056
  %v3058 = vpop.f32.mrb[0].mxu0
  %v3059 = vpop.f32.mrb[0].mxu0
  %v3060 = vadd.f32 %v432, %v3059
  %v3061 = vpop.f32.mrb[0].mxu0
  %3062 = vmatprep.mubr.bf16.mxu0 0
  %3063 = vmatmul.mubr.bf16.gmra.mrb[0].mxu0 %v1800
  %v3064 = vpop.f32.mrb[0].mxu0
  %v3065 = vadd.f32 %v432, %v3064
  %v3066 = vpop.f32.mrb[0].mxu0
  %v3067 = vpop.f32.mrb[0].mxu0
  %v3068 = vadd.f32 %v432, %v3067
  %v3069 = vpop.f32.mrb[0].mxu0
  %3070 = vmatprep.mubr.bf16.mxu0 0
  %3071 = vmatmul.mubr.bf16.gmra.mrb[0].mxu0 %v1803
  %v3072 = vpop.f32.mrb[0].mxu0
  %v3073 = vadd.f32 %v432, %v3072
  %v3074 = vpop.f32.mrb[0].mxu0
  %v3075 = vpop.f32.mrb[0].mxu0
  %v3076 = vadd.f32 %v432, %v3075
  %v3077 = vpop.f32.mrb[0].mxu0
  %3078 = vmatprep.mubr.bf16.mxu0 0
  %3079 = vmatmul.mubr.bf16.gmra.mrb[0].mxu0 %v1806
  %v3080 = vpop.f32.mrb[0].mxu0
  %v3081 = vadd.f32 %v432, %v3080
  %v3082 = vpop.f32.mrb[0].mxu0
  %v3083 = vpop.f32.mrb[0].mxu0
  %v3084 = vadd.f32 %v432, %v3083
  %v3085 = vpop.f32.mrb[0].mxu0
  %3086 = vmatprep.mubr.bf16.mxu0 0
  %3087 = vmatmul.mubr.bf16.gmra.mrb[0].mxu0 %v1809
  %v3088 = vpop.f32.mrb[0].mxu0
  %v3089 = vadd.f32 %v432, %v3088
  %v3090 = vpop.f32.mrb[0].mxu0
  %v3091 = vpop.f32.mrb[0].mxu0
  %v3092 = vadd.f32 %v432, %v3091
  %v3093 = vpop.f32.mrb[0].mxu0
  %3094 = vmatprep.mubr.bf16.mxu0 0
  %3095 = vmatmul.mubr.bf16.gmra.mrb[0].mxu0 %v1812
  %v3096 = vpop.f32.mrb[0].mxu0
  %v3097 = vadd.f32 %v432, %v3096
  %v3098 = vpop.f32.mrb[0].mxu0
  %v3099 = vpop.f32.mrb[0].mxu0
  %v3100 = vadd.f32 %v432, %v3099
  %v3101 = vpop.f32.mrb[0].mxu0
  %3102 = vmatprep.mubr.bf16.mxu0 0
  %3103 = vmatmul.mubr.bf16.gmra.mrb[0].mxu0 %v1815
  %v3104 = vpop.f32.mrb[0].mxu0
  %v3105 = vadd.f32 %v432, %v3104
  %v3106 = vpop.f32.mrb[0].mxu0
  %v3107 = vpop.f32.mrb[0].mxu0
  %v3108 = vadd.f32 %v432, %v3107
  %v3109 = vpop.f32.mrb[0].mxu0
  %3110 = vmatprep.mubr.bf16.mxu0 0
  %3111 = vmatmul.mubr.bf16.gmra.mrb[0].mxu0 %v1818
  %v3112 = vpop.f32.mrb[0].mxu0
  %v3113 = vadd.f32 %v432, %v3112
  %v3114 = vpop.f32.mrb[0].mxu0
  %v3115 = vpop.f32.mrb[0].mxu0
  %v3116 = vadd.f32 %v432, %v3115
  %v3117 = vpop.f32.mrb[0].mxu0
  %3118 = vmatprep.mubr.bf16.mxu0 0
  %3119 = vmatmul.mubr.bf16.gmra.mrb[0].mxu0 %v1821
  %v3120 = vpop.f32.mrb[0].mxu0
  %v3121 = vadd.f32 %v432, %v3120
  %v3122 = vpop.f32.mrb[0].mxu0
  %v3123 = vpop.f32.mrb[0].mxu0
  %v3124 = vadd.f32 %v432, %v3123
  %v3125 = vpop.f32.mrb[0].mxu0
  %3126 = vmatprep.mubr.bf16.mxu0 0
  %3127 = vmatmul.mubr.bf16.gmra.mrb[0].mxu0 %v1824
  %v3128 = vpop.f32.mrb[0].mxu0
  %v3129 = vadd.f32 %v432, %v3128
  %v3130 = vpop.f32.mrb[0].mxu0
  %v3131 = vpop.f32.mrb[0].mxu0
  %v3132 = vadd.f32 %v432, %v3131
  %v3133 = vpop.f32.mrb[0].mxu0
  %3134 = vmatprep.mubr.bf16.mxu0 0
  %3135 = vmatmul.mubr.bf16.gmra.mrb[0].mxu0 %v1827
  %v3136 = vpop.f32.mrb[0].mxu0
  %v3137 = vadd.f32 %v432, %v3136
  %v3138 = vpop.f32.mrb[0].mxu0
  %v3139 = vpop.f32.mrb[0].mxu0
  %v3140 = vadd.f32 %v432, %v3139
  %v3141 = vpop.f32.mrb[0].mxu0
  %3142 = vmatprep.mubr.bf16.mxu0 0
  %3143 = vmatmul.mubr.bf16.gmra.mrb[0].mxu0 %v1830
  %v3144 = vpop.f32.mrb[0].mxu0
  %v3145 = vadd.f32 %v432, %v3144
  %v3146 = vpop.f32.mrb[0].mxu0
  %v3147 = vpop.f32.mrb[0].mxu0
  %v3148 = vadd.f32 %v432, %v3147
  %v3149 = vpop.f32.mrb[0].mxu0
  %3150 = vmatprep.mubr.bf16.mxu0 0
  %3151 = vmatmul.mubr.bf16.gmra.mrb[0].mxu0 %v1833
  %v3152 = vpop.f32.mrb[0].mxu0
  %v3153 = vadd.f32 %v432, %v3152
  %v3154 = vpop.f32.mrb[0].mxu0
  %v3155 = vpop.f32.mrb[0].mxu0
  %v3156 = vadd.f32 %v432, %v3155
  %v3157 = vpop.f32.mrb[0].mxu0
  %3158 = vmatprep.mubr.bf16.mxu0 0
  %3159 = vmatmul.mubr.bf16.gmra.mrb[0].mxu0 %v1836
  %v3160 = vpop.f32.mrb[0].mxu0
  %v3161 = vadd.f32 %v432, %v3160
  %v3162 = vpop.f32.mrb[0].mxu0
  %v3163 = vpop.f32.mrb[0].mxu0
  %v3164 = vadd.f32 %v432, %v3163
  %v3165 = vpop.f32.mrb[0].mxu0
  %3166 = vmatprep.mubr.bf16.mxu0 0
  %3167 = vmatmul.mubr.bf16.gmra.mrb[0].mxu0 %v1839
  %v3168 = vpop.f32.mrb[0].mxu0
  %v3169 = vadd.f32 %v432, %v3168
  %v3170 = vpop.f32.mrb[0].mxu0
  %v3171 = vpop.f32.mrb[0].mxu0
  %v3172 = vadd.f32 %v432, %v3171
  %v3173 = vpop.f32.mrb[0].mxu0
  %3174 = vmatprep.mubr.bf16.mxu0 0
  %3175 = vmatmul.mubr.bf16.gmra.mrb[0].mxu0 %v1842
  %v3176 = vpop.f32.mrb[0].mxu0
  %v3177 = vadd.f32 %v432, %v3176
  %v3178 = vpop.f32.mrb[0].mxu0
  %v3179 = vpop.f32.mrb[0].mxu0
  %v3180 = vadd.f32 %v432, %v3179
  %v3181 = vpop.f32.mrb[0].mxu0
  %3182 = vmatprep.mubr.bf16.mxu0 0
  %3183 = vmatmul.mubr.bf16.gmra.mrb[0].mxu0 %v1845
  %v3184 = vpop.f32.mrb[0].mxu0
  %v3185 = vadd.f32 %v432, %v3184
  %v3186 = vpop.f32.mrb[0].mxu0
  %v3187 = vpop.f32.mrb[0].mxu0
  %v3188 = vadd.f32 %v432, %v3187
  %v3189 = vpop.f32.mrb[0].mxu0
  %3190 = vmatprep.mubr.bf16.mxu0 0
  %3191 = vmatmul.mubr.bf16.gmra.mrb[0].mxu0 %v1848
  %v3192 = vpop.f32.mrb[0].mxu0
  %v3193 = vadd.f32 %v432, %v3192
  %v3194 = vpop.f32.mrb[0].mxu0
  %v3195 = vpop.f32.mrb[0].mxu0
  %v3196 = vadd.f32 %v432, %v3195
  %v3197 = vpop.f32.mrb[0].mxu0
  %3198 = vmatprep.mubr.bf16.mxu0 0
  %3199 = vmatmul.mubr.bf16.gmra.mrb[0].mxu0 %v1851
  %v3200 = vpop.f32.mrb[0].mxu0
  %v3201 = vadd.f32 %v432, %v3200
  %v3202 = vpop.f32.mrb[0].mxu0
  %v3203 = vpop.f32.mrb[0].mxu0
  %v3204 = vadd.f32 %v432, %v3203
  %v3205 = vpop.f32.mrb[0].mxu0
  %3206 = vmatprep.mubr.bf16.mxu0 0
  %3207 = vmatmul.mubr.bf16.gmra.mrb[0].mxu0 %v1854
  %v3208 = vpop.f32.mrb[0].mxu0
  %v3209 = vadd.f32 %v432, %v3208
  %v3210 = vpop.f32.mrb[0].mxu0
  %v3211 = vpop.f32.mrb[0].mxu0
  %v3212 = vadd.f32 %v432, %v3211
  %v3213 = vpop.f32.mrb[0].mxu0
  %3214 = vmatprep.mubr.bf16.mxu0 0
  %3215 = vmatmul.mubr.bf16.gmra.mrb[0].mxu0 %v1857
  %v3216 = vpop.f32.mrb[0].mxu0
  %v3217 = vadd.f32 %v432, %v3216
  %v3218 = vpop.f32.mrb[0].mxu0
  %v3219 = vpop.f32.mrb[0].mxu0
  %v3220 = vadd.f32 %v432, %v3219
  %v3221 = vpop.f32.mrb[0].mxu0
  %3222 = vmatprep.mubr.bf16.mxu0 0
  %3223 = vmatmul.mubr.bf16.gmra.mrb[0].mxu0 %v1860
  %v3224 = vpop.f32.mrb[0].mxu0
  %v3225 = vadd.f32 %v432, %v3224
  %v3226 = vpop.f32.mrb[0].mxu0
  %v3227 = vpop.f32.mrb[0].mxu0
  %v3228 = vadd.f32 %v432, %v3227
  %v3229 = vpop.f32.mrb[0].mxu0
  %3230 = vmatprep.mubr.bf16.mxu0 0
  %3231 = vmatmul.mubr.bf16.gmra.mrb[0].mxu0 %v1863
  %v3232 = vpop.f32.mrb[0].mxu0
  %v3233 = vadd.f32 %v432, %v3232
  %v3234 = vpop.f32.mrb[0].mxu0
  %v3235 = vpop.f32.mrb[0].mxu0
  %v3236 = vadd.f32 %v432, %v3235
  %v3237 = vpop.f32.mrb[0].mxu0
  %3238 = vmatprep.mubr.bf16.mxu0 0
  %3239 = vmatmul.mubr.bf16.gmra.mrb[0].mxu0 %v1866
  %v3240 = vpop.f32.mrb[0].mxu0
  %v3241 = vadd.f32 %v432, %v3240
  %v3242 = vpop.f32.mrb[0].mxu0
  %v3243 = vpop.f32.mrb[0].mxu0
  %v3244 = vadd.f32 %v432, %v3243
  %v3245 = vpop.f32.mrb[0].mxu0
  %3246 = vmatprep.mubr.bf16.mxu0 0
  %3247 = vmatmul.mubr.bf16.gmra.mrb[0].mxu0 %v1869
  %v3248 = vpop.f32.mrb[0].mxu0
  %v3249 = vadd.f32 %v432, %v3248
  %v3250 = vpop.f32.mrb[0].mxu0
  %v3251 = vpop.f32.mrb[0].mxu0
  %v3252 = vadd.f32 %v432, %v3251
  %v3253 = vpop.f32.mrb[0].mxu0
  %3254 = vmatprep.mubr.bf16.mxu0 0
  %3255 = vmatmul.mubr.bf16.gmra.mrb[0].mxu0 %v1872
  %v3256 = vpop.f32.mrb[0].mxu0
  %v3257 = vadd.f32 %v432, %v3256
  %v3258 = vpop.f32.mrb[0].mxu0
  %v3259 = vpop.f32.mrb[0].mxu0
  %v3260 = vadd.f32 %v432, %v3259
  %v3261 = vpop.f32.mrb[0].mxu0
  %3262 = vmatprep.mubr.bf16.mxu0 0
  %3263 = vmatmul.mubr.bf16.gmra.mrb[0].mxu0 %v1875
  %v3264 = vpop.f32.mrb[0].mxu0
  %v3265 = vadd.f32 %v432, %v3264
  %v3266 = vpop.f32.mrb[0].mxu0
  %v3267 = vpop.f32.mrb[0].mxu0
  %v3268 = vadd.f32 %v432, %v3267
  %v3269 = vpop.f32.mrb[0].mxu0
  %3270 = vmatprep.mubr.bf16.mxu0 0
  %3271 = vmatmul.mubr.bf16.gmra.mrb[0].mxu0 %v1878
  %v3272 = vpop.f32.mrb[0].mxu0
  %v3273 = vadd.f32 %v432, %v3272
  %v3274 = vpop.f32.mrb[0].mxu0
  %v3275 = vpop.f32.mrb[0].mxu0
  %v3276 = vadd.f32 %v432, %v3275
  %v3277 = vpop.f32.mrb[0].mxu0
  %3278 = vmatprep.mubr.bf16.mxu0 0
  %3279 = vmatmul.mubr.bf16.gmra.mrb[0].mxu0 %v1881
  %v3280 = vpop.f32.mrb[0].mxu0
  %v3281 = vadd.f32 %v432, %v3280
  %v3282 = vpop.f32.mrb[0].mxu0
  %v3283 = vpop.f32.mrb[0].mxu0
  %v3284 = vadd.f32 %v432, %v3283
  %v3285 = vpop.f32.mrb[0].mxu0
  %3286 = vmatprep.mubr.bf16.mxu0 0
  %3287 = vmatmul.mubr.bf16.gmra.mrb[0].mxu0 %v1884
  %v3288 = vpop.f32.mrb[0].mxu0
  %v3289 = vadd.f32 %v432, %v3288
  %v3290 = vpop.f32.mrb[0].mxu0
  %v3291 = vpop.f32.mrb[0].mxu0
  %v3292 = vadd.f32 %v432, %v3291
  %v3293 = vpop.f32.mrb[0].mxu0
  %3294 = vmatprep.mubr.bf16.mxu0 0
  %3295 = vmatmul.mubr.bf16.gmra.mrb[0].mxu0 %v1887
  %v3296 = vpop.f32.mrb[0].mxu0
  %v3297 = vadd.f32 %v432, %v3296
  %v3298 = vpop.f32.mrb[0].mxu0
  %v3299 = vpop.f32.mrb[0].mxu0
  %v3300 = vadd.f32 %v432, %v3299
  %v3301 = vpop.f32.mrb[0].mxu0
  %3302 = vmatprep.mubr.bf16.mxu0 0
  %3303 = vmatmul.mubr.bf16.gmra.mrb[0].mxu0 %v1890
  %v3304 = vpop.f32.mrb[0].mxu0
  %v3305 = vadd.f32 %v432, %v3304
  %v3306 = vpop.f32.mrb[0].mxu0
  %v3307 = vpop.f32.mrb[0].mxu0
  %v3308 = vadd.f32 %v432, %v3307
  %v3309 = vpop.f32.mrb[0].mxu0
  %3310 = vmatprep.mubr.bf16.mxu0 0
  %3311 = vmatmul.mubr.bf16.gmra.mrb[0].mxu0 %v1893
  %v3312 = vpop.f32.mrb[0].mxu0
  %v3313 = vadd.f32 %v432, %v3312
  %v3314 = vpop.f32.mrb[0].mxu0
  %v3315 = vpop.f32.mrb[0].mxu0
  %v3316 = vadd.f32 %v432, %v3315
  %v3317 = vpop.f32.mrb[0].mxu0
  %3318 = vmatprep.mubr.bf16.mxu0 0
  %3319 = vmatmul.mubr.bf16.gmra.mrb[0].mxu0 %v1896
  %v3320 = vpop.f32.mrb[0].mxu0
  %v3321 = vadd.f32 %v432, %v3320
  %v3322 = vpop.f32.mrb[0].mxu0
  %v3323 = vpop.f32.mrb[0].mxu0
  %v3324 = vadd.f32 %v432, %v3323
  %v3325 = vpop.f32.mrb[0].mxu0
  %3326 = vmatprep.mubr.bf16.mxu0 0
  %3327 = vmatmul.mubr.bf16.gmra.mrb[0].mxu0 %v1899
  %v3328 = vpop.f32.mrb[0].mxu0
  %v3329 = vadd.f32 %v432, %v3328
  %v3330 = vpop.f32.mrb[0].mxu0
  %v3331 = vpop.f32.mrb[0].mxu0
  %v3332 = vadd.f32 %v432, %v3331
  %v3333 = vpop.f32.mrb[0].mxu0
  %3334 = vmatprep.mubr.bf16.mxu0 0
  %3335 = vmatmul.mubr.bf16.gmra.mrb[0].mxu0 %v1902
  %v3336 = vpop.f32.mrb[0].mxu0
  %v3337 = vadd.f32 %v432, %v3336
  %v3338 = vpop.f32.mrb[0].mxu0
  %v3339 = vpop.f32.mrb[0].mxu0
  %v3340 = vadd.f32 %v432, %v3339
  %v3341 = vpop.f32.mrb[0].mxu0
  %3342 = vmatprep.mubr.bf16.mxu0 0
  %3343 = vmatmul.mubr.bf16.gmra.mrb[0].mxu0 %v1905
  %v3344 = vpop.f32.mrb[0].mxu0
  %v3345 = vadd.f32 %v432, %v3344
  %v3346 = vpop.f32.mrb[0].mxu0
  %v3347 = vpop.f32.mrb[0].mxu0
  %v3348 = vadd.f32 %v432, %v3347
  %v3349 = vpop.f32.mrb[0].mxu0
  %3350 = vmatprep.mubr.bf16.mxu0 0
  %3351 = vmatmul.mubr.bf16.gmra.mrb[0].mxu0 %v1908
  %v3352 = vpop.f32.mrb[0].mxu0
  %v3353 = vadd.f32 %v432, %v3352
  %v3354 = vpop.f32.mrb[0].mxu0
  %v3355 = vpop.f32.mrb[0].mxu0
  %v3356 = vadd.f32 %v432, %v3355
  %v3357 = vpop.f32.mrb[0].mxu0
  %3358 = vmatprep.mubr.bf16.mxu0 0
  %3359 = vmatmul.mubr.bf16.gmra.mrb[0].mxu0 %v1911
  %v3360 = vpop.f32.mrb[0].mxu0
  %v3361 = vadd.f32 %v432, %v3360
  %v3362 = vpop.f32.mrb[0].mxu0
  %v3363 = vpop.f32.mrb[0].mxu0
  %v3364 = vadd.f32 %v432, %v3363
  %v3365 = vpop.f32.mrb[0].mxu0
  %3366 = vmatprep.mubr.bf16.mxu0 0
  %3367 = vmatmul.mubr.bf16.gmra.mrb[0].mxu0 %v1914
  %v3368 = vpop.f32.mrb[0].mxu0
  %v3369 = vadd.f32 %v432, %v3368
  %v3370 = vpop.f32.mrb[0].mxu0
  %v3371 = vpop.f32.mrb[0].mxu0
  %v3372 = vadd.f32 %v432, %v3371
  %v3373 = vpop.f32.mrb[0].mxu0
  %3374 = vmatprep.mubr.bf16.mxu0 0
  %3375 = vmatmul.mubr.bf16.gmra.mrb[0].mxu0 %v1917
  %v3376 = vpop.f32.mrb[0].mxu0
  %v3377 = vadd.f32 %v432, %v3376
  %v3378 = vpop.f32.mrb[0].mxu0
  %v3379 = vpop.f32.mrb[0].mxu0
  %v3380 = vadd.f32 %v432, %v3379
  %v3381 = vpop.f32.mrb[0].mxu0
  %3382 = vmatprep.mubr.bf16.mxu0 0
  %3383 = vmatmul.mubr.bf16.gmra.mrb[0].mxu0 %v1920
  %v3384 = vpop.f32.mrb[0].mxu0
  %v3385 = vadd.f32 %v432, %v3384
  %v3386 = vpop.f32.mrb[0].mxu0
  %v3387 = vpop.f32.mrb[0].mxu0
  %v3388 = vadd.f32 %v432, %v3387
  %v3389 = vpop.f32.mrb[0].mxu0
  %3390 = vmatprep.mubr.bf16.mxu0 0
  %3391 = vmatmul.mubr.bf16.gmra.mrb[0].mxu0 %v1923
  %v3392 = vpop.f32.mrb[0].mxu0
  %v3393 = vadd.f32 %v432, %v3392
  %v3394 = vpop.f32.mrb[0].mxu0
  %v3395 = vpop.f32.mrb[0].mxu0
  %v3396 = vadd.f32 %v432, %v3395
  %v3397 = vpop.f32.mrb[0].mxu0
  %3398 = vmatprep.mubr.bf16.mxu0 0
  %3399 = vmatmul.mubr.bf16.gmra.mrb[0].mxu0 %v1926
  %v3400 = vpop.f32.mrb[0].mxu0
  %v3401 = vadd.f32 %v432, %v3400
  %v3402 = vpop.f32.mrb[0].mxu0
  %v3403 = vpop.f32.mrb[0].mxu0
  %v3404 = vadd.f32 %v432, %v3403
  %v3405 = vpop.f32.mrb[0].mxu0
  %3406 = vmatprep.mubr.bf16.mxu0 0
  %3407 = vmatmul.mubr.bf16.gmra.mrb[0].mxu0 %v1929
  %v3408 = vpop.f32.mrb[0].mxu0
  %v3409 = vadd.f32 %v432, %v3408
  %v3410 = vpop.f32.mrb[0].mxu0
  %v3411 = vpop.f32.mrb[0].mxu0
  %v3412 = vadd.f32 %v432, %v3411
  %v3413 = vpop.f32.mrb[0].mxu0
  %3414 = vmatprep.mubr.bf16.mxu0 0
  %3415 = vmatmul.mubr.bf16.gmra.mrb[0].mxu0 %v1932
  %v3416 = vpop.f32.mrb[0].mxu0
  %v3417 = vadd.f32 %v432, %v3416
  %v3418 = vpop.f32.mrb[0].mxu0
  %v3419 = vpop.f32.mrb[0].mxu0
  %v3420 = vadd.f32 %v432, %v3419
  %v3421 = vpop.f32.mrb[0].mxu0
  %3422 = vmatprep.mubr.bf16.mxu0 0
  %3423 = vmatmul.mubr.bf16.gmra.mrb[0].mxu0 %v1935
  %v3424 = vpop.f32.mrb[0].mxu0
  %v3425 = vadd.f32 %v432, %v3424
  %v3426 = vpop.f32.mrb[0].mxu0
  %v3427 = vpop.f32.mrb[0].mxu0
  %v3428 = vadd.f32 %v432, %v3427
  %v3429 = vpop.f32.mrb[0].mxu0
  %3430 = vmatprep.mubr.bf16.mxu0 0
  %3431 = vmatmul.mubr.bf16.gmra.mrb[0].mxu0 %v1938
  %v3432 = vpop.f32.mrb[0].mxu0
  %v3433 = vadd.f32 %v432, %v3432
  %v3434 = vpop.f32.mrb[0].mxu0
  %v3435 = vpop.f32.mrb[0].mxu0
  %v3436 = vadd.f32 %v432, %v3435
  %v3437 = vpop.f32.mrb[0].mxu0
  %3438 = vmatprep.mubr.bf16.mxu0 0
  %3439 = vmatmul.mubr.bf16.gmra.mrb[0].mxu0 %v1941
  %v3440 = vpop.f32.mrb[0].mxu0
  %v3441 = vadd.f32 %v432, %v3440
  %v3442 = vpop.f32.mrb[0].mxu0
  %v3443 = vpop.f32.mrb[0].mxu0
  %v3444 = vadd.f32 %v432, %v3443
  %v3445 = vpop.f32.mrb[0].mxu0
  %3446 = vmatprep.mubr.bf16.mxu0 0
  %3447 = vmatmul.mubr.bf16.gmra.mrb[0].mxu0 %v1944
  %v3448 = vpop.f32.mrb[0].mxu0
  %v3449 = vadd.f32 %v432, %v3448
  %v3450 = vpop.f32.mrb[0].mxu0
  %v3451 = vpop.f32.mrb[0].mxu0
  %v3452 = vadd.f32 %v432, %v3451
  %v3453 = vpop.f32.mrb[0].mxu0
  %3454 = vmatprep.mubr.bf16.mxu0 0
  %3455 = vmatmul.mubr.bf16.gmra.mrb[0].mxu0 %v1947
  %v3456 = vpop.f32.mrb[0].mxu0
  %v3457 = vadd.f32 %v432, %v3456
  %v3458 = vpop.f32.mrb[0].mxu0
  %v3459 = vpop.f32.mrb[0].mxu0
  %v3460 = vadd.f32 %v432, %v3459
  %v3461 = vpop.f32.mrb[0].mxu0
  %3462 = vmatprep.mubr.bf16.mxu0 0
  %3463 = vmatmul.mubr.bf16.gmra.mrb[0].mxu0 %v1950
  %v3464 = vpop.f32.mrb[0].mxu0
  %v3465 = vadd.f32 %v432, %v3464
  %v3466 = vpop.f32.mrb[0].mxu0
  %v3467 = vpop.f32.mrb[0].mxu0
  %v3468 = vadd.f32 %v432, %v3467
  %v3469 = vpop.f32.mrb[0].mxu0
  %3470 = vmatprep.mubr.bf16.mxu0 0
  %3471 = vmatmul.mubr.bf16.gmra.mrb[0].mxu0 %v1953
  %v3472 = vpop.f32.mrb[0].mxu0
  %v3473 = vadd.f32 %v432, %v3472
  %v3474 = vpop.f32.mrb[0].mxu0
  %v3475 = vpop.f32.mrb[0].mxu0
  %v3476 = vadd.f32 %v432, %v3475
  %v3477 = vpop.f32.mrb[0].mxu0
  %3478 = vmatprep.mubr.bf16.mxu0 0
  %3479 = vmatmul.mubr.bf16.gmra.mrb[0].mxu0 %v1956
  %v3480 = vpop.f32.mrb[0].mxu0
  %v3481 = vadd.f32 %v432, %v3480
  %v3482 = vpop.f32.mrb[0].mxu0
  %v3483 = vpop.f32.mrb[0].mxu0
  %v3484 = vadd.f32 %v432, %v3483
  %v3485 = vpop.f32.mrb[0].mxu0
  %3486 = vmatprep.mubr.bf16.mxu0 0
  %3487 = vmatmul.mubr.bf16.gmra.mrb[0].mxu0 %v1959
  %v3488 = vpop.f32.mrb[0].mxu0
  %v3489 = vadd.f32 %v432, %v3488
  %v3490 = vpop.f32.mrb[0].mxu0
  %v3491 = vpop.f32.mrb[0].mxu0
  %v3492 = vadd.f32 %v432, %v3491
  %v3493 = vpop.f32.mrb[0].mxu0
  %3494 = vmatprep.mubr.bf16.mxu0 0
  %3495 = vmatmul.mubr.bf16.gmra.mrb[0].mxu0 %v1962
  %v3496 = vpop.f32.mrb[0].mxu0
  %v3497 = vadd.f32 %v432, %v3496
  %v3498 = vpop.f32.mrb[0].mxu0
  %v3499 = vpop.f32.mrb[0].mxu0
  %v3500 = vadd.f32 %v432, %v3499
  %v3501 = vpop.f32.mrb[0].mxu0
  %3502 = vmatprep.mubr.bf16.mxu0 0
  %3503 = vmatmul.mubr.bf16.gmra.mrb[0].mxu0 %v1965
  %v3504 = vpop.f32.mrb[0].mxu0
  %v3505 = vadd.f32 %v432, %v3504
  %v3506 = vpop.f32.mrb[0].mxu0
  %v3507 = vpop.f32.mrb[0].mxu0
  %v3508 = vadd.f32 %v432, %v3507
  %v3509 = vpop.f32.mrb[0].mxu0
  %3510 = vmatprep.mubr.bf16.mxu0 0
  %3511 = vmatmul.mubr.bf16.gmra.mrb[0].mxu0 %v1968
  %v3512 = vpop.f32.mrb[0].mxu0
  %v3513 = vadd.f32 %v432, %v3512
  %v3514 = vpop.f32.mrb[0].mxu0
  %v3515 = vpop.f32.mrb[0].mxu0
  %v3516 = vadd.f32 %v432, %v3515
  %v3517 = vpop.f32.mrb[0].mxu0
  %3518 = vmatprep.mubr.bf16.mxu0 0
  %3519 = vmatmul.mubr.bf16.gmra.mrb[0].mxu0 %v1971
  %v3520 = vpop.f32.mrb[0].mxu0
  %v3521 = vadd.f32 %v432, %v3520
  %v3522 = vpop.f32.mrb[0].mxu0
  %v3523 = vpop.f32.mrb[0].mxu0
  %v3524 = vadd.f32 %v432, %v3523
  %v3525 = vpop.f32.mrb[0].mxu0
  %3526 = vmatprep.mubr.bf16.mxu0 0
  %3527 = vmatmul.mubr.bf16.gmra.mrb[0].mxu0 %v1974
  %v3528 = vpop.f32.mrb[0].mxu0
  %v3529 = vadd.f32 %v432, %v3528
  %v3530 = vpop.f32.mrb[0].mxu0
  %v3531 = vpop.f32.mrb[0].mxu0
  %v3532 = vadd.f32 %v432, %v3531
  %v3533 = vpop.f32.mrb[0].mxu0
  %3534 = vmatprep.mubr.bf16.mxu0 0
  %3535 = vmatmul.mubr.bf16.gmra.mrb[0].mxu0 %v1977
  %v3536 = vpop.f32.mrb[0].mxu0
  %v3537 = vadd.f32 %v432, %v3536
  %v3538 = vpop.f32.mrb[0].mxu0
  %v3539 = vpop.f32.mrb[0].mxu0
  %v3540 = vadd.f32 %v432, %v3539
  %v3541 = vpop.f32.mrb[0].mxu0
  %3542 = vmatprep.mubr.bf16.mxu0 0
  %3543 = vmatmul.mubr.bf16.gmra.mrb[0].mxu0 %v1980
  %v3544 = vpop.f32.mrb[0].mxu0
  %v3545 = vadd.f32 %v432, %v3544
  %v3546 = vpop.f32.mrb[0].mxu0
  %v3547 = vpop.f32.mrb[0].mxu0
  %v3548 = vadd.f32 %v432, %v3547
  %v3549 = vpop.f32.mrb[0].mxu0
  %3550 = vdwg.mxu0
  %v3551 = vmax.f32 %v2017, 0.0
  %v3552 = vmax.f32 %v2020, 0.0
  %v3553 = vmax.f32 %v2025, 0.0
  %v3554 = vmax.f32 %v2028, 0.0
  %v3555 = vmax.f32 %v2033, 0.0
  %v3556 = vmax.f32 %v2036, 0.0
  %v3557 = vmax.f32 %v2041, 0.0
  %v3558 = vmax.f32 %v2044, 0.0
  %v3559 = vmax.f32 %v2049, 0.0
  %v3560 = vmax.f32 %v2052, 0.0
  %v3561 = vmax.f32 %v2057, 0.0
  %v3562 = vmax.f32 %v2060, 0.0
  %v3563 = vmax.f32 %v2065, 0.0
  %v3564 = vmax.f32 %v2068, 0.0
  %v3565 = vmax.f32 %v2073, 0.0
  %v3566 = vmax.f32 %v2076, 0.0
  %v3567 = vmax.f32 %v2081, 0.0
  %v3568 = vmax.f32 %v2084, 0.0
  %v3569 = vmax.f32 %v2089, 0.0
  %v3570 = vmax.f32 %v2092, 0.0
  %v3571 = vmax.f32 %v2097, 0.0
  %v3572 = vmax.f32 %v2100, 0.0
  %v3573 = vmax.f32 %v2105, 0.0
  %v3574 = vmax.f32 %v2108, 0.0
  %v3575 = vmax.f32 %v2113, 0.0
  %v3576 = vmax.f32 %v2116, 0.0
  %v3577 = vmax.f32 %v2121, 0.0
  %v3578 = vmax.f32 %v2124, 0.0
  %v3579 = vmax.f32 %v2129, 0.0
  %v3580 = vmax.f32 %v2132, 0.0
  %v3581 = vmax.f32 %v2137, 0.0
  %v3582 = vmax.f32 %v2140, 0.0
  %v3583 = vmax.f32 %v2145, 0.0
  %v3584 = vmax.f32 %v2148, 0.0
  %v3585 = vmax.f32 %v2153, 0.0
  %v3586 = vmax.f32 %v2156, 0.0
  %v3587 = vmax.f32 %v2161, 0.0
  %v3588 = vmax.f32 %v2164, 0.0
  %v3589 = vmax.f32 %v2169, 0.0
  %v3590 = vmax.f32 %v2172, 0.0
  %v3591 = vmax.f32 %v2177, 0.0
  %v3592 = vmax.f32 %v2180, 0.0
  %v3593 = vmax.f32 %v2185, 0.0
  %v3594 = vmax.f32 %v2188, 0.0
  %v3595 = vmax.f32 %v2193, 0.0
  %v3596 = vmax.f32 %v2196, 0.0
  %v3597 = vmax.f32 %v2201, 0.0
  %v3598 = vmax.f32 %v2204, 0.0
  %v3599 = vmax.f32 %v2209, 0.0
  %v3600 = vmax.f32 %v2212, 0.0
  %v3601 = vmax.f32 %v2217, 0.0
  %v3602 = vmax.f32 %v2220, 0.0
  %v3603 = vmax.f32 %v2225, 0.0
  %v3604 = vmax.f32 %v2228, 0.0
  %v3605 = vmax.f32 %v2233, 0.0
  %v3606 = vmax.f32 %v2236, 0.0
  %v3607 = vmax.f32 %v2241, 0.0
  %v3608 = vmax.f32 %v2244, 0.0
  %v3609 = vmax.f32 %v2249, 0.0
  %v3610 = vmax.f32 %v2252, 0.0
  %v3611 = vmax.f32 %v2257, 0.0
  %v3612 = vmax.f32 %v2260, 0.0
  %v3613 = vmax.f32 %v2265, 0.0
  %v3614 = vmax.f32 %v2268, 0.0
  %v3615 = vmax.f32 %v2273, 0.0
  %v3616 = vmax.f32 %v2276, 0.0
  %v3617 = vmax.f32 %v2281, 0.0
  %v3618 = vmax.f32 %v2284, 0.0
  %v3619 = vmax.f32 %v2289, 0.0
  %v3620 = vmax.f32 %v2292, 0.0
  %v3621 = vmax.f32 %v2297, 0.0
  %v3622 = vmax.f32 %v2300, 0.0
  %v3623 = vmax.f32 %v2305, 0.0
  %v3624 = vmax.f32 %v2308, 0.0
  %v3625 = vmax.f32 %v2313, 0.0
  %v3626 = vmax.f32 %v2316, 0.0
  %v3627 = vmax.f32 %v2321, 0.0
  %v3628 = vmax.f32 %v2324, 0.0
  %v3629 = vmax.f32 %v2329, 0.0
  %v3630 = vmax.f32 %v2332, 0.0
  %v3631 = vmax.f32 %v2337, 0.0
  %v3632 = vmax.f32 %v2340, 0.0
  %v3633 = vmax.f32 %v2345, 0.0
  %v3634 = vmax.f32 %v2348, 0.0
  %v3635 = vmax.f32 %v2353, 0.0
  %v3636 = vmax.f32 %v2356, 0.0
  %v3637 = vmax.f32 %v2361, 0.0
  %v3638 = vmax.f32 %v2364, 0.0
  %v3639 = vmax.f32 %v2369, 0.0
  %v3640 = vmax.f32 %v2372, 0.0
  %v3641 = vmax.f32 %v2377, 0.0
  %v3642 = vmax.f32 %v2380, 0.0
  %v3643 = vmax.f32 %v2385, 0.0
  %v3644 = vmax.f32 %v2388, 0.0
  %v3645 = vmax.f32 %v2393, 0.0
  %v3646 = vmax.f32 %v2396, 0.0
  %v3647 = vmax.f32 %v2401, 0.0
  %v3648 = vmax.f32 %v2404, 0.0
  %v3649 = vmax.f32 %v2409, 0.0
  %v3650 = vmax.f32 %v2412, 0.0
  %v3651 = vmax.f32 %v2417, 0.0
  %v3652 = vmax.f32 %v2420, 0.0
  %v3653 = vmax.f32 %v2425, 0.0
  %v3654 = vmax.f32 %v2428, 0.0
  %v3655 = vmax.f32 %v2433, 0.0
  %v3656 = vmax.f32 %v2436, 0.0
  %v3657 = vmax.f32 %v2441, 0.0
  %v3658 = vmax.f32 %v2444, 0.0
  %v3659 = vmax.f32 %v2449, 0.0
  %v3660 = vmax.f32 %v2452, 0.0
  %v3661 = vmax.f32 %v2457, 0.0
  %v3662 = vmax.f32 %v2460, 0.0
  %v3663 = vmax.f32 %v2465, 0.0
  %v3664 = vmax.f32 %v2468, 0.0
  %v3665 = vmax.f32 %v2473, 0.0
  %v3666 = vmax.f32 %v2476, 0.0
  %v3667 = vmax.f32 %v2481, 0.0
  %v3668 = vmax.f32 %v2484, 0.0
  %v3669 = vmax.f32 %v2489, 0.0
  %v3670 = vmax.f32 %v2492, 0.0
  %v3671 = vmax.f32 %v2497, 0.0
  %v3672 = vmax.f32 %v2500, 0.0
  %v3673 = vmax.f32 %v2505, 0.0
  %v3674 = vmax.f32 %v2508, 0.0
  %v3675 = vmax.f32 %v2513, 0.0
  %v3676 = vmax.f32 %v2516, 0.0
  %v3677 = vmax.f32 %v2521, 0.0
  %v3678 = vmax.f32 %v2524, 0.0
  %v3679 = vmax.f32 %v2529, 0.0
  %v3680 = vmax.f32 %v2532, 0.0
  %v3681 = vmax.f32 %v2537, 0.0
  %v3682 = vmax.f32 %v2540, 0.0
  %v3683 = vmax.f32 %v2545, 0.0
  %v3684 = vmax.f32 %v2548, 0.0
  %v3685 = vmax.f32 %v2553, 0.0
  %v3686 = vmax.f32 %v2556, 0.0
  %v3687 = vmax.f32 %v2561, 0.0
  %v3688 = vmax.f32 %v2564, 0.0
  %v3689 = vmax.f32 %v2569, 0.0
  %v3690 = vmax.f32 %v2572, 0.0
  %v3691 = vmax.f32 %v2577, 0.0
  %v3692 = vmax.f32 %v2580, 0.0
  %v3693 = vmax.f32 %v2585, 0.0
  %v3694 = vmax.f32 %v2588, 0.0
  %v3695 = vmax.f32 %v2593, 0.0
  %v3696 = vmax.f32 %v2596, 0.0
  %v3697 = vmax.f32 %v2601, 0.0
  %v3698 = vmax.f32 %v2604, 0.0
  %v3699 = vmax.f32 %v2609, 0.0
  %v3700 = vmax.f32 %v2612, 0.0
  %v3701 = vmax.f32 %v2617, 0.0
  %v3702 = vmax.f32 %v2620, 0.0
  %v3703 = vmax.f32 %v2625, 0.0
  %v3704 = vmax.f32 %v2628, 0.0
  %v3705 = vmax.f32 %v2633, 0.0
  %v3706 = vmax.f32 %v2636, 0.0
  %v3707 = vmax.f32 %v2641, 0.0
  %v3708 = vmax.f32 %v2644, 0.0
  %v3709 = vmax.f32 %v2649, 0.0
  %v3710 = vmax.f32 %v2652, 0.0
  %v3711 = vmax.f32 %v2657, 0.0
  %v3712 = vmax.f32 %v2660, 0.0
  %v3713 = vmax.f32 %v2665, 0.0
  %v3714 = vmax.f32 %v2668, 0.0
  %v3715 = vmax.f32 %v2673, 0.0
  %v3716 = vmax.f32 %v2676, 0.0
  %v3717 = vmax.f32 %v2681, 0.0
  %v3718 = vmax.f32 %v2684, 0.0
  %v3719 = vmax.f32 %v2689, 0.0
  %v3720 = vmax.f32 %v2692, 0.0
  %v3721 = vmax.f32 %v2697, 0.0
  %v3722 = vmax.f32 %v2700, 0.0
  %v3723 = vmax.f32 %v2705, 0.0
  %v3724 = vmax.f32 %v2708, 0.0
  %v3725 = vmax.f32 %v2713, 0.0
  %v3726 = vmax.f32 %v2716, 0.0
  %v3727 = vmax.f32 %v2721, 0.0
  %v3728 = vmax.f32 %v2724, 0.0
  %v3729 = vmax.f32 %v2729, 0.0
  %v3730 = vmax.f32 %v2732, 0.0
  %v3731 = vmax.f32 %v2737, 0.0
  %v3732 = vmax.f32 %v2740, 0.0
  %v3733 = vmax.f32 %v2745, 0.0
  %v3734 = vmax.f32 %v2748, 0.0
  %v3735 = vmax.f32 %v2753, 0.0
  %v3736 = vmax.f32 %v2756, 0.0
  %v3737 = vmax.f32 %v2761, 0.0
  %v3738 = vmax.f32 %v2764, 0.0
  %v3739 = vmax.f32 %v2769, 0.0
  %v3740 = vmax.f32 %v2772, 0.0
  %v3741 = vmax.f32 %v2777, 0.0
  %v3742 = vmax.f32 %v2780, 0.0
  %v3743 = vmax.f32 %v2785, 0.0
  %v3744 = vmax.f32 %v2788, 0.0
  %v3745 = vmax.f32 %v2793, 0.0
  %v3746 = vmax.f32 %v2796, 0.0
  %v3747 = vmax.f32 %v2801, 0.0
  %v3748 = vmax.f32 %v2804, 0.0
  %v3749 = vmax.f32 %v2809, 0.0
  %v3750 = vmax.f32 %v2812, 0.0
  %v3751 = vmax.f32 %v2817, 0.0
  %v3752 = vmax.f32 %v2820, 0.0
  %v3753 = vmax.f32 %v2825, 0.0
  %v3754 = vmax.f32 %v2828, 0.0
  %v3755 = vmax.f32 %v2833, 0.0
  %v3756 = vmax.f32 %v2836, 0.0
  %v3757 = vmax.f32 %v2841, 0.0
  %v3758 = vmax.f32 %v2844, 0.0
  %v3759 = vmax.f32 %v2849, 0.0
  %v3760 = vmax.f32 %v2852, 0.0
  %v3761 = vmax.f32 %v2857, 0.0
  %v3762 = vmax.f32 %v2860, 0.0
  %v3763 = vmax.f32 %v2865, 0.0
  %v3764 = vmax.f32 %v2868, 0.0
  %v3765 = vmax.f32 %v2873, 0.0
  %v3766 = vmax.f32 %v2876, 0.0
  %v3767 = vmax.f32 %v2881, 0.0
  %v3768 = vmax.f32 %v2884, 0.0
  %v3769 = vmax.f32 %v2889, 0.0
  %v3770 = vmax.f32 %v2892, 0.0
  %v3771 = vmax.f32 %v2897, 0.0
  %v3772 = vmax.f32 %v2900, 0.0
  %v3773 = vmax.f32 %v2905, 0.0
  %v3774 = vmax.f32 %v2908, 0.0
  %v3775 = vmax.f32 %v2913, 0.0
  %v3776 = vmax.f32 %v2916, 0.0
  %v3777 = vmax.f32 %v2921, 0.0
  %v3778 = vmax.f32 %v2924, 0.0
  %v3779 = vmax.f32 %v2929, 0.0
  %v3780 = vmax.f32 %v2932, 0.0
  %v3781 = vmax.f32 %v2937, 0.0
  %v3782 = vmax.f32 %v2940, 0.0
  %v3783 = vmax.f32 %v2945, 0.0
  %v3784 = vmax.f32 %v2948, 0.0
  %v3785 = vmax.f32 %v2953, 0.0
  %v3786 = vmax.f32 %v2956, 0.0
  %v3787 = vmax.f32 %v2961, 0.0
  %v3788 = vmax.f32 %v2964, 0.0
  %v3789 = vmax.f32 %v2969, 0.0
  %v3790 = vmax.f32 %v2972, 0.0
  %v3791 = vmax.f32 %v2977, 0.0
  %v3792 = vmax.f32 %v2980, 0.0
  %v3793 = vmax.f32 %v2985, 0.0
  %v3794 = vmax.f32 %v2988, 0.0
  %v3795 = vmax.f32 %v2993, 0.0
  %v3796 = vmax.f32 %v2996, 0.0
  %v3797 = vmax.f32 %v3001, 0.0
  %v3798 = vmax.f32 %v3004, 0.0
  %v3799 = vmax.f32 %v3009, 0.0
  %v3800 = vmax.f32 %v3012, 0.0
  %v3801 = vmax.f32 %v3017, 0.0
  %v3802 = vmax.f32 %v3020, 0.0
  %v3803 = vmax.f32 %v3025, 0.0
  %v3804 = vmax.f32 %v3028, 0.0
  %v3805 = vmax.f32 %v3033, 0.0
  %v3806 = vmax.f32 %v3036, 0.0
  %v3807 = vmax.f32 %v3041, 0.0
  %v3808 = vmax.f32 %v3044, 0.0
  %v3809 = vmax.f32 %v3049, 0.0
  %v3810 = vmax.f32 %v3052, 0.0
  %v3811 = vmax.f32 %v3057, 0.0
  %v3812 = vmax.f32 %v3060, 0.0
  %v3813 = vmax.f32 %v3065, 0.0
  %v3814 = vmax.f32 %v3068, 0.0
  %v3815 = vmax.f32 %v3073, 0.0
  %v3816 = vmax.f32 %v3076, 0.0
  %v3817 = vmax.f32 %v3081, 0.0
  %v3818 = vmax.f32 %v3084, 0.0
  %v3819 = vmax.f32 %v3089, 0.0
  %v3820 = vmax.f32 %v3092, 0.0
  %v3821 = vmax.f32 %v3097, 0.0
  %v3822 = vmax.f32 %v3100, 0.0
  %v3823 = vmax.f32 %v3105, 0.0
  %v3824 = vmax.f32 %v3108, 0.0
  %v3825 = vmax.f32 %v3113, 0.0
  %v3826 = vmax.f32 %v3116, 0.0
  %v3827 = vmax.f32 %v3121, 0.0
  %v3828 = vmax.f32 %v3124, 0.0
  %v3829 = vmax.f32 %v3129, 0.0
  %v3830 = vmax.f32 %v3132, 0.0
  %v3831 = vmax.f32 %v3137, 0.0
  %v3832 = vmax.f32 %v3140, 0.0
  %v3833 = vmax.f32 %v3145, 0.0
  %v3834 = vmax.f32 %v3148, 0.0
  %v3835 = vmax.f32 %v3153, 0.0
  %v3836 = vmax.f32 %v3156, 0.0
  %v3837 = vmax.f32 %v3161, 0.0
  %v3838 = vmax.f32 %v3164, 0.0
  %v3839 = vmax.f32 %v3169, 0.0
  %v3840 = vmax.f32 %v3172, 0.0
  %v3841 = vmax.f32 %v3177, 0.0
  %v3842 = vmax.f32 %v3180, 0.0
  %v3843 = vmax.f32 %v3185, 0.0
  %v3844 = vmax.f32 %v3188, 0.0
  %v3845 = vmax.f32 %v3193, 0.0
  %v3846 = vmax.f32 %v3196, 0.0
  %v3847 = vmax.f32 %v3201, 0.0
  %v3848 = vmax.f32 %v3204, 0.0
  %v3849 = vmax.f32 %v3209, 0.0
  %v3850 = vmax.f32 %v3212, 0.0
  %v3851 = vmax.f32 %v3217, 0.0
  %v3852 = vmax.f32 %v3220, 0.0
  %v3853 = vmax.f32 %v3225, 0.0
  %v3854 = vmax.f32 %v3228, 0.0
  %v3855 = vmax.f32 %v3233, 0.0
  %v3856 = vmax.f32 %v3236, 0.0
  %v3857 = vmax.f32 %v3241, 0.0
  %v3858 = vmax.f32 %v3244, 0.0
  %v3859 = vmax.f32 %v3249, 0.0
  %v3860 = vmax.f32 %v3252, 0.0
  %v3861 = vmax.f32 %v3257, 0.0
  %v3862 = vmax.f32 %v3260, 0.0
  %v3863 = vmax.f32 %v3265, 0.0
  %v3864 = vmax.f32 %v3268, 0.0
  %v3865 = vmax.f32 %v3273, 0.0
  %v3866 = vmax.f32 %v3276, 0.0
  %v3867 = vmax.f32 %v3281, 0.0
  %v3868 = vmax.f32 %v3284, 0.0
  %v3869 = vmax.f32 %v3289, 0.0
  %v3870 = vmax.f32 %v3292, 0.0
  %v3871 = vmax.f32 %v3297, 0.0
  %v3872 = vmax.f32 %v3300, 0.0
  %v3873 = vmax.f32 %v3305, 0.0
  %v3874 = vmax.f32 %v3308, 0.0
  %v3875 = vmax.f32 %v3313, 0.0
  %v3876 = vmax.f32 %v3316, 0.0
  %v3877 = vmax.f32 %v3321, 0.0
  %v3878 = vmax.f32 %v3324, 0.0
  %v3879 = vmax.f32 %v3329, 0.0
  %v3880 = vmax.f32 %v3332, 0.0
  %v3881 = vmax.f32 %v3337, 0.0
  %v3882 = vmax.f32 %v3340, 0.0
  %v3883 = vmax.f32 %v3345, 0.0
  %v3884 = vmax.f32 %v3348, 0.0
  %v3885 = vmax.f32 %v3353, 0.0
  %v3886 = vmax.f32 %v3356, 0.0
  %v3887 = vmax.f32 %v3361, 0.0
  %v3888 = vmax.f32 %v3364, 0.0
  %v3889 = vmax.f32 %v3369, 0.0
  %v3890 = vmax.f32 %v3372, 0.0
  %v3891 = vmax.f32 %v3377, 0.0
  %v3892 = vmax.f32 %v3380, 0.0
  %v3893 = vmax.f32 %v3385, 0.0
  %v3894 = vmax.f32 %v3388, 0.0
  %v3895 = vmax.f32 %v3393, 0.0
  %v3896 = vmax.f32 %v3396, 0.0
  %v3897 = vmax.f32 %v3401, 0.0
  %v3898 = vmax.f32 %v3404, 0.0
  %v3899 = vmax.f32 %v3409, 0.0
  %v3900 = vmax.f32 %v3412, 0.0
  %v3901 = vmax.f32 %v3417, 0.0
  %v3902 = vmax.f32 %v3420, 0.0
  %v3903 = vmax.f32 %v3425, 0.0
  %v3904 = vmax.f32 %v3428, 0.0
  %v3905 = vmax.f32 %v3433, 0.0
  %v3906 = vmax.f32 %v3436, 0.0
  %v3907 = vmax.f32 %v3441, 0.0
  %v3908 = vmax.f32 %v3444, 0.0
  %v3909 = vmax.f32 %v3449, 0.0
  %v3910 = vmax.f32 %v3452, 0.0
  %v3911 = vmax.f32 %v3457, 0.0
  %v3912 = vmax.f32 %v3460, 0.0
  %v3913 = vmax.f32 %v3465, 0.0
  %v3914 = vmax.f32 %v3468, 0.0
  %v3915 = vmax.f32 %v3473, 0.0
  %v3916 = vmax.f32 %v3476, 0.0
  %v3917 = vmax.f32 %v3481, 0.0
  %v3918 = vmax.f32 %v3484, 0.0
  %v3919 = vmax.f32 %v3489, 0.0
  %v3920 = vmax.f32 %v3492, 0.0
  %v3921 = vmax.f32 %v3497, 0.0
  %v3922 = vmax.f32 %v3500, 0.0
  %v3923 = vmax.f32 %v3505, 0.0
  %v3924 = vmax.f32 %v3508, 0.0
  %v3925 = vmax.f32 %v3513, 0.0
  %v3926 = vmax.f32 %v3516, 0.0
  %v3927 = vmax.f32 %v3521, 0.0
  %v3928 = vmax.f32 %v3524, 0.0
  %v3929 = vmax.f32 %v3529, 0.0
  %v3930 = vmax.f32 %v3532, 0.0
  %v3931 = vmax.f32 %v3537, 0.0
  %v3932 = vmax.f32 %v3540, 0.0
  %v3933 = vmax.f32 %v3545, 0.0
  %v3934 = vmax.f32 %v3548, 0.0
  %vm3935 = vcmask 130048
  %v3936 = vsel %vm3935, %v3551, 0.0
  %v3937 = vsel %vm3935, %v3552, 0.0
  %v3938 = vadd.f32 %v3936, %v3937
  %v3939 = vsel %vm3935, %v3553, 0.0
  %v3940 = vadd.f32 %v3938, %v3939
  %v3941 = vsel %vm3935, %v3554, 0.0
  %v3942 = vadd.f32 %v3940, %v3941
  %v3943 = vsel %vm3935, %v3555, 0.0
  %v3944 = vadd.f32 %v3942, %v3943
  %v3945 = vsel %vm3935, %v3556, 0.0
  %v3946 = vadd.f32 %v3944, %v3945
  %v3947 = vsel %vm3935, %v3557, 0.0
  %v3948 = vadd.f32 %v3946, %v3947
  %v3949 = vsel %vm3935, %v3558, 0.0
  %v3950 = vadd.f32 %v3948, %v3949
  %v3951 = vsel %vm3935, %v3559, 0.0
  %v3952 = vadd.f32 %v3950, %v3951
  %v3953 = vsel %vm3935, %v3560, 0.0
  %v3954 = vadd.f32 %v3952, %v3953
  %v3955 = vsel %vm3935, %v3561, 0.0
  %v3956 = vadd.f32 %v3954, %v3955
  %v3957 = vsel %vm3935, %v3562, 0.0
  %v3958 = vadd.f32 %v3956, %v3957
  %v3959 = vsel %vm3935, %v3563, 0.0
  %v3960 = vadd.f32 %v3958, %v3959
  %v3961 = vsel %vm3935, %v3564, 0.0
  %v3962 = vadd.f32 %v3960, %v3961
  %v3963 = vsel %vm3935, %v3565, 0.0
  %v3964 = vadd.f32 %v3962, %v3963
  %v3965 = vsel %vm3935, %v3566, 0.0
  %v3966 = vadd.f32 %v3964, %v3965
  %v3967 = vsel %vm3935, %v3567, 0.0
  %v3968 = vadd.f32 %v3966, %v3967
  %v3969 = vsel %vm3935, %v3568, 0.0
  %v3970 = vadd.f32 %v3968, %v3969
  %v3971 = vsel %vm3935, %v3569, 0.0
  %v3972 = vadd.f32 %v3970, %v3971
  %v3973 = vsel %vm3935, %v3570, 0.0
  %v3974 = vadd.f32 %v3972, %v3973
  %v3975 = vsel %vm3935, %v3571, 0.0
  %v3976 = vadd.f32 %v3974, %v3975
  %v3977 = vsel %vm3935, %v3572, 0.0
  %v3978 = vadd.f32 %v3976, %v3977
  %v3979 = vsel %vm3935, %v3573, 0.0
  %v3980 = vadd.f32 %v3978, %v3979
  %v3981 = vsel %vm3935, %v3574, 0.0
  %v3982 = vadd.f32 %v3980, %v3981
  %v3983 = vsel %vm3935, %v3575, 0.0
  %v3984 = vadd.f32 %v3982, %v3983
  %v3985 = vsel %vm3935, %v3576, 0.0
  %v3986 = vadd.f32 %v3984, %v3985
  %v3987 = vsel %vm3935, %v3577, 0.0
  %v3988 = vadd.f32 %v3986, %v3987
  %v3989 = vsel %vm3935, %v3578, 0.0
  %v3990 = vadd.f32 %v3988, %v3989
  %v3991 = vsel %vm3935, %v3579, 0.0
  %v3992 = vadd.f32 %v3990, %v3991
  %v3993 = vsel %vm3935, %v3580, 0.0
  %v3994 = vadd.f32 %v3992, %v3993
  %v3995 = vsel %vm3935, %v3581, 0.0
  %v3996 = vadd.f32 %v3994, %v3995
  %v3997 = vsel %vm3935, %v3582, 0.0
  %v3998 = vadd.f32 %v3996, %v3997
  %v3999 = vrot.slane %v3998, 4
  %v4000 = vadd.f32 %v3998, %v3999
  %v4001 = vrot.slane %v4000, 2
  %v4002 = vadd.f32 %v4000, %v4001
  %v4003 = vrot.slane %v4002, 1
  %v4004 = vadd.f32 %v4002, %v4003
  %v4005 = vsel %vm3935, %v3583, 0.0
  %v4006 = vsel %vm3935, %v3584, 0.0
  %v4007 = vadd.f32 %v4005, %v4006
  %v4008 = vsel %vm3935, %v3585, 0.0
  %v4009 = vadd.f32 %v4007, %v4008
  %v4010 = vsel %vm3935, %v3586, 0.0
  %v4011 = vadd.f32 %v4009, %v4010
  %v4012 = vsel %vm3935, %v3587, 0.0
  %v4013 = vadd.f32 %v4011, %v4012
  %v4014 = vsel %vm3935, %v3588, 0.0
  %v4015 = vadd.f32 %v4013, %v4014
  %v4016 = vsel %vm3935, %v3589, 0.0
  %v4017 = vadd.f32 %v4015, %v4016
  %v4018 = vsel %vm3935, %v3590, 0.0
  %v4019 = vadd.f32 %v4017, %v4018
  %v4020 = vsel %vm3935, %v3591, 0.0
  %v4021 = vadd.f32 %v4019, %v4020
  %v4022 = vsel %vm3935, %v3592, 0.0
  %v4023 = vadd.f32 %v4021, %v4022
  %v4024 = vsel %vm3935, %v3593, 0.0
  %v4025 = vadd.f32 %v4023, %v4024
  %v4026 = vsel %vm3935, %v3594, 0.0
  %v4027 = vadd.f32 %v4025, %v4026
  %v4028 = vsel %vm3935, %v3595, 0.0
  %v4029 = vadd.f32 %v4027, %v4028
  %v4030 = vsel %vm3935, %v3596, 0.0
  %v4031 = vadd.f32 %v4029, %v4030
  %v4032 = vsel %vm3935, %v3597, 0.0
  %v4033 = vadd.f32 %v4031, %v4032
  %v4034 = vsel %vm3935, %v3598, 0.0
  %v4035 = vadd.f32 %v4033, %v4034
  %v4036 = vsel %vm3935, %v3599, 0.0
  %v4037 = vadd.f32 %v4035, %v4036
  %v4038 = vsel %vm3935, %v3600, 0.0
  %v4039 = vadd.f32 %v4037, %v4038
  %v4040 = vsel %vm3935, %v3601, 0.0
  %v4041 = vadd.f32 %v4039, %v4040
  %v4042 = vsel %vm3935, %v3602, 0.0
  %v4043 = vadd.f32 %v4041, %v4042
  %v4044 = vsel %vm3935, %v3603, 0.0
  %v4045 = vadd.f32 %v4043, %v4044
  %v4046 = vsel %vm3935, %v3604, 0.0
  %v4047 = vadd.f32 %v4045, %v4046
  %v4048 = vsel %vm3935, %v3605, 0.0
  %v4049 = vadd.f32 %v4047, %v4048
  %v4050 = vsel %vm3935, %v3606, 0.0
  %v4051 = vadd.f32 %v4049, %v4050
  %v4052 = vsel %vm3935, %v3607, 0.0
  %v4053 = vadd.f32 %v4051, %v4052
  %v4054 = vsel %vm3935, %v3608, 0.0
  %v4055 = vadd.f32 %v4053, %v4054
  %v4056 = vsel %vm3935, %v3609, 0.0
  %v4057 = vadd.f32 %v4055, %v4056
  %v4058 = vsel %vm3935, %v3610, 0.0
  %v4059 = vadd.f32 %v4057, %v4058
  %v4060 = vsel %vm3935, %v3611, 0.0
  %v4061 = vadd.f32 %v4059, %v4060
  %v4062 = vsel %vm3935, %v3612, 0.0
  %v4063 = vadd.f32 %v4061, %v4062
  %v4064 = vsel %vm3935, %v3613, 0.0
  %v4065 = vadd.f32 %v4063, %v4064
  %v4066 = vsel %vm3935, %v3614, 0.0
  %v4067 = vadd.f32 %v4065, %v4066
  %v4068 = vrot.slane %v4067, 4
  %v4069 = vadd.f32 %v4067, %v4068
  %v4070 = vrot.slane %v4069, 2
  %v4071 = vadd.f32 %v4069, %v4070
  %v4072 = vrot.slane %v4071, 1
  %v4073 = vadd.f32 %v4071, %v4072
  %v4074 = vsel %vm3935, %v3615, 0.0
  %v4075 = vsel %vm3935, %v3616, 0.0
  %v4076 = vadd.f32 %v4074, %v4075
  %v4077 = vsel %vm3935, %v3617, 0.0
  %v4078 = vadd.f32 %v4076, %v4077
  %v4079 = vsel %vm3935, %v3618, 0.0
  %v4080 = vadd.f32 %v4078, %v4079
  %v4081 = vsel %vm3935, %v3619, 0.0
  %v4082 = vadd.f32 %v4080, %v4081
  %v4083 = vsel %vm3935, %v3620, 0.0
  %v4084 = vadd.f32 %v4082, %v4083
  %v4085 = vsel %vm3935, %v3621, 0.0
  %v4086 = vadd.f32 %v4084, %v4085
  %v4087 = vsel %vm3935, %v3622, 0.0
  %v4088 = vadd.f32 %v4086, %v4087
  %v4089 = vsel %vm3935, %v3623, 0.0
  %v4090 = vadd.f32 %v4088, %v4089
  %v4091 = vsel %vm3935, %v3624, 0.0
  %v4092 = vadd.f32 %v4090, %v4091
  %v4093 = vsel %vm3935, %v3625, 0.0
  %v4094 = vadd.f32 %v4092, %v4093
  %v4095 = vsel %vm3935, %v3626, 0.0
  %v4096 = vadd.f32 %v4094, %v4095
  %v4097 = vsel %vm3935, %v3627, 0.0
  %v4098 = vadd.f32 %v4096, %v4097
  %v4099 = vsel %vm3935, %v3628, 0.0
  %v4100 = vadd.f32 %v4098, %v4099
  %v4101 = vsel %vm3935, %v3629, 0.0
  %v4102 = vadd.f32 %v4100, %v4101
  %v4103 = vsel %vm3935, %v3630, 0.0
  %v4104 = vadd.f32 %v4102, %v4103
  %v4105 = vsel %vm3935, %v3631, 0.0
  %v4106 = vadd.f32 %v4104, %v4105
  %v4107 = vsel %vm3935, %v3632, 0.0
  %v4108 = vadd.f32 %v4106, %v4107
  %v4109 = vsel %vm3935, %v3633, 0.0
  %v4110 = vadd.f32 %v4108, %v4109
  %v4111 = vsel %vm3935, %v3634, 0.0
  %v4112 = vadd.f32 %v4110, %v4111
  %v4113 = vsel %vm3935, %v3635, 0.0
  %v4114 = vadd.f32 %v4112, %v4113
  %v4115 = vsel %vm3935, %v3636, 0.0
  %v4116 = vadd.f32 %v4114, %v4115
  %v4117 = vsel %vm3935, %v3637, 0.0
  %v4118 = vadd.f32 %v4116, %v4117
  %v4119 = vsel %vm3935, %v3638, 0.0
  %v4120 = vadd.f32 %v4118, %v4119
  %v4121 = vsel %vm3935, %v3639, 0.0
  %v4122 = vadd.f32 %v4120, %v4121
  %v4123 = vsel %vm3935, %v3640, 0.0
  %v4124 = vadd.f32 %v4122, %v4123
  %v4125 = vsel %vm3935, %v3641, 0.0
  %v4126 = vadd.f32 %v4124, %v4125
  %v4127 = vsel %vm3935, %v3642, 0.0
  %v4128 = vadd.f32 %v4126, %v4127
  %v4129 = vsel %vm3935, %v3643, 0.0
  %v4130 = vadd.f32 %v4128, %v4129
  %v4131 = vsel %vm3935, %v3644, 0.0
  %v4132 = vadd.f32 %v4130, %v4131
  %v4133 = vsel %vm3935, %v3645, 0.0
  %v4134 = vadd.f32 %v4132, %v4133
  %v4135 = vsel %vm3935, %v3646, 0.0
  %v4136 = vadd.f32 %v4134, %v4135
  %v4137 = vrot.slane %v4136, 4
  %v4138 = vadd.f32 %v4136, %v4137
  %v4139 = vrot.slane %v4138, 2
  %v4140 = vadd.f32 %v4138, %v4139
  %v4141 = vrot.slane %v4140, 1
  %v4142 = vadd.f32 %v4140, %v4141
  %v4143 = vsel %vm3935, %v3647, 0.0
  %v4144 = vsel %vm3935, %v3648, 0.0
  %v4145 = vadd.f32 %v4143, %v4144
  %v4146 = vsel %vm3935, %v3649, 0.0
  %v4147 = vadd.f32 %v4145, %v4146
  %v4148 = vsel %vm3935, %v3650, 0.0
  %v4149 = vadd.f32 %v4147, %v4148
  %v4150 = vsel %vm3935, %v3651, 0.0
  %v4151 = vadd.f32 %v4149, %v4150
  %v4152 = vsel %vm3935, %v3652, 0.0
  %v4153 = vadd.f32 %v4151, %v4152
  %v4154 = vsel %vm3935, %v3653, 0.0
  %v4155 = vadd.f32 %v4153, %v4154
  %v4156 = vsel %vm3935, %v3654, 0.0
  %v4157 = vadd.f32 %v4155, %v4156
  %v4158 = vsel %vm3935, %v3655, 0.0
  %v4159 = vadd.f32 %v4157, %v4158
  %v4160 = vsel %vm3935, %v3656, 0.0
  %v4161 = vadd.f32 %v4159, %v4160
  %v4162 = vsel %vm3935, %v3657, 0.0
  %v4163 = vadd.f32 %v4161, %v4162
  %v4164 = vsel %vm3935, %v3658, 0.0
  %v4165 = vadd.f32 %v4163, %v4164
  %v4166 = vsel %vm3935, %v3659, 0.0
  %v4167 = vadd.f32 %v4165, %v4166
  %v4168 = vsel %vm3935, %v3660, 0.0
  %v4169 = vadd.f32 %v4167, %v4168
  %v4170 = vsel %vm3935, %v3661, 0.0
  %v4171 = vadd.f32 %v4169, %v4170
  %v4172 = vsel %vm3935, %v3662, 0.0
  %v4173 = vadd.f32 %v4171, %v4172
  %v4174 = vsel %vm3935, %v3663, 0.0
  %v4175 = vadd.f32 %v4173, %v4174
  %v4176 = vsel %vm3935, %v3664, 0.0
  %v4177 = vadd.f32 %v4175, %v4176
  %v4178 = vsel %vm3935, %v3665, 0.0
  %v4179 = vadd.f32 %v4177, %v4178
  %v4180 = vsel %vm3935, %v3666, 0.0
  %v4181 = vadd.f32 %v4179, %v4180
  %v4182 = vsel %vm3935, %v3667, 0.0
  %v4183 = vadd.f32 %v4181, %v4182
  %v4184 = vsel %vm3935, %v3668, 0.0
  %v4185 = vadd.f32 %v4183, %v4184
  %v4186 = vsel %vm3935, %v3669, 0.0
  %v4187 = vadd.f32 %v4185, %v4186
  %v4188 = vsel %vm3935, %v3670, 0.0
  %v4189 = vadd.f32 %v4187, %v4188
  %v4190 = vsel %vm3935, %v3671, 0.0
  %v4191 = vadd.f32 %v4189, %v4190
  %v4192 = vsel %vm3935, %v3672, 0.0
  %v4193 = vadd.f32 %v4191, %v4192
  %v4194 = vsel %vm3935, %v3673, 0.0
  %v4195 = vadd.f32 %v4193, %v4194
  %v4196 = vsel %vm3935, %v3674, 0.0
  %v4197 = vadd.f32 %v4195, %v4196
  %v4198 = vsel %vm3935, %v3675, 0.0
  %v4199 = vadd.f32 %v4197, %v4198
  %v4200 = vsel %vm3935, %v3676, 0.0
  %v4201 = vadd.f32 %v4199, %v4200
  %v4202 = vsel %vm3935, %v3677, 0.0
  %v4203 = vadd.f32 %v4201, %v4202
  %v4204 = vsel %vm3935, %v3678, 0.0
  %v4205 = vadd.f32 %v4203, %v4204
  %v4206 = vrot.slane %v4205, 4
  %v4207 = vadd.f32 %v4205, %v4206
  %v4208 = vrot.slane %v4207, 2
  %v4209 = vadd.f32 %v4207, %v4208
  %v4210 = vrot.slane %v4209, 1
  %v4211 = vadd.f32 %v4209, %v4210
  %v4212 = vsel %vm3935, %v3679, 0.0
  %v4213 = vsel %vm3935, %v3680, 0.0
  %v4214 = vadd.f32 %v4212, %v4213
  %v4215 = vsel %vm3935, %v3681, 0.0
  %v4216 = vadd.f32 %v4214, %v4215
  %v4217 = vsel %vm3935, %v3682, 0.0
  %v4218 = vadd.f32 %v4216, %v4217
  %v4219 = vsel %vm3935, %v3683, 0.0
  %v4220 = vadd.f32 %v4218, %v4219
  %v4221 = vsel %vm3935, %v3684, 0.0
  %v4222 = vadd.f32 %v4220, %v4221
  %v4223 = vsel %vm3935, %v3685, 0.0
  %v4224 = vadd.f32 %v4222, %v4223
  %v4225 = vsel %vm3935, %v3686, 0.0
  %v4226 = vadd.f32 %v4224, %v4225
  %v4227 = vsel %vm3935, %v3687, 0.0
  %v4228 = vadd.f32 %v4226, %v4227
  %v4229 = vsel %vm3935, %v3688, 0.0
  %v4230 = vadd.f32 %v4228, %v4229
  %v4231 = vsel %vm3935, %v3689, 0.0
  %v4232 = vadd.f32 %v4230, %v4231
  %v4233 = vsel %vm3935, %v3690, 0.0
  %v4234 = vadd.f32 %v4232, %v4233
  %v4235 = vsel %vm3935, %v3691, 0.0
  %v4236 = vadd.f32 %v4234, %v4235
  %v4237 = vsel %vm3935, %v3692, 0.0
  %v4238 = vadd.f32 %v4236, %v4237
  %v4239 = vsel %vm3935, %v3693, 0.0
  %v4240 = vadd.f32 %v4238, %v4239
  %v4241 = vsel %vm3935, %v3694, 0.0
  %v4242 = vadd.f32 %v4240, %v4241
  %v4243 = vsel %vm3935, %v3695, 0.0
  %v4244 = vadd.f32 %v4242, %v4243
  %v4245 = vsel %vm3935, %v3696, 0.0
  %v4246 = vadd.f32 %v4244, %v4245
  %v4247 = vsel %vm3935, %v3697, 0.0
  %v4248 = vadd.f32 %v4246, %v4247
  %v4249 = vsel %vm3935, %v3698, 0.0
  %v4250 = vadd.f32 %v4248, %v4249
  %v4251 = vsel %vm3935, %v3699, 0.0
  %v4252 = vadd.f32 %v4250, %v4251
  %v4253 = vsel %vm3935, %v3700, 0.0
  %v4254 = vadd.f32 %v4252, %v4253
  %v4255 = vsel %vm3935, %v3701, 0.0
  %v4256 = vadd.f32 %v4254, %v4255
  %v4257 = vsel %vm3935, %v3702, 0.0
  %v4258 = vadd.f32 %v4256, %v4257
  %v4259 = vsel %vm3935, %v3703, 0.0
  %v4260 = vadd.f32 %v4258, %v4259
  %v4261 = vsel %vm3935, %v3704, 0.0
  %v4262 = vadd.f32 %v4260, %v4261
  %v4263 = vsel %vm3935, %v3705, 0.0
  %v4264 = vadd.f32 %v4262, %v4263
  %v4265 = vsel %vm3935, %v3706, 0.0
  %v4266 = vadd.f32 %v4264, %v4265
  %v4267 = vsel %vm3935, %v3707, 0.0
  %v4268 = vadd.f32 %v4266, %v4267
  %v4269 = vsel %vm3935, %v3708, 0.0
  %v4270 = vadd.f32 %v4268, %v4269
  %v4271 = vsel %vm3935, %v3709, 0.0
  %v4272 = vadd.f32 %v4270, %v4271
  %v4273 = vsel %vm3935, %v3710, 0.0
  %v4274 = vadd.f32 %v4272, %v4273
  %v4275 = vrot.slane %v4274, 4
  %v4276 = vadd.f32 %v4274, %v4275
  %v4277 = vrot.slane %v4276, 2
  %v4278 = vadd.f32 %v4276, %v4277
  %v4279 = vrot.slane %v4278, 1
  %v4280 = vadd.f32 %v4278, %v4279
  %v4281 = vsel %vm3935, %v3711, 0.0
  %v4282 = vsel %vm3935, %v3712, 0.0
  %v4283 = vadd.f32 %v4281, %v4282
  %v4284 = vsel %vm3935, %v3713, 0.0
  %v4285 = vadd.f32 %v4283, %v4284
  %v4286 = vsel %vm3935, %v3714, 0.0
  %v4287 = vadd.f32 %v4285, %v4286
  %v4288 = vsel %vm3935, %v3715, 0.0
  %v4289 = vadd.f32 %v4287, %v4288
  %v4290 = vsel %vm3935, %v3716, 0.0
  %v4291 = vadd.f32 %v4289, %v4290
  %v4292 = vsel %vm3935, %v3717, 0.0
  %v4293 = vadd.f32 %v4291, %v4292
  %v4294 = vsel %vm3935, %v3718, 0.0
  %v4295 = vadd.f32 %v4293, %v4294
  %v4296 = vsel %vm3935, %v3719, 0.0
  %v4297 = vadd.f32 %v4295, %v4296
  %v4298 = vsel %vm3935, %v3720, 0.0
  %v4299 = vadd.f32 %v4297, %v4298
  %v4300 = vsel %vm3935, %v3721, 0.0
  %v4301 = vadd.f32 %v4299, %v4300
  %v4302 = vsel %vm3935, %v3722, 0.0
  %v4303 = vadd.f32 %v4301, %v4302
  %v4304 = vsel %vm3935, %v3723, 0.0
  %v4305 = vadd.f32 %v4303, %v4304
  %v4306 = vsel %vm3935, %v3724, 0.0
  %v4307 = vadd.f32 %v4305, %v4306
  %v4308 = vsel %vm3935, %v3725, 0.0
  %v4309 = vadd.f32 %v4307, %v4308
  %v4310 = vsel %vm3935, %v3726, 0.0
  %v4311 = vadd.f32 %v4309, %v4310
  %v4312 = vsel %vm3935, %v3727, 0.0
  %v4313 = vadd.f32 %v4311, %v4312
  %v4314 = vsel %vm3935, %v3728, 0.0
  %v4315 = vadd.f32 %v4313, %v4314
  %v4316 = vsel %vm3935, %v3729, 0.0
  %v4317 = vadd.f32 %v4315, %v4316
  %v4318 = vsel %vm3935, %v3730, 0.0
  %v4319 = vadd.f32 %v4317, %v4318
  %v4320 = vsel %vm3935, %v3731, 0.0
  %v4321 = vadd.f32 %v4319, %v4320
  %v4322 = vsel %vm3935, %v3732, 0.0
  %v4323 = vadd.f32 %v4321, %v4322
  %v4324 = vsel %vm3935, %v3733, 0.0
  %v4325 = vadd.f32 %v4323, %v4324
  %v4326 = vsel %vm3935, %v3734, 0.0
  %v4327 = vadd.f32 %v4325, %v4326
  %v4328 = vsel %vm3935, %v3735, 0.0
  %v4329 = vadd.f32 %v4327, %v4328
  %v4330 = vsel %vm3935, %v3736, 0.0
  %v4331 = vadd.f32 %v4329, %v4330
  %v4332 = vsel %vm3935, %v3737, 0.0
  %v4333 = vadd.f32 %v4331, %v4332
  %v4334 = vsel %vm3935, %v3738, 0.0
  %v4335 = vadd.f32 %v4333, %v4334
  %v4336 = vsel %vm3935, %v3739, 0.0
  %v4337 = vadd.f32 %v4335, %v4336
  %v4338 = vsel %vm3935, %v3740, 0.0
  %v4339 = vadd.f32 %v4337, %v4338
  %v4340 = vsel %vm3935, %v3741, 0.0
  %v4341 = vadd.f32 %v4339, %v4340
  %v4342 = vsel %vm3935, %v3742, 0.0
  %v4343 = vadd.f32 %v4341, %v4342
  %v4344 = vrot.slane %v4343, 4
  %v4345 = vadd.f32 %v4343, %v4344
  %v4346 = vrot.slane %v4345, 2
  %v4347 = vadd.f32 %v4345, %v4346
  %v4348 = vrot.slane %v4347, 1
  %v4349 = vadd.f32 %v4347, %v4348
  %v4350 = vsel %vm3935, %v3743, 0.0
  %v4351 = vsel %vm3935, %v3744, 0.0
  %v4352 = vadd.f32 %v4350, %v4351
  %v4353 = vsel %vm3935, %v3745, 0.0
  %v4354 = vadd.f32 %v4352, %v4353
  %v4355 = vsel %vm3935, %v3746, 0.0
  %v4356 = vadd.f32 %v4354, %v4355
  %v4357 = vsel %vm3935, %v3747, 0.0
  %v4358 = vadd.f32 %v4356, %v4357
  %v4359 = vsel %vm3935, %v3748, 0.0
  %v4360 = vadd.f32 %v4358, %v4359
  %v4361 = vsel %vm3935, %v3749, 0.0
  %v4362 = vadd.f32 %v4360, %v4361
  %v4363 = vsel %vm3935, %v3750, 0.0
  %v4364 = vadd.f32 %v4362, %v4363
  %v4365 = vsel %vm3935, %v3751, 0.0
  %v4366 = vadd.f32 %v4364, %v4365
  %v4367 = vsel %vm3935, %v3752, 0.0
  %v4368 = vadd.f32 %v4366, %v4367
  %v4369 = vsel %vm3935, %v3753, 0.0
  %v4370 = vadd.f32 %v4368, %v4369
  %v4371 = vsel %vm3935, %v3754, 0.0
  %v4372 = vadd.f32 %v4370, %v4371
  %v4373 = vsel %vm3935, %v3755, 0.0
  %v4374 = vadd.f32 %v4372, %v4373
  %v4375 = vsel %vm3935, %v3756, 0.0
  %v4376 = vadd.f32 %v4374, %v4375
  %v4377 = vsel %vm3935, %v3757, 0.0
  %v4378 = vadd.f32 %v4376, %v4377
  %v4379 = vsel %vm3935, %v3758, 0.0
  %v4380 = vadd.f32 %v4378, %v4379
  %v4381 = vsel %vm3935, %v3759, 0.0
  %v4382 = vadd.f32 %v4380, %v4381
  %v4383 = vsel %vm3935, %v3760, 0.0
  %v4384 = vadd.f32 %v4382, %v4383
  %v4385 = vsel %vm3935, %v3761, 0.0
  %v4386 = vadd.f32 %v4384, %v4385
  %v4387 = vsel %vm3935, %v3762, 0.0
  %v4388 = vadd.f32 %v4386, %v4387
  %v4389 = vsel %vm3935, %v3763, 0.0
  %v4390 = vadd.f32 %v4388, %v4389
  %v4391 = vsel %vm3935, %v3764, 0.0
  %v4392 = vadd.f32 %v4390, %v4391
  %v4393 = vsel %vm3935, %v3765, 0.0
  %v4394 = vadd.f32 %v4392, %v4393
  %v4395 = vsel %vm3935, %v3766, 0.0
  %v4396 = vadd.f32 %v4394, %v4395
  %v4397 = vsel %vm3935, %v3767, 0.0
  %v4398 = vadd.f32 %v4396, %v4397
  %v4399 = vsel %vm3935, %v3768, 0.0
  %v4400 = vadd.f32 %v4398, %v4399
  %v4401 = vsel %vm3935, %v3769, 0.0
  %v4402 = vadd.f32 %v4400, %v4401
  %v4403 = vsel %vm3935, %v3770, 0.0
  %v4404 = vadd.f32 %v4402, %v4403
  %v4405 = vsel %vm3935, %v3771, 0.0
  %v4406 = vadd.f32 %v4404, %v4405
  %v4407 = vsel %vm3935, %v3772, 0.0
  %v4408 = vadd.f32 %v4406, %v4407
  %v4409 = vsel %vm3935, %v3773, 0.0
  %v4410 = vadd.f32 %v4408, %v4409
  %v4411 = vsel %vm3935, %v3774, 0.0
  %v4412 = vadd.f32 %v4410, %v4411
  %v4413 = vrot.slane %v4412, 4
  %v4414 = vadd.f32 %v4412, %v4413
  %v4415 = vrot.slane %v4414, 2
  %v4416 = vadd.f32 %v4414, %v4415
  %v4417 = vrot.slane %v4416, 1
  %v4418 = vadd.f32 %v4416, %v4417
  %v4419 = vsel %vm3935, %v3775, 0.0
  %v4420 = vsel %vm3935, %v3776, 0.0
  %v4421 = vadd.f32 %v4419, %v4420
  %v4422 = vsel %vm3935, %v3777, 0.0
  %v4423 = vadd.f32 %v4421, %v4422
  %v4424 = vsel %vm3935, %v3778, 0.0
  %v4425 = vadd.f32 %v4423, %v4424
  %v4426 = vsel %vm3935, %v3779, 0.0
  %v4427 = vadd.f32 %v4425, %v4426
  %v4428 = vsel %vm3935, %v3780, 0.0
  %v4429 = vadd.f32 %v4427, %v4428
  %v4430 = vsel %vm3935, %v3781, 0.0
  %v4431 = vadd.f32 %v4429, %v4430
  %v4432 = vsel %vm3935, %v3782, 0.0
  %v4433 = vadd.f32 %v4431, %v4432
  %v4434 = vsel %vm3935, %v3783, 0.0
  %v4435 = vadd.f32 %v4433, %v4434
  %v4436 = vsel %vm3935, %v3784, 0.0
  %v4437 = vadd.f32 %v4435, %v4436
  %v4438 = vsel %vm3935, %v3785, 0.0
  %v4439 = vadd.f32 %v4437, %v4438
  %v4440 = vsel %vm3935, %v3786, 0.0
  %v4441 = vadd.f32 %v4439, %v4440
  %v4442 = vsel %vm3935, %v3787, 0.0
  %v4443 = vadd.f32 %v4441, %v4442
  %v4444 = vsel %vm3935, %v3788, 0.0
  %v4445 = vadd.f32 %v4443, %v4444
  %v4446 = vsel %vm3935, %v3789, 0.0
  %v4447 = vadd.f32 %v4445, %v4446
  %v4448 = vsel %vm3935, %v3790, 0.0
  %v4449 = vadd.f32 %v4447, %v4448
  %v4450 = vsel %vm3935, %v3791, 0.0
  %v4451 = vadd.f32 %v4449, %v4450
  %v4452 = vsel %vm3935, %v3792, 0.0
  %v4453 = vadd.f32 %v4451, %v4452
  %v4454 = vsel %vm3935, %v3793, 0.0
  %v4455 = vadd.f32 %v4453, %v4454
  %v4456 = vsel %vm3935, %v3794, 0.0
  %v4457 = vadd.f32 %v4455, %v4456
  %v4458 = vsel %vm3935, %v3795, 0.0
  %v4459 = vadd.f32 %v4457, %v4458
  %v4460 = vsel %vm3935, %v3796, 0.0
  %v4461 = vadd.f32 %v4459, %v4460
  %v4462 = vsel %vm3935, %v3797, 0.0
  %v4463 = vadd.f32 %v4461, %v4462
  %v4464 = vsel %vm3935, %v3798, 0.0
  %v4465 = vadd.f32 %v4463, %v4464
  %v4466 = vsel %vm3935, %v3799, 0.0
  %v4467 = vadd.f32 %v4465, %v4466
  %v4468 = vsel %vm3935, %v3800, 0.0
  %v4469 = vadd.f32 %v4467, %v4468
  %v4470 = vsel %vm3935, %v3801, 0.0
  %v4471 = vadd.f32 %v4469, %v4470
  %v4472 = vsel %vm3935, %v3802, 0.0
  %v4473 = vadd.f32 %v4471, %v4472
  %v4474 = vsel %vm3935, %v3803, 0.0
  %v4475 = vadd.f32 %v4473, %v4474
  %v4476 = vsel %vm3935, %v3804, 0.0
  %v4477 = vadd.f32 %v4475, %v4476
  %v4478 = vsel %vm3935, %v3805, 0.0
  %v4479 = vadd.f32 %v4477, %v4478
  %v4480 = vsel %vm3935, %v3806, 0.0
  %v4481 = vadd.f32 %v4479, %v4480
  %v4482 = vrot.slane %v4481, 4
  %v4483 = vadd.f32 %v4481, %v4482
  %v4484 = vrot.slane %v4483, 2
  %v4485 = vadd.f32 %v4483, %v4484
  %v4486 = vrot.slane %v4485, 1
  %v4487 = vadd.f32 %v4485, %v4486
  %v4488 = vsel %vm3935, %v3807, 0.0
  %v4489 = vsel %vm3935, %v3808, 0.0
  %v4490 = vadd.f32 %v4488, %v4489
  %v4491 = vsel %vm3935, %v3809, 0.0
  %v4492 = vadd.f32 %v4490, %v4491
  %v4493 = vsel %vm3935, %v3810, 0.0
  %v4494 = vadd.f32 %v4492, %v4493
  %v4495 = vsel %vm3935, %v3811, 0.0
  %v4496 = vadd.f32 %v4494, %v4495
  %v4497 = vsel %vm3935, %v3812, 0.0
  %v4498 = vadd.f32 %v4496, %v4497
  %v4499 = vsel %vm3935, %v3813, 0.0
  %v4500 = vadd.f32 %v4498, %v4499
  %v4501 = vsel %vm3935, %v3814, 0.0
  %v4502 = vadd.f32 %v4500, %v4501
  %v4503 = vsel %vm3935, %v3815, 0.0
  %v4504 = vadd.f32 %v4502, %v4503
  %v4505 = vsel %vm3935, %v3816, 0.0
  %v4506 = vadd.f32 %v4504, %v4505
  %v4507 = vsel %vm3935, %v3817, 0.0
  %v4508 = vadd.f32 %v4506, %v4507
  %v4509 = vsel %vm3935, %v3818, 0.0
  %v4510 = vadd.f32 %v4508, %v4509
  %v4511 = vsel %vm3935, %v3819, 0.0
  %v4512 = vadd.f32 %v4510, %v4511
  %v4513 = vsel %vm3935, %v3820, 0.0
  %v4514 = vadd.f32 %v4512, %v4513
  %v4515 = vsel %vm3935, %v3821, 0.0
  %v4516 = vadd.f32 %v4514, %v4515
  %v4517 = vsel %vm3935, %v3822, 0.0
  %v4518 = vadd.f32 %v4516, %v4517
  %v4519 = vsel %vm3935, %v3823, 0.0
  %v4520 = vadd.f32 %v4518, %v4519
  %v4521 = vsel %vm3935, %v3824, 0.0
  %v4522 = vadd.f32 %v4520, %v4521
  %v4523 = vsel %vm3935, %v3825, 0.0
  %v4524 = vadd.f32 %v4522, %v4523
  %v4525 = vsel %vm3935, %v3826, 0.0
  %v4526 = vadd.f32 %v4524, %v4525
  %v4527 = vsel %vm3935, %v3827, 0.0
  %v4528 = vadd.f32 %v4526, %v4527
  %v4529 = vsel %vm3935, %v3828, 0.0
  %v4530 = vadd.f32 %v4528, %v4529
  %v4531 = vsel %vm3935, %v3829, 0.0
  %v4532 = vadd.f32 %v4530, %v4531
  %v4533 = vsel %vm3935, %v3830, 0.0
  %v4534 = vadd.f32 %v4532, %v4533
  %v4535 = vsel %vm3935, %v3831, 0.0
  %v4536 = vadd.f32 %v4534, %v4535
  %v4537 = vsel %vm3935, %v3832, 0.0
  %v4538 = vadd.f32 %v4536, %v4537
  %v4539 = vsel %vm3935, %v3833, 0.0
  %v4540 = vadd.f32 %v4538, %v4539
  %v4541 = vsel %vm3935, %v3834, 0.0
  %v4542 = vadd.f32 %v4540, %v4541
  %v4543 = vsel %vm3935, %v3835, 0.0
  %v4544 = vadd.f32 %v4542, %v4543
  %v4545 = vsel %vm3935, %v3836, 0.0
  %v4546 = vadd.f32 %v4544, %v4545
  %v4547 = vsel %vm3935, %v3837, 0.0
  %v4548 = vadd.f32 %v4546, %v4547
  %v4549 = vsel %vm3935, %v3838, 0.0
  %v4550 = vadd.f32 %v4548, %v4549
  %v4551 = vrot.slane %v4550, 4
  %v4552 = vadd.f32 %v4550, %v4551
  %v4553 = vrot.slane %v4552, 2
  %v4554 = vadd.f32 %v4552, %v4553
  %v4555 = vrot.slane %v4554, 1
  %v4556 = vadd.f32 %v4554, %v4555
  %v4557 = vsel %vm3935, %v3839, 0.0
  %v4558 = vsel %vm3935, %v3840, 0.0
  %v4559 = vadd.f32 %v4557, %v4558
  %v4560 = vsel %vm3935, %v3841, 0.0
  %v4561 = vadd.f32 %v4559, %v4560
  %v4562 = vsel %vm3935, %v3842, 0.0
  %v4563 = vadd.f32 %v4561, %v4562
  %v4564 = vsel %vm3935, %v3843, 0.0
  %v4565 = vadd.f32 %v4563, %v4564
  %v4566 = vsel %vm3935, %v3844, 0.0
  %v4567 = vadd.f32 %v4565, %v4566
  %v4568 = vsel %vm3935, %v3845, 0.0
  %v4569 = vadd.f32 %v4567, %v4568
  %v4570 = vsel %vm3935, %v3846, 0.0
  %v4571 = vadd.f32 %v4569, %v4570
  %v4572 = vsel %vm3935, %v3847, 0.0
  %v4573 = vadd.f32 %v4571, %v4572
  %v4574 = vsel %vm3935, %v3848, 0.0
  %v4575 = vadd.f32 %v4573, %v4574
  %v4576 = vsel %vm3935, %v3849, 0.0
  %v4577 = vadd.f32 %v4575, %v4576
  %v4578 = vsel %vm3935, %v3850, 0.0
  %v4579 = vadd.f32 %v4577, %v4578
  %v4580 = vsel %vm3935, %v3851, 0.0
  %v4581 = vadd.f32 %v4579, %v4580
  %v4582 = vsel %vm3935, %v3852, 0.0
  %v4583 = vadd.f32 %v4581, %v4582
  %v4584 = vsel %vm3935, %v3853, 0.0
  %v4585 = vadd.f32 %v4583, %v4584
  %v4586 = vsel %vm3935, %v3854, 0.0
  %v4587 = vadd.f32 %v4585, %v4586
  %v4588 = vsel %vm3935, %v3855, 0.0
  %v4589 = vadd.f32 %v4587, %v4588
  %v4590 = vsel %vm3935, %v3856, 0.0
  %v4591 = vadd.f32 %v4589, %v4590
  %v4592 = vsel %vm3935, %v3857, 0.0
  %v4593 = vadd.f32 %v4591, %v4592
  %v4594 = vsel %vm3935, %v3858, 0.0
  %v4595 = vadd.f32 %v4593, %v4594
  %v4596 = vsel %vm3935, %v3859, 0.0
  %v4597 = vadd.f32 %v4595, %v4596
  %v4598 = vsel %vm3935, %v3860, 0.0
  %v4599 = vadd.f32 %v4597, %v4598
  %v4600 = vsel %vm3935, %v3861, 0.0
  %v4601 = vadd.f32 %v4599, %v4600
  %v4602 = vsel %vm3935, %v3862, 0.0
  %v4603 = vadd.f32 %v4601, %v4602
  %v4604 = vsel %vm3935, %v3863, 0.0
  %v4605 = vadd.f32 %v4603, %v4604
  %v4606 = vsel %vm3935, %v3864, 0.0
  %v4607 = vadd.f32 %v4605, %v4606
  %v4608 = vsel %vm3935, %v3865, 0.0
  %v4609 = vadd.f32 %v4607, %v4608
  %v4610 = vsel %vm3935, %v3866, 0.0
  %v4611 = vadd.f32 %v4609, %v4610
  %v4612 = vsel %vm3935, %v3867, 0.0
  %v4613 = vadd.f32 %v4611, %v4612
  %v4614 = vsel %vm3935, %v3868, 0.0
  %v4615 = vadd.f32 %v4613, %v4614
  %v4616 = vsel %vm3935, %v3869, 0.0
  %v4617 = vadd.f32 %v4615, %v4616
  %v4618 = vsel %vm3935, %v3870, 0.0
  %v4619 = vadd.f32 %v4617, %v4618
  %v4620 = vrot.slane %v4619, 4
  %v4621 = vadd.f32 %v4619, %v4620
  %v4622 = vrot.slane %v4621, 2
  %v4623 = vadd.f32 %v4621, %v4622
  %v4624 = vrot.slane %v4623, 1
  %v4625 = vadd.f32 %v4623, %v4624
  %v4626 = vsel %vm3935, %v3871, 0.0
  %v4627 = vsel %vm3935, %v3872, 0.0
  %v4628 = vadd.f32 %v4626, %v4627
  %v4629 = vsel %vm3935, %v3873, 0.0
  %v4630 = vadd.f32 %v4628, %v4629
  %v4631 = vsel %vm3935, %v3874, 0.0
  %v4632 = vadd.f32 %v4630, %v4631
  %v4633 = vsel %vm3935, %v3875, 0.0
  %v4634 = vadd.f32 %v4632, %v4633
  %v4635 = vsel %vm3935, %v3876, 0.0
  %v4636 = vadd.f32 %v4634, %v4635
  %v4637 = vsel %vm3935, %v3877, 0.0
  %v4638 = vadd.f32 %v4636, %v4637
  %v4639 = vsel %vm3935, %v3878, 0.0
  %v4640 = vadd.f32 %v4638, %v4639
  %v4641 = vsel %vm3935, %v3879, 0.0
  %v4642 = vadd.f32 %v4640, %v4641
  %v4643 = vsel %vm3935, %v3880, 0.0
  %v4644 = vadd.f32 %v4642, %v4643
  %v4645 = vsel %vm3935, %v3881, 0.0
  %v4646 = vadd.f32 %v4644, %v4645
  %v4647 = vsel %vm3935, %v3882, 0.0
  %v4648 = vadd.f32 %v4646, %v4647
  %v4649 = vsel %vm3935, %v3883, 0.0
  %v4650 = vadd.f32 %v4648, %v4649
  %v4651 = vsel %vm3935, %v3884, 0.0
  %v4652 = vadd.f32 %v4650, %v4651
  %v4653 = vsel %vm3935, %v3885, 0.0
  %v4654 = vadd.f32 %v4652, %v4653
  %v4655 = vsel %vm3935, %v3886, 0.0
  %v4656 = vadd.f32 %v4654, %v4655
  %v4657 = vsel %vm3935, %v3887, 0.0
  %v4658 = vadd.f32 %v4656, %v4657
  %v4659 = vsel %vm3935, %v3888, 0.0
  %v4660 = vadd.f32 %v4658, %v4659
  %v4661 = vsel %vm3935, %v3889, 0.0
  %v4662 = vadd.f32 %v4660, %v4661
  %v4663 = vsel %vm3935, %v3890, 0.0
  %v4664 = vadd.f32 %v4662, %v4663
  %v4665 = vsel %vm3935, %v3891, 0.0
  %v4666 = vadd.f32 %v4664, %v4665
  %v4667 = vsel %vm3935, %v3892, 0.0
  %v4668 = vadd.f32 %v4666, %v4667
  %v4669 = vsel %vm3935, %v3893, 0.0
  %v4670 = vadd.f32 %v4668, %v4669
  %v4671 = vsel %vm3935, %v3894, 0.0
  %v4672 = vadd.f32 %v4670, %v4671
  %v4673 = vsel %vm3935, %v3895, 0.0
  %v4674 = vadd.f32 %v4672, %v4673
  %v4675 = vsel %vm3935, %v3896, 0.0
  %v4676 = vadd.f32 %v4674, %v4675
  %v4677 = vsel %vm3935, %v3897, 0.0
  %v4678 = vadd.f32 %v4676, %v4677
  %v4679 = vsel %vm3935, %v3898, 0.0
  %v4680 = vadd.f32 %v4678, %v4679
  %v4681 = vsel %vm3935, %v3899, 0.0
  %v4682 = vadd.f32 %v4680, %v4681
  %v4683 = vsel %vm3935, %v3900, 0.0
  %v4684 = vadd.f32 %v4682, %v4683
  %v4685 = vsel %vm3935, %v3901, 0.0
  %v4686 = vadd.f32 %v4684, %v4685
  %v4687 = vsel %vm3935, %v3902, 0.0
  %v4688 = vadd.f32 %v4686, %v4687
  %v4689 = vrot.slane %v4688, 4
  %v4690 = vadd.f32 %v4688, %v4689
  %v4691 = vrot.slane %v4690, 2
  %v4692 = vadd.f32 %v4690, %v4691
  %v4693 = vrot.slane %v4692, 1
  %v4694 = vadd.f32 %v4692, %v4693
  %v4695 = vsel %vm3935, %v3903, 0.0
  %v4696 = vsel %vm3935, %v3904, 0.0
  %v4697 = vadd.f32 %v4695, %v4696
  %v4698 = vsel %vm3935, %v3905, 0.0
  %v4699 = vadd.f32 %v4697, %v4698
  %v4700 = vsel %vm3935, %v3906, 0.0
  %v4701 = vadd.f32 %v4699, %v4700
  %v4702 = vsel %vm3935, %v3907, 0.0
  %v4703 = vadd.f32 %v4701, %v4702
  %v4704 = vsel %vm3935, %v3908, 0.0
  %v4705 = vadd.f32 %v4703, %v4704
  %v4706 = vsel %vm3935, %v3909, 0.0
  %v4707 = vadd.f32 %v4705, %v4706
  %v4708 = vsel %vm3935, %v3910, 0.0
  %v4709 = vadd.f32 %v4707, %v4708
  %v4710 = vsel %vm3935, %v3911, 0.0
  %v4711 = vadd.f32 %v4709, %v4710
  %v4712 = vsel %vm3935, %v3912, 0.0
  %v4713 = vadd.f32 %v4711, %v4712
  %v4714 = vsel %vm3935, %v3913, 0.0
  %v4715 = vadd.f32 %v4713, %v4714
  %v4716 = vsel %vm3935, %v3914, 0.0
  %v4717 = vadd.f32 %v4715, %v4716
  %v4718 = vsel %vm3935, %v3915, 0.0
  %v4719 = vadd.f32 %v4717, %v4718
  %v4720 = vsel %vm3935, %v3916, 0.0
  %v4721 = vadd.f32 %v4719, %v4720
  %v4722 = vsel %vm3935, %v3917, 0.0
  %v4723 = vadd.f32 %v4721, %v4722
  %v4724 = vsel %vm3935, %v3918, 0.0
  %v4725 = vadd.f32 %v4723, %v4724
  %v4726 = vsel %vm3935, %v3919, 0.0
  %v4727 = vadd.f32 %v4725, %v4726
  %v4728 = vsel %vm3935, %v3920, 0.0
  %v4729 = vadd.f32 %v4727, %v4728
  %v4730 = vsel %vm3935, %v3921, 0.0
  %v4731 = vadd.f32 %v4729, %v4730
  %v4732 = vsel %vm3935, %v3922, 0.0
  %v4733 = vadd.f32 %v4731, %v4732
  %v4734 = vsel %vm3935, %v3923, 0.0
  %v4735 = vadd.f32 %v4733, %v4734
  %v4736 = vsel %vm3935, %v3924, 0.0
  %v4737 = vadd.f32 %v4735, %v4736
  %v4738 = vsel %vm3935, %v3925, 0.0
  %v4739 = vadd.f32 %v4737, %v4738
  %v4740 = vsel %vm3935, %v3926, 0.0
  %v4741 = vadd.f32 %v4739, %v4740
  %v4742 = vsel %vm3935, %v3927, 0.0
  %v4743 = vadd.f32 %v4741, %v4742
  %v4744 = vsel %vm3935, %v3928, 0.0
  %v4745 = vadd.f32 %v4743, %v4744
  %v4746 = vsel %vm3935, %v3929, 0.0
  %v4747 = vadd.f32 %v4745, %v4746
  %v4748 = vsel %vm3935, %v3930, 0.0
  %v4749 = vadd.f32 %v4747, %v4748
  %v4750 = vsel %vm3935, %v3931, 0.0
  %v4751 = vadd.f32 %v4749, %v4750
  %v4752 = vsel %vm3935, %v3932, 0.0
  %v4753 = vadd.f32 %v4751, %v4752
  %v4754 = vsel %vm3935, %v3933, 0.0
  %v4755 = vadd.f32 %v4753, %v4754
  %v4756 = vsel %vm3935, %v3934, 0.0
  %v4757 = vadd.f32 %v4755, %v4756
  %v4758 = vrot.slane %v4757, 4
  %v4759 = vadd.f32 %v4757, %v4758
  %v4760 = vrot.slane %v4759, 2
  %v4761 = vadd.f32 %v4759, %v4760
  %v4762 = vrot.slane %v4761, 1
  %v4763 = vadd.f32 %v4761, %v4762
  %v4764 = vmul.f32 %v4004, 0.00390625
  %v4765 = vmul.f32 %v4073, 0.00390625
  %v4766 = vmul.f32 %v4142, 0.00390625
  %v4767 = vmul.f32 %v4211, 0.00390625
  %v4768 = vmul.f32 %v4280, 0.00390625
  %v4769 = vmul.f32 %v4349, 0.00390625
  %v4770 = vmul.f32 %v4418, 0.00390625
  %v4771 = vmul.f32 %v4487, 0.00390625
  %v4772 = vmul.f32 %v4556, 0.00390625
  %v4773 = vmul.f32 %v4625, 0.00390625
  %v4774 = vmul.f32 %v4694, 0.00390625
  %v4775 = vmul.f32 %v4763, 0.00390625
  %v4776 = vpack.c.bf16 %v4764, %v4764
  %v4777 = vpack.c.bf16 %v4765, %v4765
  %v4778 = vpack.c.bf16 %v4766, %v4766
  %v4779 = vpack.c.bf16 %v4767, %v4767
  %v4780 = vpack.c.bf16 %v4768, %v4768
  %v4781 = vpack.c.bf16 %v4769, %v4769
  %v4782 = vpack.c.bf16 %v4770, %v4770
  %v4783 = vpack.c.bf16 %v4771, %v4771
  %v4784 = vpack.c.bf16 %v4772, %v4772
  %v4785 = vpack.c.bf16 %v4773, %v4773
  %v4786 = vpack.c.bf16 %v4774, %v4774
  %v4787 = vpack.c.bf16 %v4775, %v4775
  %v4788 = vlaneseq
  %v4789 = vshrl.u32 %v4788, 7
  %v4790 = vsub.s32 0, %v4789
  %v4791 = vrot.slane %v40, %v4790
  %v4804 = vunpack.c.l.b16 %v4776
  %v4805 = vunpack.c.l.b16 %v4777
  %v4806 = vunpack.c.l.b16 %v4778
  %v4807 = vunpack.c.l.b16 %v4779
  %v4808 = vunpack.c.l.b16 %v4780
  %v4809 = vunpack.c.l.b16 %v4781
  %v4810 = vunpack.c.l.b16 %v4782
  %v4811 = vunpack.c.l.b16 %v4783
  %v4812 = vunpack.c.l.b16 %v4784
  %v4813 = vunpack.c.l.b16 %v4785
  %v4814 = vunpack.c.l.b16 %v4786
  %v4815 = vunpack.c.l.b16 %v4787
  %vm4816 = vcmask 1041409
  %v4817 = vsel %vm4816, %v4805, %v4804
  %vm4818 = vcmask 1042434
  %v4819 = vsel %vm4818, %v4806, %v4817
  %vm4820 = vcmask 1043459
  %v4821 = vsel %vm4820, %v4807, %v4819
  %vm4822 = vcmask 1044484
  %v4823 = vsel %vm4822, %v4808, %v4821
  %vm4824 = vcmask 1045509
  %v4825 = vsel %vm4824, %v4809, %v4823
  %vm4826 = vcmask 1046534
  %v4827 = vsel %vm4826, %v4810, %v4825
  %vm4828 = vcmask 1047559
  %v4829 = vsel %vm4828, %v4811, %v4827
  %v4830 = vsel %vm4816, %v4813, %v4812
  %v4831 = vsel %vm4818, %v4814, %v4830
  %v4832 = vsel %vm4820, %v4815, %v4831
  %v4833 = vpack.c.b16 %v4832, %v4829
  %v4836 = vunpack.c.l.b16 %v19
  %v4837 = vunpack.c.l.b16 %v20
  %v4838 = vpack.c.b16 %v4837, %v4836
  %v4841 = vsel %vm3935, %v4833, 0
  %4843 = vmatprep.subr.bf16.mxu0 0
  %4844 = vmatpush1.bf16.msra.mxu0 %v4838
  %4845 = vmatprep.subr.bf16.mxu0 0
  %4846 = vmatpush1.bf16.msra.mxu0 0
  %4847 = vmatprep.subr.bf16.mxu0 0
  %4848 = vmatpush1.bf16.msra.mxu0 0
  %4849 = vmatprep.subr.bf16.mxu0 0
  %4850 = vmatpush1.bf16.msra.mxu0 0
  %4851 = vmatprep.subr.bf16.mxu0 0
  %4852 = vmatpush1.bf16.msra.mxu0 0
  %4853 = vmatprep.subr.bf16.mxu0 0
  %4854 = vmatpush1.bf16.msra.mxu0 0
  %4855 = vmatprep.subr.bf16.mxu0 0
  %4856 = vmatpush1.bf16.msra.mxu0 0
  %4857 = vmatprep.subr.bf16.mxu0 0
  %4858 = vmatpush1.bf16.msra.mxu0 0
  %4859 = vmatprep.subr.bf16.mxu0 0
  %4860 = vmatpush1.bf16.msra.mxu0 0
  %4861 = vmatprep.subr.bf16.mxu0 0
  %4862 = vmatpush1.bf16.msra.mxu0 0
  %4863 = vmatprep.subr.bf16.mxu0 0
  %4864 = vmatpush1.bf16.msra.mxu0 0
  %4865 = vmatprep.subr.bf16.mxu0 0
  %4866 = vmatpush1.bf16.msra.mxu0 0
  %4867 = vmatprep.subr.bf16.mxu0 0
  %4868 = vmatpush1.bf16.msra.mxu0 0
  %4869 = vmatprep.subr.bf16.mxu0 0
  %4870 = vmatpush1.bf16.msra.mxu0 0
  %4871 = vmatprep.subr.bf16.mxu0 0
  %4872 = vmatpush1.bf16.msra.mxu0 0
  %4873 = vmatprep.subr.bf16.mxu0 0
  %4874 = vmatpush1.bf16.msra.mxu0 0
  %4875 = vmatprep.mubr.bf16.mxu0 0
  %4876 = vmatmul.mubr.bf16.gmra.mrb[0].mxu0 %v4841
  %v4877 = vpop.f32.mrb[0].mxu0
  %v4878 = vadd.f32 %v4791, %v4877
  %v4879 = vpop.f32.mrb[0].mxu0
  %v4880 = vpop.f32.mrb[0].mxu0
  %v4881 = vadd.f32 %v4791, %v4880
  %v4882 = vpop.f32.mrb[0].mxu0
  %4883 = vdwg.mxu0
  %v4884 = vmax.f32 %v4878, 0.0
  %v4885 = vmax.f32 %v4881, 0.0
  %v4886 = vpack.c.bf16 %v4885, %v4884
  %v4891 = vunpack.c.l.b16 %v21
  %v4892 = vunpack.c.l.b16 %v22
  %v4893 = vunpack.c.l.b16 %v23
  %v4894 = vunpack.c.l.b16 %v24
  %v4895 = vpack.c.b16 %v4892, %v4891
  %v4896 = vpack.c.b16 %v4894, %v4893
  %v4900 = vsel %vm1405, %v4886, 0
  %4902 = vmatprep.subr.bf16.mxu0 0
  %4903 = vmatpush1.bf16.msra.mxu0 %v4895
  %4904 = vmatprep.subr.bf16.mxu0 0
  %4905 = vmatpush1.bf16.msra.mxu0 %v4896
  %4906 = vmatprep.subr.bf16.mxu0 0
  %4907 = vmatpush1.bf16.msra.mxu0 0
  %4908 = vmatprep.subr.bf16.mxu0 0
  %4909 = vmatpush1.bf16.msra.mxu0 0
  %4910 = vmatprep.subr.bf16.mxu0 0
  %4911 = vmatpush1.bf16.msra.mxu0 0
  %4912 = vmatprep.subr.bf16.mxu0 0
  %4913 = vmatpush1.bf16.msra.mxu0 0
  %4914 = vmatprep.subr.bf16.mxu0 0
  %4915 = vmatpush1.bf16.msra.mxu0 0
  %4916 = vmatprep.subr.bf16.mxu0 0
  %4917 = vmatpush1.bf16.msra.mxu0 0
  %4918 = vmatprep.subr.bf16.mxu0 0
  %4919 = vmatpush1.bf16.msra.mxu0 0
  %4920 = vmatprep.subr.bf16.mxu0 0
  %4921 = vmatpush1.bf16.msra.mxu0 0
  %4922 = vmatprep.subr.bf16.mxu0 0
  %4923 = vmatpush1.bf16.msra.mxu0 0
  %4924 = vmatprep.subr.bf16.mxu0 0
  %4925 = vmatpush1.bf16.msra.mxu0 0
  %4926 = vmatprep.subr.bf16.mxu0 0
  %4927 = vmatpush1.bf16.msra.mxu0 0
  %4928 = vmatprep.subr.bf16.mxu0 0
  %4929 = vmatpush1.bf16.msra.mxu0 0
  %4930 = vmatprep.subr.bf16.mxu0 0
  %4931 = vmatpush1.bf16.msra.mxu0 0
  %4932 = vmatprep.subr.bf16.mxu0 0
  %4933 = vmatpush1.bf16.msra.mxu0 0
  %4934 = vmatprep.mubr.bf16.mxu0 0
  %4935 = vmatmul.mubr.bf16.gmra.mrb[0].mxu0 %v4900
  %v4936 = vpop.f32.mrb[0].mxu0
  %v4937 = vadd.f32 0.0, %v4936
  %v4938 = vpop.f32.mrb[0].mxu0
  %v4939 = vpop.f32.mrb[0].mxu0
  %v4940 = vadd.f32 0.0, %v4939
  %v4941 = vpop.f32.mrb[0].mxu0
  %4942 = vdwg.mxu0
  %vm4945 = vcmask 1041408
  %v4946 = vrot.slane %v4937, 6
  %v4947 = vrot.slane %v4940, 6
  %v4948 = vsel %vm4945, %v4946, %v4947
  %v4950 = vadd.f32 %v4937, %v4948
  %v4951 = vmul.f32 %v4950, 0.5
  %v4952 = vlaneseq
  %v4953 = vshrl.u32 %v4952, 7
  %v4954 = vsub.s32 0, %v4953
  %v4955 = vrot.slane %v41, %v4954
  %v4956 = vadd.f32 %v4951, %v4955
  %v4957 = vlaneseq
  %v4958 = vshrl.u32 %v4957, 7
  %v4959 = vsub.s32 0, %v4958
  %v4960 = vrot.slane %v42, %v4959
  %4962 = vrot.lane.b32.xlu0 %v4960, 32
  %v4963 = vpop.permute.xlu0 %4962
  %v4965 = vadd.f32 %v4937, %v4963
  %v4966 = vadd.f32 %v4940, %v4963
  %v4971 = vunpack.c.l.b16 %v25
  %v4972 = vunpack.c.l.b16 %v26
  %v4973 = vunpack.c.l.b16 %v27
  %v4974 = vunpack.c.l.b16 %v28
  %v4975 = vpack.c.b16 %v4972, %v4971
  %v4976 = vpack.c.b16 %v4974, %v4973
  %v4980 = vsel %vm1405, 0, 0
  %4982 = vmatprep.subr.bf16.mxu0 0
  %4983 = vmatpush1.bf16.msra.mxu0 %v4975
  %4984 = vmatprep.subr.bf16.mxu0 0
  %4985 = vmatpush1.bf16.msra.mxu0 %v4976
  %4986 = vmatprep.subr.bf16.mxu0 0
  %4987 = vmatpush1.bf16.msra.mxu0 0
  %4988 = vmatprep.subr.bf16.mxu0 0
  %4989 = vmatpush1.bf16.msra.mxu0 0
  %4990 = vmatprep.subr.bf16.mxu0 0
  %4991 = vmatpush1.bf16.msra.mxu0 0
  %4992 = vmatprep.subr.bf16.mxu0 0
  %4993 = vmatpush1.bf16.msra.mxu0 0
  %4994 = vmatprep.subr.bf16.mxu0 0
  %4995 = vmatpush1.bf16.msra.mxu0 0
  %4996 = vmatprep.subr.bf16.mxu0 0
  %4997 = vmatpush1.bf16.msra.mxu0 0
  %4998 = vmatprep.subr.bf16.mxu0 0
  %4999 = vmatpush1.bf16.msra.mxu0 0
  %5000 = vmatprep.subr.bf16.mxu0 0
  %5001 = vmatpush1.bf16.msra.mxu0 0
  %5002 = vmatprep.subr.bf16.mxu0 0
  %5003 = vmatpush1.bf16.msra.mxu0 0
  %5004 = vmatprep.subr.bf16.mxu0 0
  %5005 = vmatpush1.bf16.msra.mxu0 0
  %5006 = vmatprep.subr.bf16.mxu0 0
  %5007 = vmatpush1.bf16.msra.mxu0 0
  %5008 = vmatprep.subr.bf16.mxu0 0
  %5009 = vmatpush1.bf16.msra.mxu0 0
  %5010 = vmatprep.subr.bf16.mxu0 0
  %5011 = vmatpush1.bf16.msra.mxu0 0
  %5012 = vmatprep.subr.bf16.mxu0 0
  %5013 = vmatpush1.bf16.msra.mxu0 0
  %5014 = vmatprep.mubr.bf16.mxu0 0
  %5015 = vmatmul.mubr.bf16.gmra.mrb[0].mxu0 %v4980
  %v5016 = vpop.f32.mrb[0].mxu0
  %v5017 = vadd.f32 0.0, %v5016
  %v5018 = vpop.f32.mrb[0].mxu0
  %v5019 = vpop.f32.mrb[0].mxu0
  %v5020 = vpop.f32.mrb[0].mxu0
  %5021 = vdwg.mxu0
  %v5022 = vadd.f32 %v4956, %v5017
  %v5023 = vtanh.pop %v5022
  %v5024 = vadd.f32 %v5023, 0.0
  %v5025 = vpack.c.bf16 %v5023, %v5023
  %v5027 = vsel %vm1405, %v5025, 0
  %5029 = vmatprep.subr.bf16.mxu0 0
  %5030 = vmatpush1.bf16.msra.mxu0 %v4975
  %5031 = vmatprep.subr.bf16.mxu0 0
  %5032 = vmatpush1.bf16.msra.mxu0 %v4976
  %5033 = vmatprep.subr.bf16.mxu0 0
  %5034 = vmatpush1.bf16.msra.mxu0 0
  %5035 = vmatprep.subr.bf16.mxu0 0
  %5036 = vmatpush1.bf16.msra.mxu0 0
  %5037 = vmatprep.subr.bf16.mxu0 0
  %5038 = vmatpush1.bf16.msra.mxu0 0
  %5039 = vmatprep.subr.bf16.mxu0 0
  %5040 = vmatpush1.bf16.msra.mxu0 0
  %5041 = vmatprep.subr.bf16.mxu0 0
  %5042 = vmatpush1.bf16.msra.mxu0 0
  %5043 = vmatprep.subr.bf16.mxu0 0
  %5044 = vmatpush1.bf16.msra.mxu0 0
  %5045 = vmatprep.subr.bf16.mxu0 0
  %5046 = vmatpush1.bf16.msra.mxu0 0
  %5047 = vmatprep.subr.bf16.mxu0 0
  %5048 = vmatpush1.bf16.msra.mxu0 0
  %5049 = vmatprep.subr.bf16.mxu0 0
  %5050 = vmatpush1.bf16.msra.mxu0 0
  %5051 = vmatprep.subr.bf16.mxu0 0
  %5052 = vmatpush1.bf16.msra.mxu0 0
  %5053 = vmatprep.subr.bf16.mxu0 0
  %5054 = vmatpush1.bf16.msra.mxu0 0
  %5055 = vmatprep.subr.bf16.mxu0 0
  %5056 = vmatpush1.bf16.msra.mxu0 0
  %5057 = vmatprep.subr.bf16.mxu0 0
  %5058 = vmatpush1.bf16.msra.mxu0 0
  %5059 = vmatprep.subr.bf16.mxu0 0
  %5060 = vmatpush1.bf16.msra.mxu0 0
  %5061 = vmatprep.mubr.bf16.mxu0 0
  %5062 = vmatmul.mubr.bf16.gmra.mrb[0].mxu0 %v5027
  %v5063 = vpop.f32.mrb[0].mxu0
  %v5064 = vadd.f32 0.0, %v5063
  %v5065 = vpop.f32.mrb[0].mxu0
  %v5066 = vpop.f32.mrb[0].mxu0
  %v5067 = vpop.f32.mrb[0].mxu0
  %5068 = vdwg.mxu0
  %v5070 = vrot.slane %v5064, 6
  %v5072 = vadd.f32 %v4956, %v5070
  %v5073 = vtanh.pop %v5072
  %v5075 = vrot.slane %v5073, 2
  %v5077 = vadd.f32 %v5024, %v5075
  %v5078 = vpack.c.bf16 %v5073, %v5073
  %v5080 = vrot.slane %v5078, 1
  %v5082 = vsel %vm1405, %v5080, 0
  %5084 = vmatprep.subr.bf16.mxu0 0
  %5085 = vmatpush1.bf16.msra.mxu0 %v4975
  %5086 = vmatprep.subr.bf16.mxu0 0
  %5087 = vmatpush1.bf16.msra.mxu0 %v4976
  %5088 = vmatprep.subr.bf16.mxu0 0
  %5089 = vmatpush1.bf16.msra.mxu0 0
  %5090 = vmatprep.subr.bf16.mxu0 0
  %5091 = vmatpush1.bf16.msra.mxu0 0
  %5092 = vmatprep.subr.bf16.mxu0 0
  %5093 = vmatpush1.bf16.msra.mxu0 0
  %5094 = vmatprep.subr.bf16.mxu0 0
  %5095 = vmatpush1.bf16.msra.mxu0 0
  %5096 = vmatprep.subr.bf16.mxu0 0
  %5097 = vmatpush1.bf16.msra.mxu0 0
  %5098 = vmatprep.subr.bf16.mxu0 0
  %5099 = vmatpush1.bf16.msra.mxu0 0
  %5100 = vmatprep.subr.bf16.mxu0 0
  %5101 = vmatpush1.bf16.msra.mxu0 0
  %5102 = vmatprep.subr.bf16.mxu0 0
  %5103 = vmatpush1.bf16.msra.mxu0 0
  %5104 = vmatprep.subr.bf16.mxu0 0
  %5105 = vmatpush1.bf16.msra.mxu0 0
  %5106 = vmatprep.subr.bf16.mxu0 0
  %5107 = vmatpush1.bf16.msra.mxu0 0
  %5108 = vmatprep.subr.bf16.mxu0 0
  %5109 = vmatpush1.bf16.msra.mxu0 0
  %5110 = vmatprep.subr.bf16.mxu0 0
  %5111 = vmatpush1.bf16.msra.mxu0 0
  %5112 = vmatprep.subr.bf16.mxu0 0
  %5113 = vmatpush1.bf16.msra.mxu0 0
  %5114 = vmatprep.subr.bf16.mxu0 0
  %5115 = vmatpush1.bf16.msra.mxu0 0
  %5116 = vmatprep.mubr.bf16.mxu0 0
  %5117 = vmatmul.mubr.bf16.gmra.mrb[0].mxu0 %v5082
  %v5118 = vpop.f32.mrb[0].mxu0
  %v5119 = vadd.f32 0.0, %v5118
  %v5120 = vpop.f32.mrb[0].mxu0
  %v5121 = vpop.f32.mrb[0].mxu0
  %v5122 = vpop.f32.mrb[0].mxu0
  %5123 = vdwg.mxu0
  %v5125 = vrot.slane %v5119, 4
  %v5127 = vadd.f32 %v4956, %v5125
  %v5128 = vtanh.pop %v5127
  %v5130 = vrot.slane %v5128, 4
  %v5132 = vadd.f32 %v5077, %v5130
  %v5133 = vmul.f32 %v5132, 0.33333334
  %v5136 = vrot.slane %v4965, 6
  %v5137 = vrot.slane %v4966, 6
  %v5138 = vsel %vm4945, %v5136, %v5137
  %5139 = vrot.lane.b32.xlu0 %v5138, 96
  %v5140 = vpop.permute.xlu0 %5139
  %v5142 = vsub.f32 %v4884, %v5140
  %v5143 = vand.u32 2147483647, %v5142
  %v5145 = vrot.slane %v5143, 2
  %v5147 = vadd.f32 %v5143, %v5145
  %v5148 = vrot.slane %v5143, 4
  %v5150 = vadd.f32 %v5147, %v5148
  %v5151 = vmul.f32 %v5150, 0.33333334
  %v5152 = vpack.c.bf16 %v5151, %v5151
  %v5153 = vlaneseq
  %v5154 = vshrl.u32 %v5153, 7
  %v5155 = vsub.s32 0, %v5154
  %v5156 = vrot.slane %v43, %v5155
  %v5161 = vunpack.c.l.b16 %v29
  %v5162 = vunpack.c.l.b16 %v30
  %v5163 = vunpack.c.l.b16 %v31
  %v5164 = vunpack.c.l.b16 %v32
  %v5165 = vpack.c.b16 %v5162, %v5161
  %v5166 = vpack.c.b16 %v5164, %v5163
  %v5170 = vsel %vm1405, %v5152, 0
  %5172 = vmatprep.subr.bf16.mxu0 0
  %5173 = vmatpush1.bf16.msra.mxu0 %v5165
  %5174 = vmatprep.subr.bf16.mxu0 0
  %5175 = vmatpush1.bf16.msra.mxu0 %v5166
  %5176 = vmatprep.subr.bf16.mxu0 0
  %5177 = vmatpush1.bf16.msra.mxu0 0
  %5178 = vmatprep.subr.bf16.mxu0 0
  %5179 = vmatpush1.bf16.msra.mxu0 0
  %5180 = vmatprep.subr.bf16.mxu0 0
  %5181 = vmatpush1.bf16.msra.mxu0 0
  %5182 = vmatprep.subr.bf16.mxu0 0
  %5183 = vmatpush1.bf16.msra.mxu0 0
  %5184 = vmatprep.subr.bf16.mxu0 0
  %5185 = vmatpush1.bf16.msra.mxu0 0
  %5186 = vmatprep.subr.bf16.mxu0 0
  %5187 = vmatpush1.bf16.msra.mxu0 0
  %5188 = vmatprep.subr.bf16.mxu0 0
  %5189 = vmatpush1.bf16.msra.mxu0 0
  %5190 = vmatprep.subr.bf16.mxu0 0
  %5191 = vmatpush1.bf16.msra.mxu0 0
  %5192 = vmatprep.subr.bf16.mxu0 0
  %5193 = vmatpush1.bf16.msra.mxu0 0
  %5194 = vmatprep.subr.bf16.mxu0 0
  %5195 = vmatpush1.bf16.msra.mxu0 0
  %5196 = vmatprep.subr.bf16.mxu0 0
  %5197 = vmatpush1.bf16.msra.mxu0 0
  %5198 = vmatprep.subr.bf16.mxu0 0
  %5199 = vmatpush1.bf16.msra.mxu0 0
  %5200 = vmatprep.subr.bf16.mxu0 0
  %5201 = vmatpush1.bf16.msra.mxu0 0
  %5202 = vmatprep.subr.bf16.mxu0 0
  %5203 = vmatpush1.bf16.msra.mxu0 0
  %5204 = vmatprep.mubr.bf16.mxu0 0
  %5205 = vmatmul.mubr.bf16.gmra.mrb[0].mxu0 %v5170
  %v5206 = vpop.f32.mrb[0].mxu0
  %v5207 = vadd.f32 %v5156, %v5206
  %v5208 = vpop.f32.mrb[0].mxu0
  %v5209 = vpop.f32.mrb[0].mxu0
  %v5210 = vpop.f32.mrb[0].mxu0
  %5211 = vdwg.mxu0
  %5213 = vrot.lane.b32.xlu0 %v5207, 32
  %v5214 = vpop.permute.xlu0 %5213
  %v5216 = vsel %vm1405, %v5133, %v5214
  %v5217 = vpack.c.bf16 %v5216, %v5216
  %v5218 = vlaneseq
  %v5219 = vshrl.u32 %v5218, 7
  %v5220 = vsub.s32 0, %v5219
  %v5221 = vrot.slane %v44, %v5220
  %v5228 = vunpack.c.l.b16 %v33
  %v5229 = vunpack.c.l.b16 %v34
  %v5230 = vunpack.c.l.b16 %v35
  %v5231 = vunpack.c.l.b16 %v36
  %v5232 = vunpack.c.l.b16 %v37
  %v5233 = vunpack.c.l.b16 %v38
  %v5234 = vpack.c.b16 %v5229, %v5228
  %v5235 = vpack.c.b16 %v5231, %v5230
  %v5236 = vpack.c.b16 %v5233, %v5232
  %vm5240 = vcmask 392192
  %v5242 = vsel %vm5240, %v5217, 0
  %5244 = vmatprep.subr.bf16.mxu0 0
  %5245 = vmatpush1.bf16.msra.mxu0 %v5234
  %5246 = vmatprep.subr.bf16.mxu0 0
  %5247 = vmatpush1.bf16.msra.mxu0 %v5235
  %5248 = vmatprep.subr.bf16.mxu0 0
  %5249 = vmatpush1.bf16.msra.mxu0 %v5236
  %5250 = vmatprep.subr.bf16.mxu0 0
  %5251 = vmatpush1.bf16.msra.mxu0 0
  %5252 = vmatprep.subr.bf16.mxu0 0
  %5253 = vmatpush1.bf16.msra.mxu0 0
  %5254 = vmatprep.subr.bf16.mxu0 0
  %5255 = vmatpush1.bf16.msra.mxu0 0
  %5256 = vmatprep.subr.bf16.mxu0 0
  %5257 = vmatpush1.bf16.msra.mxu0 0
  %5258 = vmatprep.subr.bf16.mxu0 0
  %5259 = vmatpush1.bf16.msra.mxu0 0
  %5260 = vmatprep.subr.bf16.mxu0 0
  %5261 = vmatpush1.bf16.msra.mxu0 0
  %5262 = vmatprep.subr.bf16.mxu0 0
  %5263 = vmatpush1.bf16.msra.mxu0 0
  %5264 = vmatprep.subr.bf16.mxu0 0
  %5265 = vmatpush1.bf16.msra.mxu0 0
  %5266 = vmatprep.subr.bf16.mxu0 0
  %5267 = vmatpush1.bf16.msra.mxu0 0
  %5268 = vmatprep.subr.bf16.mxu0 0
  %5269 = vmatpush1.bf16.msra.mxu0 0
  %5270 = vmatprep.subr.bf16.mxu0 0
  %5271 = vmatpush1.bf16.msra.mxu0 0
  %5272 = vmatprep.subr.bf16.mxu0 0
  %5273 = vmatpush1.bf16.msra.mxu0 0
  %5274 = vmatprep.subr.bf16.mxu0 0
  %5275 = vmatpush1.bf16.msra.mxu0 0
  %5276 = vmatprep.mubr.bf16.mxu0 0
  %5277 = vmatmul.mubr.bf16.gmra.mrb[0].mxu0 %v5242
  %v5278 = vpop.f32.mrb[0].mxu0
  %v5279 = vadd.f32 %v5221, %v5278
  %v5280 = vpop.f32.mrb[0].mxu0
  %v5281 = vpop.f32.mrb[0].mxu0
  %v5282 = vpop.f32.mrb[0].mxu0
  %5283 = vdwg.mxu0
  %v5285 = vrot.slane %v5279, 4
  %5286 = vrot.lane.b32.xlu0 %v5285, 32
  %v5287 = vpop.permute.xlu0 %5286
  %v5289 = vsel %vm1405, %v5128, %v5287
  %vm5290 = vcmask 293888
  %v5291 = vsel %vm5290, %v5289, 0.0
  %5292 = vst [vmem:[%s3 - $0x4] sm:$0x30] %v5291
  // Predicated region
  $region14: #{vmramar_forward.1} parent=0 // pred_check
    _
  $region15: #{vmramar_forward.1} parent=0 // pred_check_branch
    %5294 = sbr.rel (0) target = $region17
  $region16: #{vmramar_forward.1} parent=0 // pred_region
    _
  $region17: #{vmramar_forward.1} parent=0 // pred_fallthru
    _
  // Predicated region
  $region18: #{vmramar_forward.1} parent=0 // pred_check
    _
  $region19: #{vmramar_forward.1} parent=0 // pred_check_branch
    %5296 = sbr.rel (0) target = $region21
  $region20: #{vmramar_forward.1} parent=0 // pred_region
    _
  $region21: #{vmramar_forward.1} parent=0 // pred_fallthru
    _

</llo_original>
